<compile_context>
chip_gen: v7x
topology: tpu7x:2x2x1
jax: 0.10.0
libtpu: 0.0.40
codegen_flags: <defaults>
</compile_context>

<pallas_src>
import math
import numpy as np
import jax
import jax.numpy as jnp
from jax import lax
from jax.experimental import pallas as pl
from jax.experimental.pallas import tpu as pltpu

# ---- small, ViT-consistent configuration -----------------------------------
B = 2            # batch
IMG = 16         # image size
PATCH = 4        # patch size
C_IN = 3         # input channels (RGB, as ViT expects)
DIM = 32         # embed dim
HEADS = 4        # attention heads
HEAD_DIM = DIM // HEADS
DEPTH = 2        # transformer blocks
MLP_DIM = 4 * DIM
N_ORF = 16       # number of orthogonal random features (Performer "m")
N_CLASSES = 10
N_PATCH = (IMG // PATCH) ** 2
N_TOK = N_PATCH + 1
NTOT = B * N_TOK            # total rows of the packed activation (34)
HM = HEADS * N_ORF          # packed random-feature width (64)
CPP = C_IN * PATCH * PATCH  # unfolded patch length (48)
LN_EPS = 1e-6               # timm ViT LayerNorm eps
OUT_PAD = 128               # lane-dense padded classification width

# fused projection column layout: [ v | 1 | pad | qd | kd | diag_q | diag_k ]
FC_V = 0
FC_ONE = DIM          # 32 : constant-one column (weight 0, bias 1) -> key row-sums
FC_QD = 64
FC_KD = 128
FC_DQ = 192
FC_DK = 256
FUSED_W = 320

# per-depth weight-slab row layout (slab shape: (DEPTH, W_ROWS, FUSED_W))
WROW_FUSEDW = 0       # (DIM, FUSED_W)
WROW_FUSEDB = 32      # (1, FUSED_W)
WROW_PROJW = 40       # (DIM, DIM)
WROW_FC1W = 72        # (DIM, MLP_DIM)
WROW_FC2W = 104       # (MLP_DIM, DIM)
WROW_PROJB = 232
WROW_FC1B = 233
WROW_FC2B = 234
WROW_LN1G = 235
WROW_LN1B = 236
WROW_LN2G = 237
WROW_LN2B = 238
W_ROWS = 240

# globals/constants slab row layout (slab shape: (G_ROWS, 128))
GROW_PATCHW = 0       # (CPP, DIM)
GROW_POSALL = 48      # (NTOT, DIM)  pos + cls + patch-bias folded in
GROW_HEADW = 88       # (DIM, OUT_PAD)
GROW_BEXP = 120       # (NTOT, B*HM) batch-expansion 0/1 mask
GROW_BD2 = 160        # (B*HM, 2*DIM) [bdmask | bdmask] tiled over batch
GROW_DUP = 288        # (HM, B*HM)   [I | I] lane-duplication matrix
GROW_SPREAD = 352     # (DIM+1, 2*DIM) [I32 | ones-broadcast of ks column]
GROW_HMASK = 388      # (HEADS, HM)  per-head column indicator
GROW_CLSSEL = 392     # (B, NTOT)    cls-row selector
GROW_NORMG = 394
GROW_NORMB = 395
GROW_HEADB = 396      # (1, OUT_PAD)
G_ROWS = 400


# ------------------------------ helpers --------------------------------------

def _erf(x):
    """Exact-GELU erf via Abramowitz & Stegun 7.1.26 (|err| <= 1.5e-7).

    TODO(synk): switch to lax.erf if/when Pallas-TPU lowers it natively.
    The inner divide is kept exact on purpose (GELU accuracy >> the 1 op saved).
    """
    a1, a2, a3, a4, a5 = (0.254829592, -0.284496736, 1.421413741,
                          -1.453152027, 1.061405429)
    p = 0.3275911
    sgn = jnp.where(x >= 0.0, 1.0, -1.0)
    ax = x * sgn
    t = 1.0 / (1.0 + p * ax)
    poly = ((((a5 * t + a4) * t + a3) * t + a2) * t + a1) * t
    return sgn * (1.0 - poly * jnp.exp(-ax * ax))


# ------------------------- the fused forward kernel --------------------------

def _vit_performer_kernel(patches_ref, w_ref, g_ref, o_ref):
    f32 = jnp.float32
    ratio = 1.0 / math.sqrt(math.sqrt(float(N_ORF)))   # m^{-1/4}, as in reference
    eps = 1e-6                                          # numerical_stabilizer

    def mm(a, b):
        return jnp.dot(a, b, preferred_element_type=f32)

    def ln(xv, g, b):
        mu = jnp.mean(xv, axis=-1, keepdims=True)
        var = jnp.mean(jnp.square(xv - mu), axis=-1, keepdims=True)
        return (xv - mu) * lax.rsqrt(var + LN_EPS) * g + b

    # tiny read helpers (loads are issued at use sites -> low vreg pressure)
    def grd(r0, n, c):
        return g_ref[r0:r0 + n, 0:c]

    def wrd(d, r0, n, c):
        return w_ref[d, r0:r0 + n, 0:c]

    # ---- patch embed + cls token + positional embedding (bias pre-folded) ----
    xv = grd(GROW_POSALL, NTOT, DIM) + mm(patches_ref[...],
                                          grd(GROW_PATCHW, CPP, DIM))   # (34, 32)

    for d in range(DEPTH):
        # ---------------- Performer attention branch ----------------
        h1 = ln(xv, wrd(d, WROW_LN1G, 1, DIM), wrd(d, WROW_LN1B, 1, DIM))

        # ONE wide fused projection: [ v | 1 | qd | kd | diag_q | diag_k ]
        fused = (mm(h1, wrd(d, WROW_FUSEDW, DIM, FUSED_W))
                 + wrd(d, WROW_FUSEDB, 1, FUSED_W))                      # (34, 320)
        v1 = fused[:, FC_V:FC_ONE + 1]          # (34, 33): v plus a ones column
        qd = fused[:, FC_QD:FC_QD + HM]
        kd = fused[:, FC_KD:FC_KD + HM]
        dq = fused[:, FC_DQ:FC_DQ + HM]
        dk = fused[:, FC_DK:FC_DK + HM]

        # key feature map: GLOBAL max stabilizer (matches torch.max(data_dash))
        gmax = jnp.max(jnp.max(kd, axis=1, keepdims=True), axis=0, keepdims=True)
        kp = ratio * (jnp.exp(kd - dk - gmax) + eps)                     # (34, 64)

        # query feature map: per-(row, head) max over that head's M columns
        qmax = jnp.zeros_like(qd)
        for h in range(HEADS):
            mh = jnp.max(qd[:, h * N_ORF:(h + 1) * N_ORF], axis=-1, keepdims=True)
            qmax = qmax + g_ref[GROW_HMASK + h:GROW_HMASK + h + 1, 0:HM] * mh
        qp = ratio * (jnp.exp(qd - dq - qmax) + eps)                     # (34, 64)

        # ---- lane-dense batched linear attention (no per-batch loop) ----
        bexp = grd(GROW_BEXP, NTOT, B * HM)                              # (34, 128)
        dup = grd(GROW_DUP, HM, B * HM)                                  # (64, 128)
        kp2 = mm(kp, dup) * bexp                                         # (34, 128)
        qp2 = mm(qp, dup) * bexp                                         # (34, 128)
        # kv (per batch/head) and the key row-sums in ONE contraction:
        kv_aug = lax.dot_general(kp2, v1, (((0,), (0,)), ((), ())),
                                 preferred_element_type=f32)             # (128, 33)
        # [ kv | ks-broadcast ], head-block masked -> feeds num & den together
        comb = (mm(kv_aug, grd(GROW_SPREAD, DIM + 1, 2 * DIM))
                * grd(GROW_BD2, B * HM, 2 * DIM))                        # (128, 64)
        numden = mm(qp2, comb)                                           # (34, 64)
        attn = numden[:, 0:DIM] * pl.reciprocal(numden[:, DIM:2 * DIM],
                                                approx=True)             # (34, 32)

        xv = (xv + mm(attn, wrd(d, WROW_PROJW, DIM, DIM))
              + wrd(d, WROW_PROJB, 1, DIM))                              # residual

        # ------------------------ MLP branch -------------------------
        h2 = ln(xv, wrd(d, WROW_LN2G, 1, DIM), wrd(d, WROW_LN2B, 1, DIM))
        m1 = (mm(h2, wrd(d, WROW_FC1W, DIM, MLP_DIM))
              + wrd(d, WROW_FC1B, 1, MLP_DIM))                           # (34, 128)
        m1 = 0.5 * m1 * (1.0 + _erf(m1 * (1.0 / math.sqrt(2.0))))        # exact GELU
        xv = (xv + mm(m1, wrd(d, WROW_FC2W, MLP_DIM, DIM))
              + wrd(d, WROW_FC2B, 1, DIM))                               # residual

    # ---- cls pooling (commutes with per-row LN) + final LN + padded head ----
    cls_tok = mm(grd(GROW_CLSSEL, B, NTOT), xv)                          # (B, 32)
    cls_n = ln(cls_tok, grd(GROW_NORMG, 1, DIM), grd(GROW_NORMB, 1, DIM))
    o_ref[...] = (mm(cls_n, grd(GROW_HEADW, DIM, OUT_PAD))
                  + grd(GROW_HEADB, 1, OUT_PAD))                         # (B, 128)


# --------------------------- parameter setup ---------------------------------

def gaussian_orthogonal_random_matrix(key, nb_rows, nb_columns):
    """Replicates PerformerAttention.gaussian_orthogonal_random_matrix (scaling=0)."""
    nb_full = nb_rows // nb_columns
    keys = jax.random.split(key, nb_full + 2)
    blocks = []
    for i in range(nb_full):
        g = jax.random.normal(keys[i], (nb_columns, nb_columns), dtype=jnp.float32)
        q, _ = jnp.linalg.qr(g)
        blocks.append(q.T)
    rem = nb_rows - nb_full * nb_columns
    if rem > 0:
        g = jax.random.normal(keys[nb_full], (nb_columns, nb_columns), dtype=jnp.float32)
        q, _ = jnp.linalg.qr(g)
        blocks.append(q.T[:rem])
    final = jnp.concatenate(blocks, axis=0)
    mult = jnp.linalg.norm(
        jax.random.normal(keys[-1], (nb_rows, nb_columns), dtype=jnp.float32), axis=1)
    return (mult[:, None] * final).astype(jnp.float32)


def init_params(key):
    def normal(k, shape, scale=0.02):
        return (scale * jax.random.normal(k, shape)).astype(jnp.float32)

    keys = iter(jax.random.split(key, 64))
    nk = lambda: next(keys)

    params = {
        'patch_w': normal(nk(), (CPP, DIM)),
        'patch_b': jnp.zeros((DIM,), jnp.float32),
        'cls': normal(nk(), (1, 1, DIM)),
        'pos': normal(nk(), (1, N_TOK, DIM)),
        'norm_g': jnp.ones((DIM,), jnp.float32),
        'norm_b': jnp.zeros((DIM,), jnp.float32),
        'head_w': normal(nk(), (DIM, N_CLASSES)),
        'head_b': jnp.zeros((N_CLASSES,), jnp.float32),
        'blocks': [],
    }
    for _ in range(DEPTH):
        params['blocks'].append({
            'ln1_g': jnp.ones((DIM,), jnp.float32),
            'ln1_b': jnp.zeros((DIM,), jnp.float32),
            'qkv_w': normal(nk(), (DIM, 3 * DIM)),
            'qkv_b': jnp.zeros((3 * DIM,), jnp.float32),
            'proj_w': normal(nk(), (DIM, DIM)),
            'proj_b': jnp.zeros((DIM,), jnp.float32),
            'ln2_g': jnp.ones((DIM,), jnp.float32),
            'ln2_b': jnp.zeros((DIM,), jnp.float32),
            'fc1_w': normal(nk(), (DIM, MLP_DIM)),
            'fc1_b': jnp.zeros((MLP_DIM,), jnp.float32),
            'fc2_w': normal(nk(), (MLP_DIM, DIM)),
            'fc2_b': jnp.zeros((DIM,), jnp.float32),
            'orf_w': gaussian_orthogonal_random_matrix(nk(), N_ORF, HEAD_DIM),
        })
    return params


def prepare_params(params):
    """One-time packing of everything the kernel needs into 2 VMEM slabs.

    (Hoisted out of the jitted forward per perf review: no per-call stacking,
    kron, tiling or mask construction in the traced graph.)
    """
    f32 = np.float32
    eyeH = np.eye(HEADS, dtype=f32)
    dmat = np.kron(eyeH, np.full((HEAD_DIM, N_ORF), 0.5 / math.sqrt(HEAD_DIM), f32))
    bdmask = np.kron(eyeH, np.ones((N_ORF, HEAD_DIM), f32))          # (HM, DIM)
    head_mask = np.kron(eyeH, np.ones((1, N_ORF), f32))              # (HEADS, HM)

    # --- per-depth weight slab (fused projection precomputed here) ---
    wslab = np.zeros((DEPTH, W_ROWS, FUSED_W), f32)
    for d, blk in enumerate(params['blocks']):
        qkv_w = np.asarray(blk['qkv_w'], f32)
        qkv_b = np.asarray(blk['qkv_b'], f32)
        W_q, W_k, W_v = qkv_w[:, :DIM], qkv_w[:, DIM:2 * DIM], qkv_w[:, 2 * DIM:]
        b_q, b_k, b_v = qkv_b[:DIM], qkv_b[DIM:2 * DIM], qkv_b[2 * DIM:]
        wbd = np.kron(eyeH, np.asarray(blk['orf_w'], f32).T)         # (DIM, HM)

        fw = np.zeros((DIM, FUSED_W), f32)
        fb = np.zeros((FUSED_W,), f32)
        fw[:, FC_V:FC_V + DIM] = W_v;            fb[FC_V:FC_V + DIM] = b_v
        fb[FC_ONE] = 1.0                          # constant-one column
        fw[:, FC_QD:FC_QD + HM] = W_q @ wbd;     fb[FC_QD:FC_QD + HM] = b_q @ wbd
        fw[:, FC_KD:FC_KD + HM] = W_k @ wbd;     fb[FC_KD:FC_KD + HM] = b_k @ wbd
        fw[:, FC_DQ:FC_DQ + HM] = W_q @ dmat;    fb[FC_DQ:FC_DQ + HM] = b_q @ dmat
        fw[:, FC_DK:FC_DK + HM] = W_k @ dmat;    fb[FC_DK:FC_DK + HM] = b_k @ dmat

        wslab[d, WROW_FUSEDW:WROW_FUSEDW + DIM, :] = fw
        wslab[d, WROW_FUSEDB, :] = fb
        wslab[d, WROW_PROJW:WROW_PROJW + DIM, 0:DIM] = np.asarray(blk['proj_w'], f32)
        wslab[d, WROW_PROJB, 0:DIM] = np.asarray(blk['proj_b'], f32)
        wslab[d, WROW_FC1W:WROW_FC1W + DIM, 0:MLP_DIM] = np.asarray(blk['fc1_w'], f32)
        wslab[d, WROW_FC1B, 0:MLP_DIM] = np.asarray(blk['fc1_b'], f32)
        wslab[d, WROW_FC2W:WROW_FC2W + MLP_DIM, 0:DIM] = np.asarray(blk['fc2_w'], f32)
        wslab[d, WROW_FC2B, 0:DIM] = np.asarray(blk['fc2_b'], f32)
        wslab[d, WROW_LN1G, 0:DIM] = np.asarray(blk['ln1_g'], f32)
        wslab[d, WROW_LN1B, 0:DIM] = np.asarray(blk['ln1_b'], f32)
        wslab[d, WROW_LN2G, 0:DIM] = np.asarray(blk['ln2_g'], f32)
        wslab[d, WROW_LN2B, 0:DIM] = np.asarray(blk['ln2_b'], f32)

    # --- globals / constants slab ---
    gslab = np.zeros((G_ROWS, 128), f32)
    gslab[GROW_PATCHW:GROW_PATCHW + CPP, 0:DIM] = np.asarray(params['patch_w'], f32)
    pos = np.array(np.asarray(params['pos'], f32)[0])                # (N_TOK, DIM)
    pos[0] += np.asarray(params['cls'], f32)[0, 0]                   # cls folded in
    pos[1:] += np.asarray(params['patch_b'], f32)[None, :]           # patch bias folded
    gslab[GROW_POSALL:GROW_POSALL + NTOT, 0:DIM] = np.tile(pos, (B, 1))
    hw = np.zeros((DIM, OUT_PAD), f32)
    hw[:, :N_CLASSES] = np.asarray(params['head_w'], f32)            # lane-dense head
    gslab[GROW_HEADW:GROW_HEADW + DIM, :] = hw
    bexp = np.zeros((NTOT, B * HM), f32)
    for b in range(B):
        bexp[b * N_TOK:(b + 1) * N_TOK, b * HM:(b + 1) * HM] = 1.0
    gslab[GROW_BEXP:GROW_BEXP + NTOT, 0:B * HM] = bexp
    gslab[GROW_BD2:GROW_BD2 + B * HM, 0:2 * DIM] = np.tile(
        np.concatenate([bdmask, bdmask], axis=1), (B, 1))
    gslab[GROW_DUP:GROW_DUP + HM, 0:B * HM] = np.concatenate(
        [np.eye(HM, dtype=f32)] * B, axis=1)
    spread = np.zeros((DIM + 1, 2 * DIM), f32)
    spread[:DIM, :DIM] = np.eye(DIM, dtype=f32)
    spread[DIM, DIM:2 * DIM] = 1.0
    gslab[GROW_SPREAD:GROW_SPREAD + DIM + 1, 0:2 * DIM] = spread
    gslab[GROW_HMASK:GROW_HMASK + HEADS, 0:HM] = head_mask
    cls_sel = np.zeros((B, NTOT), f32)
    for b in range(B):
        cls_sel[b, b * N_TOK] = 1.0
    gslab[GROW_CLSSEL:GROW_CLSSEL + B, 0:NTOT] = cls_sel
    gslab[GROW_NORMG, 0:DIM] = np.asarray(params['norm_g'], f32)
    gslab[GROW_NORMB, 0:DIM] = np.asarray(params['norm_b'], f32)
    gslab[GROW_HEADB, 0:N_CLASSES] = np.asarray(params['head_b'], f32)

    return {'wslab': jnp.asarray(wslab), 'gslab': jnp.asarray(gslab)}


# ------------------------------ forward pass ---------------------------------

def forward(prepared, x):
    # x: (B, C, H, W) NCHW, matching the PyTorch module's input convention.
    B_, C, H, W = x.shape
    p = PATCH
    gh, gw = H // p, W // p

    # Patch unfold (pure layout glue); Conv2d(k=p, s=p) == unfold + matmul.
    patches = x.reshape(B_, C, gh, p, gw, p).transpose(0, 2, 4, 1, 3, 5)
    patches = patches.reshape(B_, gh * gw, C * p * p)
    # Prepend a zero row per batch at the cls position; the cls/pos/bias terms
    # live in the precomputed positional table -> no tok-scatter matmul needed.
    patches = jnp.pad(patches, ((0, 0), (1, 0), (0, 0)))
    patches = patches.reshape(B_ * N_TOK, C * p * p)

    logits_pad = pl.pallas_call(
        _vit_performer_kernel,
        out_shape=jax.ShapeDtypeStruct((B_, OUT_PAD), jnp.float32),
        grid=(1,),
        in_specs=[
            pl.BlockSpec(patches.shape, lambda i: (0, 0)),
            pl.BlockSpec(prepared['wslab'].shape, lambda i: (0, 0, 0)),
            pl.BlockSpec(prepared['gslab'].shape, lambda i: (0, 0)),
        ],
        out_specs=pl.BlockSpec((B_, OUT_PAD), lambda i: (0, 0)),
        compiler_params=pltpu.CompilerParams(dimension_semantics=("arbitrary",)),
    )(patches, prepared['wslab'], prepared['gslab'])
    return logits_pad[:, :N_CLASSES]


# ---------------------------------- main --------------------------------------

if __name__ == "__main__":
    key = jax.random.PRNGKey(0)
    pkey, xkey = jax.random.split(key)
    params = init_params(pkey)
    prepared = prepare_params(params)     # one-time packing, outside jit
    x = jax.random.normal(xkey, (B, C_IN, IMG, IMG), dtype=jnp.float32)

    logits = jax.jit(forward)(prepared, x)
    jax.block_until_ready(logits)
    assert logits.shape == (B, N_CLASSES)
    assert bool(jnp.all(jnp.isfinite(logits)))
    print("KERNEL_OK")
</pallas_src>

<mosaic_0001>
module attributes {stable_mosaic.version = 11 : i64} {
  func.func @_vit_performer_kernel(%arg0: i32, %arg1: memref<34x48xf32, #tpu.memory_space<vmem>>, %arg2: memref<2x240x320xf32, #tpu.memory_space<vmem>>, %arg3: memref<400x128xf32, #tpu.memory_space<vmem>>, %arg4: memref<2x128xf32, #tpu.memory_space<vmem>>) attributes {dimension_semantics = [#tpu.dimension_semantics<arbitrary>], iteration_bounds = array<i64: 1>, scalar_prefetch = 0 : i64, scratch_operands = 0 : i64, tpu.core_type = #tpu.core_type<tc>, window_params = [{pipeline_mode = #tpu.pipeline_mode<synchronous>, transform_indices = @transform_0, window_bounds = array<i64: 34, 48>}, {pipeline_mode = #tpu.pipeline_mode<synchronous>, transform_indices = @transform_1, window_bounds = array<i64: 2, 240, 320>}, {pipeline_mode = #tpu.pipeline_mode<synchronous>, transform_indices = @transform_2, window_bounds = array<i64: 400, 128>}, {pipeline_mode = #tpu.pipeline_mode<synchronous>, transform_indices = @transform_3, window_bounds = array<i64: 2, 128>}]} {
    %c48 = arith.constant 48 : index
    %c0 = arith.constant 0 : index
    %0 = vector.load %arg3[%c48, %c0] : memref<400x128xf32, #tpu.memory_space<vmem>>, vector<34x32xf32>
    %c0_0 = arith.constant 0 : index
    %c0_1 = arith.constant 0 : index
    %1 = vector.load %arg1[%c0_0, %c0_1] : memref<34x48xf32, #tpu.memory_space<vmem>>, vector<34x48xf32>
    %c0_2 = arith.constant 0 : index
    %c0_3 = arith.constant 0 : index
    %2 = vector.load %arg3[%c0_2, %c0_3] : memref<400x128xf32, #tpu.memory_space<vmem>>, vector<48x32xf32>
    %cst = arith.constant dense<0.000000e+00> : vector<34x32xf32>
    %3 = tpu.matmul %1, %2, %cst {dimension_numbers = #tpu.dot_dimension_numbers<[1], [0], [0], [1], [0, 0, 1, 1], [], []>} : vector<34x48xf32>, vector<48x32xf32>, vector<34x32xf32> -> vector<34x32xf32>
    %4 = arith.addf %0, %3 : vector<34x32xf32>
    %c0_4 = arith.constant 0 : index
    %c235 = arith.constant 235 : index
    %c0_5 = arith.constant 0 : index
    %5 = vector.load %arg2[%c0_4, %c235, %c0_5] : memref<2x240x320xf32, #tpu.memory_space<vmem>>, vector<1x1x32xf32>
    %6 = vector.shape_cast %5 : vector<1x1x32xf32> to vector<1x32xf32>
    %c0_6 = arith.constant 0 : index
    %c236 = arith.constant 236 : index
    %c0_7 = arith.constant 0 : index
    %7 = vector.load %arg2[%c0_6, %c236, %c0_7] : memref<2x240x320xf32, #tpu.memory_space<vmem>>, vector<1x1x32xf32>
    %8 = vector.shape_cast %7 : vector<1x1x32xf32> to vector<1x32xf32>
    %cst_8 = arith.constant dense<0.000000e+00> : vector<34xf32>
    %9 = vector.multi_reduction <add>, %4, %cst_8 [1] : vector<34x32xf32> to vector<34xf32>
    %10 = vector.shape_cast %9 : vector<34xf32> to vector<34x1xf32>
    %cst_9 = arith.constant 3.200000e+01 : f32
    %11 = vector.broadcast %cst_9 : f32 to vector<34x1xf32>
    %12 = arith.divf %10, %11 : vector<34x1xf32>
    %13 = vector.broadcast %12 : vector<34x1xf32> to vector<34x32xf32>
    %14 = arith.subf %4, %13 : vector<34x32xf32>
    %15 = arith.mulf %14, %14 : vector<34x32xf32>
    %cst_10 = arith.constant dense<0.000000e+00> : vector<34xf32>
    %16 = vector.multi_reduction <add>, %15, %cst_10 [1] : vector<34x32xf32> to vector<34xf32>
    %17 = vector.shape_cast %16 : vector<34xf32> to vector<34x1xf32>
    %cst_11 = arith.constant 3.200000e+01 : f32
    %18 = vector.broadcast %cst_11 : f32 to vector<34x1xf32>
    %19 = arith.divf %17, %18 : vector<34x1xf32>
    %20 = vector.broadcast %12 : vector<34x1xf32> to vector<34x32xf32>
    %21 = arith.subf %4, %20 : vector<34x32xf32>
    %cst_12 = arith.constant 9.99999997E-7 : f32
    %22 = vector.broadcast %cst_12 : f32 to vector<34x1xf32>
    %23 = arith.addf %19, %22 : vector<34x1xf32>
    %24 = math.rsqrt %23 : vector<34x1xf32>
    %25 = vector.broadcast %24 : vector<34x1xf32> to vector<34x32xf32>
    %26 = arith.mulf %21, %25 : vector<34x32xf32>
    %27 = vector.broadcast %6 : vector<1x32xf32> to vector<34x32xf32>
    %28 = arith.mulf %26, %27 : vector<34x32xf32>
    %29 = vector.broadcast %8 : vector<1x32xf32> to vector<34x32xf32>
    %30 = arith.addf %28, %29 : vector<34x32xf32>
    %c0_13 = arith.constant 0 : index
    %c0_14 = arith.constant 0 : index
    %c0_15 = arith.constant 0 : index
    %31 = vector.load %arg2[%c0_13, %c0_14, %c0_15] : memref<2x240x320xf32, #tpu.memory_space<vmem>>, vector<1x32x320xf32>
    %32 = vector.shape_cast %31 : vector<1x32x320xf32> to vector<32x320xf32>
    %cst_16 = arith.constant dense<0.000000e+00> : vector<34x320xf32>
    %33 = tpu.matmul %30, %32, %cst_16 {dimension_numbers = #tpu.dot_dimension_numbers<[1], [0], [0], [1], [0, 0, 1, 1], [], []>} : vector<34x32xf32>, vector<32x320xf32>, vector<34x320xf32> -> vector<34x320xf32>
    %c0_17 = arith.constant 0 : index
    %c32 = arith.constant 32 : index
    %c0_18 = arith.constant 0 : index
    %34 = vector.load %arg2[%c0_17, %c32, %c0_18] : memref<2x240x320xf32, #tpu.memory_space<vmem>>, vector<1x1x320xf32>
    %35 = vector.shape_cast %34 : vector<1x1x320xf32> to vector<1x320xf32>
    %36 = vector.broadcast %35 : vector<1x320xf32> to vector<34x320xf32>
    %37 = arith.addf %33, %36 : vector<34x320xf32>
    %38 = vector.extract_strided_slice %37 {offsets = [0, 0], sizes = [34, 33], strides = [1, 1]} : vector<34x320xf32> to vector<34x33xf32>
    %39 = vector.extract_strided_slice %37 {offsets = [0, 64], sizes = [34, 64], strides = [1, 1]} : vector<34x320xf32> to vector<34x64xf32>
    %40 = vector.extract_strided_slice %37 {offsets = [0, 128], sizes = [34, 64], strides = [1, 1]} : vector<34x320xf32> to vector<34x64xf32>
    %41 = vector.extract_strided_slice %37 {offsets = [0, 192], sizes = [34, 64], strides = [1, 1]} : vector<34x320xf32> to vector<34x64xf32>
    %42 = vector.extract_strided_slice %37 {offsets = [0, 256], sizes = [34, 64], strides = [1, 1]} : vector<34x320xf32> to vector<34x64xf32>
    %cst_19 = arith.constant dense<0xFF800000> : vector<34xf32>
    %43 = vector.multi_reduction <maximumf>, %40, %cst_19 [1] : vector<34x64xf32> to vector<34xf32>
    %44 = vector.shape_cast %43 : vector<34xf32> to vector<34x1xf32>
    %cst_20 = arith.constant dense<0xFF800000> : vector<1xf32>
    %45 = vector.multi_reduction <maximumf>, %44, %cst_20 [0] : vector<34x1xf32> to vector<1xf32>
    %46 = vector.shape_cast %45 : vector<1xf32> to vector<1x1xf32>
    %47 = arith.subf %40, %42 : vector<34x64xf32>
    %48 = vector.broadcast %46 : vector<1x1xf32> to vector<34x64xf32>
    %49 = arith.subf %47, %48 : vector<34x64xf32>
    %50 = math.exp %49 : vector<34x64xf32>
    %cst_21 = arith.constant 9.99999997E-7 : f32
    %51 = vector.broadcast %cst_21 : f32 to vector<34x64xf32>
    %52 = arith.addf %50, %51 : vector<34x64xf32>
    %cst_22 = arith.constant 5.000000e-01 : f32
    %53 = vector.broadcast %cst_22 : f32 to vector<34x64xf32>
    %54 = arith.mulf %53, %52 : vector<34x64xf32>
    %cst_23 = arith.constant 0.000000e+00 : f32
    %55 = vector.broadcast %cst_23 : f32 to vector<34x64xf32>
    %56 = vector.extract_strided_slice %39 {offsets = [0, 0], sizes = [34, 16], strides = [1, 1]} : vector<34x64xf32> to vector<34x16xf32>
    %cst_24 = arith.constant dense<0xFF800000> : vector<34xf32>
    %57 = vector.multi_reduction <maximumf>, %56, %cst_24 [1] : vector<34x16xf32> to vector<34xf32>
    %58 = vector.shape_cast %57 : vector<34xf32> to vector<34x1xf32>
    %c388 = arith.constant 388 : index
    %c0_25 = arith.constant 0 : index
    %59 = vector.load %arg3[%c388, %c0_25] : memref<400x128xf32, #tpu.memory_space<vmem>>, vector<1x64xf32>
    %60 = vector.broadcast %59 : vector<1x64xf32> to vector<34x64xf32>
    %61 = vector.broadcast %58 : vector<34x1xf32> to vector<34x64xf32>
    %62 = arith.mulf %60, %61 : vector<34x64xf32>
    %63 = arith.addf %55, %62 : vector<34x64xf32>
    %64 = vector.extract_strided_slice %39 {offsets = [0, 16], sizes = [34, 16], strides = [1, 1]} : vector<34x64xf32> to vector<34x16xf32>
    %cst_26 = arith.constant dense<0xFF800000> : vector<34xf32>
    %65 = vector.multi_reduction <maximumf>, %64, %cst_26 [1] : vector<34x16xf32> to vector<34xf32>
    %66 = vector.shape_cast %65 : vector<34xf32> to vector<34x1xf32>
    %c389 = arith.constant 389 : index
    %c0_27 = arith.constant 0 : index
    %67 = vector.load %arg3[%c389, %c0_27] : memref<400x128xf32, #tpu.memory_space<vmem>>, vector<1x64xf32>
    %68 = vector.broadcast %67 : vector<1x64xf32> to vector<34x64xf32>
    %69 = vector.broadcast %66 : vector<34x1xf32> to vector<34x64xf32>
    %70 = arith.mulf %68, %69 : vector<34x64xf32>
    %71 = arith.addf %63, %70 : vector<34x64xf32>
    %72 = vector.extract_strided_slice %39 {offsets = [0, 32], sizes = [34, 16], strides = [1, 1]} : vector<34x64xf32> to vector<34x16xf32>
    %cst_28 = arith.constant dense<0xFF800000> : vector<34xf32>
    %73 = vector.multi_reduction <maximumf>, %72, %cst_28 [1] : vector<34x16xf32> to vector<34xf32>
    %74 = vector.shape_cast %73 : vector<34xf32> to vector<34x1xf32>
    %c390 = arith.constant 390 : index
    %c0_29 = arith.constant 0 : index
    %75 = vector.load %arg3[%c390, %c0_29] : memref<400x128xf32, #tpu.memory_space<vmem>>, vector<1x64xf32>
    %76 = vector.broadcast %75 : vector<1x64xf32> to vector<34x64xf32>
    %77 = vector.broadcast %74 : vector<34x1xf32> to vector<34x64xf32>
    %78 = arith.mulf %76, %77 : vector<34x64xf32>
    %79 = arith.addf %71, %78 : vector<34x64xf32>
    %80 = vector.extract_strided_slice %39 {offsets = [0, 48], sizes = [34, 16], strides = [1, 1]} : vector<34x64xf32> to vector<34x16xf32>
    %cst_30 = arith.constant dense<0xFF800000> : vector<34xf32>
    %81 = vector.multi_reduction <maximumf>, %80, %cst_30 [1] : vector<34x16xf32> to vector<34xf32>
    %82 = vector.shape_cast %81 : vector<34xf32> to vector<34x1xf32>
    %c391 = arith.constant 391 : index
    %c0_31 = arith.constant 0 : index
    %83 = vector.load %arg3[%c391, %c0_31] : memref<400x128xf32, #tpu.memory_space<vmem>>, vector<1x64xf32>
    %84 = vector.broadcast %83 : vector<1x64xf32> to vector<34x64xf32>
    %85 = vector.broadcast %82 : vector<34x1xf32> to vector<34x64xf32>
    %86 = arith.mulf %84, %85 : vector<34x64xf32>
    %87 = arith.addf %79, %86 : vector<34x64xf32>
    %88 = arith.subf %39, %41 : vector<34x64xf32>
    %89 = arith.subf %88, %87 : vector<34x64xf32>
    %90 = math.exp %89 : vector<34x64xf32>
    %cst_32 = arith.constant 9.99999997E-7 : f32
    %91 = vector.broadcast %cst_32 : f32 to vector<34x64xf32>
    %92 = arith.addf %90, %91 : vector<34x64xf32>
    %cst_33 = arith.constant 5.000000e-01 : f32
    %93 = vector.broadcast %cst_33 : f32 to vector<34x64xf32>
    %94 = arith.mulf %93, %92 : vector<34x64xf32>
    %c120 = arith.constant 120 : index
    %c0_34 = arith.constant 0 : index
    %95 = vector.load %arg3[%c120, %c0_34] : memref<400x128xf32, #tpu.memory_space<vmem>>, vector<34x128xf32>
    %c288 = arith.constant 288 : index
    %c0_35 = arith.constant 0 : index
    %96 = vector.load %arg3[%c288, %c0_35] : memref<400x128xf32, #tpu.memory_space<vmem>>, vector<64x128xf32>
    %cst_36 = arith.constant dense<0.000000e+00> : vector<34x128xf32>
    %97 = tpu.matmul %54, %96, %cst_36 {dimension_numbers = #tpu.dot_dimension_numbers<[1], [0], [0], [1], [0, 0, 1, 1], [], []>} : vector<34x64xf32>, vector<64x128xf32>, vector<34x128xf32> -> vector<34x128xf32>
    %98 = arith.mulf %97, %95 : vector<34x128xf32>
    %cst_37 = arith.constant dense<0.000000e+00> : vector<34x128xf32>
    %99 = tpu.matmul %94, %96, %cst_37 {dimension_numbers = #tpu.dot_dimension_numbers<[1], [0], [0], [1], [0, 0, 1, 1], [], []>} : vector<34x64xf32>, vector<64x128xf32>, vector<34x128xf32> -> vector<34x128xf32>
    %100 = arith.mulf %99, %95 : vector<34x128xf32>
    %cst_38 = arith.constant dense<0.000000e+00> : vector<128x33xf32>
    %101 = tpu.matmul %98, %38, %cst_38 {dimension_numbers = #tpu.dot_dimension_numbers<[0], [0], [1], [1], [0, 1, 1, 1], [], []>} : vector<34x128xf32>, vector<34x33xf32>, vector<128x33xf32> -> vector<128x33xf32>
    %c352 = arith.constant 352 : index
    %c0_39 = arith.constant 0 : index
    %102 = vector.load %arg3[%c352, %c0_39] : memref<400x128xf32, #tpu.memory_space<vmem>>, vector<33x64xf32>
    %cst_40 = arith.constant dense<0.000000e+00> : vector<128x64xf32>
    %103 = tpu.matmul %101, %102, %cst_40 {dimension_numbers = #tpu.dot_dimension_numbers<[1], [0], [0], [1], [0, 0, 1, 1], [], []>} : vector<128x33xf32>, vector<33x64xf32>, vector<128x64xf32> -> vector<128x64xf32>
    %c160 = arith.constant 160 : index
    %c0_41 = arith.constant 0 : index
    %104 = vector.load %arg3[%c160, %c0_41] : memref<400x128xf32, #tpu.memory_space<vmem>>, vector<128x64xf32>
    %105 = arith.mulf %103, %104 : vector<128x64xf32>
    %cst_42 = arith.constant dense<0.000000e+00> : vector<34x64xf32>
    %106 = tpu.matmul %100, %105, %cst_42 {dimension_numbers = #tpu.dot_dimension_numbers<[1], [0], [0], [1], [0, 0, 1, 1], [], []>} : vector<34x128xf32>, vector<128x64xf32>, vector<34x64xf32> -> vector<34x64xf32>
    %107 = vector.extract_strided_slice %106 {offsets = [0, 0], sizes = [34, 32], strides = [1, 1]} : vector<34x64xf32> to vector<34x32xf32>
    %108 = vector.extract_strided_slice %106 {offsets = [0, 32], sizes = [34, 32], strides = [1, 1]} : vector<34x64xf32> to vector<34x32xf32>
    %109 = tpu.reciprocal %108 {approx = true} : vector<34x32xf32> -> vector<34x32xf32>
    %110 = arith.mulf %107, %109 : vector<34x32xf32>
    %c0_43 = arith.constant 0 : index
    %c40 = arith.constant 40 : index
    %c0_44 = arith.constant 0 : index
    %111 = vector.load %arg2[%c0_43, %c40, %c0_44] : memref<2x240x320xf32, #tpu.memory_space<vmem>>, vector<1x32x32xf32>
    %112 = vector.shape_cast %111 : vector<1x32x32xf32> to vector<32x32xf32>
    %cst_45 = arith.constant dense<0.000000e+00> : vector<34x32xf32>
    %113 = tpu.matmul %110, %112, %cst_45 {dimension_numbers = #tpu.dot_dimension_numbers<[1], [0], [0], [1], [0, 0, 1, 1], [], []>} : vector<34x32xf32>, vector<32x32xf32>, vector<34x32xf32> -> vector<34x32xf32>
    %114 = arith.addf %4, %113 : vector<34x32xf32>
    %c0_46 = arith.constant 0 : index
    %c232 = arith.constant 232 : index
    %c0_47 = arith.constant 0 : index
    %115 = vector.load %arg2[%c0_46, %c232, %c0_47] : memref<2x240x320xf32, #tpu.memory_space<vmem>>, vector<1x1x32xf32>
    %116 = vector.shape_cast %115 : vector<1x1x32xf32> to vector<1x32xf32>
    %117 = vector.broadcast %116 : vector<1x32xf32> to vector<34x32xf32>
    %118 = arith.addf %114, %117 : vector<34x32xf32>
    %c0_48 = arith.constant 0 : index
    %c237 = arith.constant 237 : index
    %c0_49 = arith.constant 0 : index
    %119 = vector.load %arg2[%c0_48, %c237, %c0_49] : memref<2x240x320xf32, #tpu.memory_space<vmem>>, vector<1x1x32xf32>
    %120 = vector.shape_cast %119 : vector<1x1x32xf32> to vector<1x32xf32>
    %c0_50 = arith.constant 0 : index
    %c238 = arith.constant 238 : index
    %c0_51 = arith.constant 0 : index
    %121 = vector.load %arg2[%c0_50, %c238, %c0_51] : memref<2x240x320xf32, #tpu.memory_space<vmem>>, vector<1x1x32xf32>
    %122 = vector.shape_cast %121 : vector<1x1x32xf32> to vector<1x32xf32>
    %cst_52 = arith.constant dense<0.000000e+00> : vector<34xf32>
    %123 = vector.multi_reduction <add>, %118, %cst_52 [1] : vector<34x32xf32> to vector<34xf32>
    %124 = vector.shape_cast %123 : vector<34xf32> to vector<34x1xf32>
    %cst_53 = arith.constant 3.200000e+01 : f32
    %125 = vector.broadcast %cst_53 : f32 to vector<34x1xf32>
    %126 = arith.divf %124, %125 : vector<34x1xf32>
    %127 = vector.broadcast %126 : vector<34x1xf32> to vector<34x32xf32>
    %128 = arith.subf %118, %127 : vector<34x32xf32>
    %129 = arith.mulf %128, %128 : vector<34x32xf32>
    %cst_54 = arith.constant dense<0.000000e+00> : vector<34xf32>
    %130 = vector.multi_reduction <add>, %129, %cst_54 [1] : vector<34x32xf32> to vector<34xf32>
    %131 = vector.shape_cast %130 : vector<34xf32> to vector<34x1xf32>
    %cst_55 = arith.constant 3.200000e+01 : f32
    %132 = vector.broadcast %cst_55 : f32 to vector<34x1xf32>
    %133 = arith.divf %131, %132 : vector<34x1xf32>
    %134 = vector.broadcast %126 : vector<34x1xf32> to vector<34x32xf32>
    %135 = arith.subf %118, %134 : vector<34x32xf32>
    %cst_56 = arith.constant 9.99999997E-7 : f32
    %136 = vector.broadcast %cst_56 : f32 to vector<34x1xf32>
    %137 = arith.addf %133, %136 : vector<34x1xf32>
    %138 = math.rsqrt %137 : vector<34x1xf32>
    %139 = vector.broadcast %138 : vector<34x1xf32> to vector<34x32xf32>
    %140 = arith.mulf %135, %139 : vector<34x32xf32>
    %141 = vector.broadcast %120 : vector<1x32xf32> to vector<34x32xf32>
    %142 = arith.mulf %140, %141 : vector<34x32xf32>
    %143 = vector.broadcast %122 : vector<1x32xf32> to vector<34x32xf32>
    %144 = arith.addf %142, %143 : vector<34x32xf32>
    %c0_57 = arith.constant 0 : index
    %c72 = arith.constant 72 : index
    %c0_58 = arith.constant 0 : index
    %145 = vector.load %arg2[%c0_57, %c72, %c0_58] : memref<2x240x320xf32, #tpu.memory_space<vmem>>, vector<1x32x128xf32>
    %146 = vector.shape_cast %145 : vector<1x32x128xf32> to vector<32x128xf32>
    %cst_59 = arith.constant dense<0.000000e+00> : vector<34x128xf32>
    %147 = tpu.matmul %144, %146, %cst_59 {dimension_numbers = #tpu.dot_dimension_numbers<[1], [0], [0], [1], [0, 0, 1, 1], [], []>} : vector<34x32xf32>, vector<32x128xf32>, vector<34x128xf32> -> vector<34x128xf32>
    %c0_60 = arith.constant 0 : index
    %c233 = arith.constant 233 : index
    %c0_61 = arith.constant 0 : index
    %148 = vector.load %arg2[%c0_60, %c233, %c0_61] : memref<2x240x320xf32, #tpu.memory_space<vmem>>, vector<1x1x128xf32>
    %149 = vector.shape_cast %148 : vector<1x1x128xf32> to vector<1x128xf32>
    %150 = vector.broadcast %149 : vector<1x128xf32> to vector<34x128xf32>
    %151 = arith.addf %147, %150 : vector<34x128xf32>
    %cst_62 = arith.constant 5.000000e-01 : f32
    %152 = vector.broadcast %cst_62 : f32 to vector<34x128xf32>
    %153 = arith.mulf %152, %151 : vector<34x128xf32>
    %cst_63 = arith.constant 0.707106769 : f32
    %154 = vector.broadcast %cst_63 : f32 to vector<34x128xf32>
    %155 = arith.mulf %151, %154 : vector<34x128xf32>
    %cst_64 = arith.constant 0.000000e+00 : f32
    %156 = vector.broadcast %cst_64 : f32 to vector<34x128xf32>
    %157 = arith.cmpf oge, %155, %156 : vector<34x128xf32>
    %cst_65 = arith.constant 1.000000e+00 : f32
    %cst_66 = arith.constant -1.000000e+00 : f32
    %158 = vector.broadcast %cst_65 : f32 to vector<34x128xf32>
    %159 = vector.broadcast %cst_66 : f32 to vector<34x128xf32>
    %160 = arith.select %157, %158, %159 : vector<34x128xi1>, vector<34x128xf32>
    %161 = arith.mulf %155, %160 : vector<34x128xf32>
    %cst_67 = arith.constant 0.327591091 : f32
    %162 = vector.broadcast %cst_67 : f32 to vector<34x128xf32>
    %163 = arith.mulf %162, %161 : vector<34x128xf32>
    %cst_68 = arith.constant 1.000000e+00 : f32
    %164 = vector.broadcast %cst_68 : f32 to vector<34x128xf32>
    %165 = arith.addf %164, %163 : vector<34x128xf32>
    %cst_69 = arith.constant 1.000000e+00 : f32
    %166 = vector.broadcast %cst_69 : f32 to vector<34x128xf32>
    %167 = arith.divf %166, %165 : vector<34x128xf32>
    %cst_70 = arith.constant 1.06140542 : f32
    %168 = vector.broadcast %cst_70 : f32 to vector<34x128xf32>
    %169 = arith.mulf %168, %167 : vector<34x128xf32>
    %cst_71 = arith.constant -1.45315206 : f32
    %170 = vector.broadcast %cst_71 : f32 to vector<34x128xf32>
    %171 = arith.addf %169, %170 : vector<34x128xf32>
    %172 = arith.mulf %171, %167 : vector<34x128xf32>
    %cst_72 = arith.constant 1.42141378 : f32
    %173 = vector.broadcast %cst_72 : f32 to vector<34x128xf32>
    %174 = arith.addf %172, %173 : vector<34x128xf32>
    %175 = arith.mulf %174, %167 : vector<34x128xf32>
    %cst_73 = arith.constant -0.284496725 : f32
    %176 = vector.broadcast %cst_73 : f32 to vector<34x128xf32>
    %177 = arith.addf %175, %176 : vector<34x128xf32>
    %178 = arith.mulf %177, %167 : vector<34x128xf32>
    %cst_74 = arith.constant 0.254829586 : f32
    %179 = vector.broadcast %cst_74 : f32 to vector<34x128xf32>
    %180 = arith.addf %178, %179 : vector<34x128xf32>
    %181 = arith.mulf %180, %167 : vector<34x128xf32>
    %cst_75 = arith.constant 0.000000e+00 : f32
    %182 = vector.broadcast %cst_75 : f32 to vector<34x128xf32>
    %183 = arith.subf %182, %161 : vector<34x128xf32>
    %184 = arith.mulf %183, %161 : vector<34x128xf32>
    %185 = math.exp %184 : vector<34x128xf32>
    %186 = arith.mulf %181, %185 : vector<34x128xf32>
    %cst_76 = arith.constant 1.000000e+00 : f32
    %187 = vector.broadcast %cst_76 : f32 to vector<34x128xf32>
    %188 = arith.subf %187, %186 : vector<34x128xf32>
    %189 = arith.mulf %160, %188 : vector<34x128xf32>
    %cst_77 = arith.constant 1.000000e+00 : f32
    %190 = vector.broadcast %cst_77 : f32 to vector<34x128xf32>
    %191 = arith.addf %190, %189 : vector<34x128xf32>
    %192 = arith.mulf %153, %191 : vector<34x128xf32>
    %c0_78 = arith.constant 0 : index
    %c104 = arith.constant 104 : index
    %c0_79 = arith.constant 0 : index
    %193 = vector.load %arg2[%c0_78, %c104, %c0_79] : memref<2x240x320xf32, #tpu.memory_space<vmem>>, vector<1x128x32xf32>
    %194 = vector.shape_cast %193 : vector<1x128x32xf32> to vector<128x32xf32>
    %cst_80 = arith.constant dense<0.000000e+00> : vector<34x32xf32>
    %195 = tpu.matmul %192, %194, %cst_80 {dimension_numbers = #tpu.dot_dimension_numbers<[1], [0], [0], [1], [0, 0, 1, 1], [], []>} : vector<34x128xf32>, vector<128x32xf32>, vector<34x32xf32> -> vector<34x32xf32>
    %196 = arith.addf %118, %195 : vector<34x32xf32>
    %c0_81 = arith.constant 0 : index
    %c234 = arith.constant 234 : index
    %c0_82 = arith.constant 0 : index
    %197 = vector.load %arg2[%c0_81, %c234, %c0_82] : memref<2x240x320xf32, #tpu.memory_space<vmem>>, vector<1x1x32xf32>
    %198 = vector.shape_cast %197 : vector<1x1x32xf32> to vector<1x32xf32>
    %199 = vector.broadcast %198 : vector<1x32xf32> to vector<34x32xf32>
    %200 = arith.addf %196, %199 : vector<34x32xf32>
    %c1 = arith.constant 1 : index
    %c235_83 = arith.constant 235 : index
    %c0_84 = arith.constant 0 : index
    %201 = vector.load %arg2[%c1, %c235_83, %c0_84] : memref<2x240x320xf32, #tpu.memory_space<vmem>>, vector<1x1x32xf32>
    %202 = vector.shape_cast %201 : vector<1x1x32xf32> to vector<1x32xf32>
    %c1_85 = arith.constant 1 : index
    %c236_86 = arith.constant 236 : index
    %c0_87 = arith.constant 0 : index
    %203 = vector.load %arg2[%c1_85, %c236_86, %c0_87] : memref<2x240x320xf32, #tpu.memory_space<vmem>>, vector<1x1x32xf32>
    %204 = vector.shape_cast %203 : vector<1x1x32xf32> to vector<1x32xf32>
    %cst_88 = arith.constant dense<0.000000e+00> : vector<34xf32>
    %205 = vector.multi_reduction <add>, %200, %cst_88 [1] : vector<34x32xf32> to vector<34xf32>
    %206 = vector.shape_cast %205 : vector<34xf32> to vector<34x1xf32>
    %cst_89 = arith.constant 3.200000e+01 : f32
    %207 = vector.broadcast %cst_89 : f32 to vector<34x1xf32>
    %208 = arith.divf %206, %207 : vector<34x1xf32>
    %209 = vector.broadcast %208 : vector<34x1xf32> to vector<34x32xf32>
    %210 = arith.subf %200, %209 : vector<34x32xf32>
    %211 = arith.mulf %210, %210 : vector<34x32xf32>
    %cst_90 = arith.constant dense<0.000000e+00> : vector<34xf32>
    %212 = vector.multi_reduction <add>, %211, %cst_90 [1] : vector<34x32xf32> to vector<34xf32>
    %213 = vector.shape_cast %212 : vector<34xf32> to vector<34x1xf32>
    %cst_91 = arith.constant 3.200000e+01 : f32
    %214 = vector.broadcast %cst_91 : f32 to vector<34x1xf32>
    %215 = arith.divf %213, %214 : vector<34x1xf32>
    %216 = vector.broadcast %208 : vector<34x1xf32> to vector<34x32xf32>
    %217 = arith.subf %200, %216 : vector<34x32xf32>
    %cst_92 = arith.constant 9.99999997E-7 : f32
    %218 = vector.broadcast %cst_92 : f32 to vector<34x1xf32>
    %219 = arith.addf %215, %218 : vector<34x1xf32>
    %220 = math.rsqrt %219 : vector<34x1xf32>
    %221 = vector.broadcast %220 : vector<34x1xf32> to vector<34x32xf32>
    %222 = arith.mulf %217, %221 : vector<34x32xf32>
    %223 = vector.broadcast %202 : vector<1x32xf32> to vector<34x32xf32>
    %224 = arith.mulf %222, %223 : vector<34x32xf32>
    %225 = vector.broadcast %204 : vector<1x32xf32> to vector<34x32xf32>
    %226 = arith.addf %224, %225 : vector<34x32xf32>
    %c1_93 = arith.constant 1 : index
    %c0_94 = arith.constant 0 : index
    %c0_95 = arith.constant 0 : index
    %227 = vector.load %arg2[%c1_93, %c0_94, %c0_95] : memref<2x240x320xf32, #tpu.memory_space<vmem>>, vector<1x32x320xf32>
    %228 = vector.shape_cast %227 : vector<1x32x320xf32> to vector<32x320xf32>
    %cst_96 = arith.constant dense<0.000000e+00> : vector<34x320xf32>
    %229 = tpu.matmul %226, %228, %cst_96 {dimension_numbers = #tpu.dot_dimension_numbers<[1], [0], [0], [1], [0, 0, 1, 1], [], []>} : vector<34x32xf32>, vector<32x320xf32>, vector<34x320xf32> -> vector<34x320xf32>
    %c1_97 = arith.constant 1 : index
    %c32_98 = arith.constant 32 : index
    %c0_99 = arith.constant 0 : index
    %230 = vector.load %arg2[%c1_97, %c32_98, %c0_99] : memref<2x240x320xf32, #tpu.memory_space<vmem>>, vector<1x1x320xf32>
    %231 = vector.shape_cast %230 : vector<1x1x320xf32> to vector<1x320xf32>
    %232 = vector.broadcast %231 : vector<1x320xf32> to vector<34x320xf32>
    %233 = arith.addf %229, %232 : vector<34x320xf32>
    %234 = vector.extract_strided_slice %233 {offsets = [0, 0], sizes = [34, 33], strides = [1, 1]} : vector<34x320xf32> to vector<34x33xf32>
    %235 = vector.extract_strided_slice %233 {offsets = [0, 64], sizes = [34, 64], strides = [1, 1]} : vector<34x320xf32> to vector<34x64xf32>
    %236 = vector.extract_strided_slice %233 {offsets = [0, 128], sizes = [34, 64], strides = [1, 1]} : vector<34x320xf32> to vector<34x64xf32>
    %237 = vector.extract_strided_slice %233 {offsets = [0, 192], sizes = [34, 64], strides = [1, 1]} : vector<34x320xf32> to vector<34x64xf32>
    %238 = vector.extract_strided_slice %233 {offsets = [0, 256], sizes = [34, 64], strides = [1, 1]} : vector<34x320xf32> to vector<34x64xf32>
    %cst_100 = arith.constant dense<0xFF800000> : vector<34xf32>
    %239 = vector.multi_reduction <maximumf>, %236, %cst_100 [1] : vector<34x64xf32> to vector<34xf32>
    %240 = vector.shape_cast %239 : vector<34xf32> to vector<34x1xf32>
    %cst_101 = arith.constant dense<0xFF800000> : vector<1xf32>
    %241 = vector.multi_reduction <maximumf>, %240, %cst_101 [0] : vector<34x1xf32> to vector<1xf32>
    %242 = vector.shape_cast %241 : vector<1xf32> to vector<1x1xf32>
    %243 = arith.subf %236, %238 : vector<34x64xf32>
    %244 = vector.broadcast %242 : vector<1x1xf32> to vector<34x64xf32>
    %245 = arith.subf %243, %244 : vector<34x64xf32>
    %246 = math.exp %245 : vector<34x64xf32>
    %cst_102 = arith.constant 9.99999997E-7 : f32
    %247 = vector.broadcast %cst_102 : f32 to vector<34x64xf32>
    %248 = arith.addf %246, %247 : vector<34x64xf32>
    %cst_103 = arith.constant 5.000000e-01 : f32
    %249 = vector.broadcast %cst_103 : f32 to vector<34x64xf32>
    %250 = arith.mulf %249, %248 : vector<34x64xf32>
    %cst_104 = arith.constant 0.000000e+00 : f32
    %251 = vector.broadcast %cst_104 : f32 to vector<34x64xf32>
    %252 = vector.extract_strided_slice %235 {offsets = [0, 0], sizes = [34, 16], strides = [1, 1]} : vector<34x64xf32> to vector<34x16xf32>
    %cst_105 = arith.constant dense<0xFF800000> : vector<34xf32>
    %253 = vector.multi_reduction <maximumf>, %252, %cst_105 [1] : vector<34x16xf32> to vector<34xf32>
    %254 = vector.shape_cast %253 : vector<34xf32> to vector<34x1xf32>
    %c388_106 = arith.constant 388 : index
    %c0_107 = arith.constant 0 : index
    %255 = vector.load %arg3[%c388_106, %c0_107] : memref<400x128xf32, #tpu.memory_space<vmem>>, vector<1x64xf32>
    %256 = vector.broadcast %255 : vector<1x64xf32> to vector<34x64xf32>
    %257 = vector.broadcast %254 : vector<34x1xf32> to vector<34x64xf32>
    %258 = arith.mulf %256, %257 : vector<34x64xf32>
    %259 = arith.addf %251, %258 : vector<34x64xf32>
    %260 = vector.extract_strided_slice %235 {offsets = [0, 16], sizes = [34, 16], strides = [1, 1]} : vector<34x64xf32> to vector<34x16xf32>
    %cst_108 = arith.constant dense<0xFF800000> : vector<34xf32>
    %261 = vector.multi_reduction <maximumf>, %260, %cst_108 [1] : vector<34x16xf32> to vector<34xf32>
    %262 = vector.shape_cast %261 : vector<34xf32> to vector<34x1xf32>
    %c389_109 = arith.constant 389 : index
    %c0_110 = arith.constant 0 : index
    %263 = vector.load %arg3[%c389_109, %c0_110] : memref<400x128xf32, #tpu.memory_space<vmem>>, vector<1x64xf32>
    %264 = vector.broadcast %263 : vector<1x64xf32> to vector<34x64xf32>
    %265 = vector.broadcast %262 : vector<34x1xf32> to vector<34x64xf32>
    %266 = arith.mulf %264, %265 : vector<34x64xf32>
    %267 = arith.addf %259, %266 : vector<34x64xf32>
    %268 = vector.extract_strided_slice %235 {offsets = [0, 32], sizes = [34, 16], strides = [1, 1]} : vector<34x64xf32> to vector<34x16xf32>
    %cst_111 = arith.constant dense<0xFF800000> : vector<34xf32>
    %269 = vector.multi_reduction <maximumf>, %268, %cst_111 [1] : vector<34x16xf32> to vector<34xf32>
    %270 = vector.shape_cast %269 : vector<34xf32> to vector<34x1xf32>
    %c390_112 = arith.constant 390 : index
    %c0_113 = arith.constant 0 : index
    %271 = vector.load %arg3[%c390_112, %c0_113] : memref<400x128xf32, #tpu.memory_space<vmem>>, vector<1x64xf32>
    %272 = vector.broadcast %271 : vector<1x64xf32> to vector<34x64xf32>
    %273 = vector.broadcast %270 : vector<34x1xf32> to vector<34x64xf32>
    %274 = arith.mulf %272, %273 : vector<34x64xf32>
    %275 = arith.addf %267, %274 : vector<34x64xf32>
    %276 = vector.extract_strided_slice %235 {offsets = [0, 48], sizes = [34, 16], strides = [1, 1]} : vector<34x64xf32> to vector<34x16xf32>
    %cst_114 = arith.constant dense<0xFF800000> : vector<34xf32>
    %277 = vector.multi_reduction <maximumf>, %276, %cst_114 [1] : vector<34x16xf32> to vector<34xf32>
    %278 = vector.shape_cast %277 : vector<34xf32> to vector<34x1xf32>
    %c391_115 = arith.constant 391 : index
    %c0_116 = arith.constant 0 : index
    %279 = vector.load %arg3[%c391_115, %c0_116] : memref<400x128xf32, #tpu.memory_space<vmem>>, vector<1x64xf32>
    %280 = vector.broadcast %279 : vector<1x64xf32> to vector<34x64xf32>
    %281 = vector.broadcast %278 : vector<34x1xf32> to vector<34x64xf32>
    %282 = arith.mulf %280, %281 : vector<34x64xf32>
    %283 = arith.addf %275, %282 : vector<34x64xf32>
    %284 = arith.subf %235, %237 : vector<34x64xf32>
    %285 = arith.subf %284, %283 : vector<34x64xf32>
    %286 = math.exp %285 : vector<34x64xf32>
    %cst_117 = arith.constant 9.99999997E-7 : f32
    %287 = vector.broadcast %cst_117 : f32 to vector<34x64xf32>
    %288 = arith.addf %286, %287 : vector<34x64xf32>
    %cst_118 = arith.constant 5.000000e-01 : f32
    %289 = vector.broadcast %cst_118 : f32 to vector<34x64xf32>
    %290 = arith.mulf %289, %288 : vector<34x64xf32>
    %c120_119 = arith.constant 120 : index
    %c0_120 = arith.constant 0 : index
    %291 = vector.load %arg3[%c120_119, %c0_120] : memref<400x128xf32, #tpu.memory_space<vmem>>, vector<34x128xf32>
    %c288_121 = arith.constant 288 : index
    %c0_122 = arith.constant 0 : index
    %292 = vector.load %arg3[%c288_121, %c0_122] : memref<400x128xf32, #tpu.memory_space<vmem>>, vector<64x128xf32>
    %cst_123 = arith.constant dense<0.000000e+00> : vector<34x128xf32>
    %293 = tpu.matmul %250, %292, %cst_123 {dimension_numbers = #tpu.dot_dimension_numbers<[1], [0], [0], [1], [0, 0, 1, 1], [], []>} : vector<34x64xf32>, vector<64x128xf32>, vector<34x128xf32> -> vector<34x128xf32>
    %294 = arith.mulf %293, %291 : vector<34x128xf32>
    %cst_124 = arith.constant dense<0.000000e+00> : vector<34x128xf32>
    %295 = tpu.matmul %290, %292, %cst_124 {dimension_numbers = #tpu.dot_dimension_numbers<[1], [0], [0], [1], [0, 0, 1, 1], [], []>} : vector<34x64xf32>, vector<64x128xf32>, vector<34x128xf32> -> vector<34x128xf32>
    %296 = arith.mulf %295, %291 : vector<34x128xf32>
    %cst_125 = arith.constant dense<0.000000e+00> : vector<128x33xf32>
    %297 = tpu.matmul %294, %234, %cst_125 {dimension_numbers = #tpu.dot_dimension_numbers<[0], [0], [1], [1], [0, 1, 1, 1], [], []>} : vector<34x128xf32>, vector<34x33xf32>, vector<128x33xf32> -> vector<128x33xf32>
    %c352_126 = arith.constant 352 : index
    %c0_127 = arith.constant 0 : index
    %298 = vector.load %arg3[%c352_126, %c0_127] : memref<400x128xf32, #tpu.memory_space<vmem>>, vector<33x64xf32>
    %cst_128 = arith.constant dense<0.000000e+00> : vector<128x64xf32>
    %299 = tpu.matmul %297, %298, %cst_128 {dimension_numbers = #tpu.dot_dimension_numbers<[1], [0], [0], [1], [0, 0, 1, 1], [], []>} : vector<128x33xf32>, vector<33x64xf32>, vector<128x64xf32> -> vector<128x64xf32>
    %c160_129 = arith.constant 160 : index
    %c0_130 = arith.constant 0 : index
    %300 = vector.load %arg3[%c160_129, %c0_130] : memref<400x128xf32, #tpu.memory_space<vmem>>, vector<128x64xf32>
    %301 = arith.mulf %299, %300 : vector<128x64xf32>
    %cst_131 = arith.constant dense<0.000000e+00> : vector<34x64xf32>
    %302 = tpu.matmul %296, %301, %cst_131 {dimension_numbers = #tpu.dot_dimension_numbers<[1], [0], [0], [1], [0, 0, 1, 1], [], []>} : vector<34x128xf32>, vector<128x64xf32>, vector<34x64xf32> -> vector<34x64xf32>
    %303 = vector.extract_strided_slice %302 {offsets = [0, 0], sizes = [34, 32], strides = [1, 1]} : vector<34x64xf32> to vector<34x32xf32>
    %304 = vector.extract_strided_slice %302 {offsets = [0, 32], sizes = [34, 32], strides = [1, 1]} : vector<34x64xf32> to vector<34x32xf32>
    %305 = tpu.reciprocal %304 {approx = true} : vector<34x32xf32> -> vector<34x32xf32>
    %306 = arith.mulf %303, %305 : vector<34x32xf32>
    %c1_132 = arith.constant 1 : index
    %c40_133 = arith.constant 40 : index
    %c0_134 = arith.constant 0 : index
    %307 = vector.load %arg2[%c1_132, %c40_133, %c0_134] : memref<2x240x320xf32, #tpu.memory_space<vmem>>, vector<1x32x32xf32>
    %308 = vector.shape_cast %307 : vector<1x32x32xf32> to vector<32x32xf32>
    %cst_135 = arith.constant dense<0.000000e+00> : vector<34x32xf32>
    %309 = tpu.matmul %306, %308, %cst_135 {dimension_numbers = #tpu.dot_dimension_numbers<[1], [0], [0], [1], [0, 0, 1, 1], [], []>} : vector<34x32xf32>, vector<32x32xf32>, vector<34x32xf32> -> vector<34x32xf32>
    %310 = arith.addf %200, %309 : vector<34x32xf32>
    %c1_136 = arith.constant 1 : index
    %c232_137 = arith.constant 232 : index
    %c0_138 = arith.constant 0 : index
    %311 = vector.load %arg2[%c1_136, %c232_137, %c0_138] : memref<2x240x320xf32, #tpu.memory_space<vmem>>, vector<1x1x32xf32>
    %312 = vector.shape_cast %311 : vector<1x1x32xf32> to vector<1x32xf32>
    %313 = vector.broadcast %312 : vector<1x32xf32> to vector<34x32xf32>
    %314 = arith.addf %310, %313 : vector<34x32xf32>
    %c1_139 = arith.constant 1 : index
    %c237_140 = arith.constant 237 : index
    %c0_141 = arith.constant 0 : index
    %315 = vector.load %arg2[%c1_139, %c237_140, %c0_141] : memref<2x240x320xf32, #tpu.memory_space<vmem>>, vector<1x1x32xf32>
    %316 = vector.shape_cast %315 : vector<1x1x32xf32> to vector<1x32xf32>
    %c1_142 = arith.constant 1 : index
    %c238_143 = arith.constant 238 : index
    %c0_144 = arith.constant 0 : index
    %317 = vector.load %arg2[%c1_142, %c238_143, %c0_144] : memref<2x240x320xf32, #tpu.memory_space<vmem>>, vector<1x1x32xf32>
    %318 = vector.shape_cast %317 : vector<1x1x32xf32> to vector<1x32xf32>
    %cst_145 = arith.constant dense<0.000000e+00> : vector<34xf32>
    %319 = vector.multi_reduction <add>, %314, %cst_145 [1] : vector<34x32xf32> to vector<34xf32>
    %320 = vector.shape_cast %319 : vector<34xf32> to vector<34x1xf32>
    %cst_146 = arith.constant 3.200000e+01 : f32
    %321 = vector.broadcast %cst_146 : f32 to vector<34x1xf32>
    %322 = arith.divf %320, %321 : vector<34x1xf32>
    %323 = vector.broadcast %322 : vector<34x1xf32> to vector<34x32xf32>
    %324 = arith.subf %314, %323 : vector<34x32xf32>
    %325 = arith.mulf %324, %324 : vector<34x32xf32>
    %cst_147 = arith.constant dense<0.000000e+00> : vector<34xf32>
    %326 = vector.multi_reduction <add>, %325, %cst_147 [1] : vector<34x32xf32> to vector<34xf32>
    %327 = vector.shape_cast %326 : vector<34xf32> to vector<34x1xf32>
    %cst_148 = arith.constant 3.200000e+01 : f32
    %328 = vector.broadcast %cst_148 : f32 to vector<34x1xf32>
    %329 = arith.divf %327, %328 : vector<34x1xf32>
    %330 = vector.broadcast %322 : vector<34x1xf32> to vector<34x32xf32>
    %331 = arith.subf %314, %330 : vector<34x32xf32>
    %cst_149 = arith.constant 9.99999997E-7 : f32
    %332 = vector.broadcast %cst_149 : f32 to vector<34x1xf32>
    %333 = arith.addf %329, %332 : vector<34x1xf32>
    %334 = math.rsqrt %333 : vector<34x1xf32>
    %335 = vector.broadcast %334 : vector<34x1xf32> to vector<34x32xf32>
    %336 = arith.mulf %331, %335 : vector<34x32xf32>
    %337 = vector.broadcast %316 : vector<1x32xf32> to vector<34x32xf32>
    %338 = arith.mulf %336, %337 : vector<34x32xf32>
    %339 = vector.broadcast %318 : vector<1x32xf32> to vector<34x32xf32>
    %340 = arith.addf %338, %339 : vector<34x32xf32>
    %c1_150 = arith.constant 1 : index
    %c72_151 = arith.constant 72 : index
    %c0_152 = arith.constant 0 : index
    %341 = vector.load %arg2[%c1_150, %c72_151, %c0_152] : memref<2x240x320xf32, #tpu.memory_space<vmem>>, vector<1x32x128xf32>
    %342 = vector.shape_cast %341 : vector<1x32x128xf32> to vector<32x128xf32>
    %cst_153 = arith.constant dense<0.000000e+00> : vector<34x128xf32>
    %343 = tpu.matmul %340, %342, %cst_153 {dimension_numbers = #tpu.dot_dimension_numbers<[1], [0], [0], [1], [0, 0, 1, 1], [], []>} : vector<34x32xf32>, vector<32x128xf32>, vector<34x128xf32> -> vector<34x128xf32>
    %c1_154 = arith.constant 1 : index
    %c233_155 = arith.constant 233 : index
    %c0_156 = arith.constant 0 : index
    %344 = vector.load %arg2[%c1_154, %c233_155, %c0_156] : memref<2x240x320xf32, #tpu.memory_space<vmem>>, vector<1x1x128xf32>
    %345 = vector.shape_cast %344 : vector<1x1x128xf32> to vector<1x128xf32>
    %346 = vector.broadcast %345 : vector<1x128xf32> to vector<34x128xf32>
    %347 = arith.addf %343, %346 : vector<34x128xf32>
    %cst_157 = arith.constant 5.000000e-01 : f32
    %348 = vector.broadcast %cst_157 : f32 to vector<34x128xf32>
    %349 = arith.mulf %348, %347 : vector<34x128xf32>
    %cst_158 = arith.constant 0.707106769 : f32
    %350 = vector.broadcast %cst_158 : f32 to vector<34x128xf32>
    %351 = arith.mulf %347, %350 : vector<34x128xf32>
    %cst_159 = arith.constant 0.000000e+00 : f32
    %352 = vector.broadcast %cst_159 : f32 to vector<34x128xf32>
    %353 = arith.cmpf oge, %351, %352 : vector<34x128xf32>
    %cst_160 = arith.constant 1.000000e+00 : f32
    %cst_161 = arith.constant -1.000000e+00 : f32
    %354 = vector.broadcast %cst_160 : f32 to vector<34x128xf32>
    %355 = vector.broadcast %cst_161 : f32 to vector<34x128xf32>
    %356 = arith.select %353, %354, %355 : vector<34x128xi1>, vector<34x128xf32>
    %357 = arith.mulf %351, %356 : vector<34x128xf32>
    %cst_162 = arith.constant 0.327591091 : f32
    %358 = vector.broadcast %cst_162 : f32 to vector<34x128xf32>
    %359 = arith.mulf %358, %357 : vector<34x128xf32>
    %cst_163 = arith.constant 1.000000e+00 : f32
    %360 = vector.broadcast %cst_163 : f32 to vector<34x128xf32>
    %361 = arith.addf %360, %359 : vector<34x128xf32>
    %cst_164 = arith.constant 1.000000e+00 : f32
    %362 = vector.broadcast %cst_164 : f32 to vector<34x128xf32>
    %363 = arith.divf %362, %361 : vector<34x128xf32>
    %cst_165 = arith.constant 1.06140542 : f32
    %364 = vector.broadcast %cst_165 : f32 to vector<34x128xf32>
    %365 = arith.mulf %364, %363 : vector<34x128xf32>
    %cst_166 = arith.constant -1.45315206 : f32
    %366 = vector.broadcast %cst_166 : f32 to vector<34x128xf32>
    %367 = arith.addf %365, %366 : vector<34x128xf32>
    %368 = arith.mulf %367, %363 : vector<34x128xf32>
    %cst_167 = arith.constant 1.42141378 : f32
    %369 = vector.broadcast %cst_167 : f32 to vector<34x128xf32>
    %370 = arith.addf %368, %369 : vector<34x128xf32>
    %371 = arith.mulf %370, %363 : vector<34x128xf32>
    %cst_168 = arith.constant -0.284496725 : f32
    %372 = vector.broadcast %cst_168 : f32 to vector<34x128xf32>
    %373 = arith.addf %371, %372 : vector<34x128xf32>
    %374 = arith.mulf %373, %363 : vector<34x128xf32>
    %cst_169 = arith.constant 0.254829586 : f32
    %375 = vector.broadcast %cst_169 : f32 to vector<34x128xf32>
    %376 = arith.addf %374, %375 : vector<34x128xf32>
    %377 = arith.mulf %376, %363 : vector<34x128xf32>
    %cst_170 = arith.constant 0.000000e+00 : f32
    %378 = vector.broadcast %cst_170 : f32 to vector<34x128xf32>
    %379 = arith.subf %378, %357 : vector<34x128xf32>
    %380 = arith.mulf %379, %357 : vector<34x128xf32>
    %381 = math.exp %380 : vector<34x128xf32>
    %382 = arith.mulf %377, %381 : vector<34x128xf32>
    %cst_171 = arith.constant 1.000000e+00 : f32
    %383 = vector.broadcast %cst_171 : f32 to vector<34x128xf32>
    %384 = arith.subf %383, %382 : vector<34x128xf32>
    %385 = arith.mulf %356, %384 : vector<34x128xf32>
    %cst_172 = arith.constant 1.000000e+00 : f32
    %386 = vector.broadcast %cst_172 : f32 to vector<34x128xf32>
    %387 = arith.addf %386, %385 : vector<34x128xf32>
    %388 = arith.mulf %349, %387 : vector<34x128xf32>
    %c1_173 = arith.constant 1 : index
    %c104_174 = arith.constant 104 : index
    %c0_175 = arith.constant 0 : index
    %389 = vector.load %arg2[%c1_173, %c104_174, %c0_175] : memref<2x240x320xf32, #tpu.memory_space<vmem>>, vector<1x128x32xf32>
    %390 = vector.shape_cast %389 : vector<1x128x32xf32> to vector<128x32xf32>
    %cst_176 = arith.constant dense<0.000000e+00> : vector<34x32xf32>
    %391 = tpu.matmul %388, %390, %cst_176 {dimension_numbers = #tpu.dot_dimension_numbers<[1], [0], [0], [1], [0, 0, 1, 1], [], []>} : vector<34x128xf32>, vector<128x32xf32>, vector<34x32xf32> -> vector<34x32xf32>
    %392 = arith.addf %314, %391 : vector<34x32xf32>
    %c1_177 = arith.constant 1 : index
    %c234_178 = arith.constant 234 : index
    %c0_179 = arith.constant 0 : index
    %393 = vector.load %arg2[%c1_177, %c234_178, %c0_179] : memref<2x240x320xf32, #tpu.memory_space<vmem>>, vector<1x1x32xf32>
    %394 = vector.shape_cast %393 : vector<1x1x32xf32> to vector<1x32xf32>
    %395 = vector.broadcast %394 : vector<1x32xf32> to vector<34x32xf32>
    %396 = arith.addf %392, %395 : vector<34x32xf32>
    %c392 = arith.constant 392 : index
    %c0_180 = arith.constant 0 : index
    %397 = vector.load %arg3[%c392, %c0_180] : memref<400x128xf32, #tpu.memory_space<vmem>>, vector<2x34xf32>
    %cst_181 = arith.constant dense<0.000000e+00> : vector<2x32xf32>
    %398 = tpu.matmul %397, %396, %cst_181 {dimension_numbers = #tpu.dot_dimension_numbers<[1], [0], [0], [1], [0, 0, 1, 1], [], []>} : vector<2x34xf32>, vector<34x32xf32>, vector<2x32xf32> -> vector<2x32xf32>
    %c394 = arith.constant 394 : index
    %c0_182 = arith.constant 0 : index
    %399 = vector.load %arg3[%c394, %c0_182] : memref<400x128xf32, #tpu.memory_space<vmem>>, vector<1x32xf32>
    %c395 = arith.constant 395 : index
    %c0_183 = arith.constant 0 : index
    %400 = vector.load %arg3[%c395, %c0_183] : memref<400x128xf32, #tpu.memory_space<vmem>>, vector<1x32xf32>
    %cst_184 = arith.constant dense<0.000000e+00> : vector<2xf32>
    %401 = vector.multi_reduction <add>, %398, %cst_184 [1] : vector<2x32xf32> to vector<2xf32>
    %402 = vector.shape_cast %401 : vector<2xf32> to vector<2x1xf32>
    %cst_185 = arith.constant 3.200000e+01 : f32
    %403 = vector.broadcast %cst_185 : f32 to vector<2x1xf32>
    %404 = arith.divf %402, %403 : vector<2x1xf32>
    %405 = vector.broadcast %404 : vector<2x1xf32> to vector<2x32xf32>
    %406 = arith.subf %398, %405 : vector<2x32xf32>
    %407 = arith.mulf %406, %406 : vector<2x32xf32>
    %cst_186 = arith.constant dense<0.000000e+00> : vector<2xf32>
    %408 = vector.multi_reduction <add>, %407, %cst_186 [1] : vector<2x32xf32> to vector<2xf32>
    %409 = vector.shape_cast %408 : vector<2xf32> to vector<2x1xf32>
    %cst_187 = arith.constant 3.200000e+01 : f32
    %410 = vector.broadcast %cst_187 : f32 to vector<2x1xf32>
    %411 = arith.divf %409, %410 : vector<2x1xf32>
    %412 = vector.broadcast %404 : vector<2x1xf32> to vector<2x32xf32>
    %413 = arith.subf %398, %412 : vector<2x32xf32>
    %cst_188 = arith.constant 9.99999997E-7 : f32
    %414 = vector.broadcast %cst_188 : f32 to vector<2x1xf32>
    %415 = arith.addf %411, %414 : vector<2x1xf32>
    %416 = math.rsqrt %415 : vector<2x1xf32>
    %417 = vector.broadcast %416 : vector<2x1xf32> to vector<2x32xf32>
    %418 = arith.mulf %413, %417 : vector<2x32xf32>
    %419 = vector.broadcast %399 : vector<1x32xf32> to vector<2x32xf32>
    %420 = arith.mulf %418, %419 : vector<2x32xf32>
    %421 = vector.broadcast %400 : vector<1x32xf32> to vector<2x32xf32>
    %422 = arith.addf %420, %421 : vector<2x32xf32>
    %c88 = arith.constant 88 : index
    %c0_189 = arith.constant 0 : index
    %423 = vector.load %arg3[%c88, %c0_189] : memref<400x128xf32, #tpu.memory_space<vmem>>, vector<32x128xf32>
    %cst_190 = arith.constant dense<0.000000e+00> : vector<2x128xf32>
    %424 = tpu.matmul %422, %423, %cst_190 {dimension_numbers = #tpu.dot_dimension_numbers<[1], [0], [0], [1], [0, 0, 1, 1], [], []>} : vector<2x32xf32>, vector<32x128xf32>, vector<2x128xf32> -> vector<2x128xf32>
    %c396 = arith.constant 396 : index
    %c0_191 = arith.constant 0 : index
    %425 = vector.load %arg3[%c396, %c0_191] : memref<400x128xf32, #tpu.memory_space<vmem>>, vector<1x128xf32>
    %426 = vector.broadcast %425 : vector<1x128xf32> to vector<2x128xf32>
    %427 = arith.addf %424, %426 : vector<2x128xf32>
    %c0_192 = arith.constant 0 : index
    %c0_193 = arith.constant 0 : index
    %428 = vector.load %arg4[%c0_192, %c0_193] : memref<2x128xf32, #tpu.memory_space<vmem>>, vector<2x128xf32>
    tpu.vector_store %arg4[%c0_192, %c0_193], %427 {strides = array<i32>} : memref<2x128xf32, #tpu.memory_space<vmem>>, vector<2x128xf32>,
    return
  }
  func.func @transform_0(%arg0: i32) -> (i32, i32) {
    %c0_i32 = arith.constant 0 : i32
    %c0_i32_0 = arith.constant 0 : i32
    %c0_i32_1 = arith.constant 0 : i32
    return %c0_i32, %c0_i32_0 : i32, i32
  }
  func.func @transform_1(%arg0: i32) -> (i32, i32, i32) {
    %c0_i32 = arith.constant 0 : i32
    %c0_i32_0 = arith.constant 0 : i32
    %c0_i32_1 = arith.constant 0 : i32
    %c0_i32_2 = arith.constant 0 : i32
    return %c0_i32, %c0_i32_0, %c0_i32_1 : i32, i32, i32
  }
  func.func @transform_2(%arg0: i32) -> (i32, i32) {
    %c0_i32 = arith.constant 0 : i32
    %c0_i32_0 = arith.constant 0 : i32
    %c0_i32_1 = arith.constant 0 : i32
    return %c0_i32, %c0_i32_0 : i32, i32
  }
  func.func @transform_3(%arg0: i32) -> (i32, i32) {
    %c0_i32 = arith.constant 0 : i32
    %c0_i32_0 = arith.constant 0 : i32
    %c0_i32_1 = arith.constant 0 : i32
    return %c0_i32, %c0_i32_0 : i32, i32
  }
}

</mosaic_0001>

<llo_original>
// kernel: forward.1
$region0: #{forward.1}
  #allocation0 [shape = 'u32[]', space=smem, size = 0x4, offset = 0x4, fixed_abs, tag = 'smem constant byte address 0x4 - core index']
  #allocation1 [shape = 'u32[144,128]{1,0:T(1,128)}', space=vmem, size = 0x12000, scoped, tag = 'internal scratch']
  %s0 = inlined_call_operand.vmem [shape: f32[34,48], index: 0, kind: input, shape index: {}]
  %s1 = inlined_call_operand.vmem [shape: f32[2,240,320], index: 1, kind: input, shape index: {}]
  %s2 = inlined_call_operand.vmem [shape: f32[400,128], index: 2, kind: input, shape index: {}]
  %s3 = inlined_call_operand.hbm [shape: f32[2,128], index: 3, kind: output, shape index: {}]
  %s4 = sld [smem:[#allocation0]]
  $region22: #{forward.1} parent=0
    _
  %s6 = ssub.s32 1, %s4
  %s7 = scalar_select 0, %s6, %s4
  $region1: #{forward.1} parent=0
    #allocation2 [shape = 'u8[1024]{0}', space=vmem, size = 0x400, scoped, tag = 'output window, operand 0, single buffered']
    #allocation3 [shape = 's32[1]{0}', space=sflag, size = 0x4, scoped, tag = 'scoped memory for forward.1']
    %8 = vsyncpa [#allocation3], 0
    // Predicated region
    $region2: #{forward.1} parent=1 // pred_check
      _
    $region3: #{forward.1} parent=1 // pred_check_branch
      %10 = sbr.rel (0) target = $region5
    $region4: #{forward.1} parent=1 // pred_region
      _
    $region5: #{forward.1} parent=1 // pred_fallthru
      _
    // Predicated region
    $region6: #{forward.1} parent=1 // pred_check
      _
    $region7: #{forward.1} parent=1 // pred_check_branch
      %12 = sbr.rel (0) target = $region9
    $region8: #{forward.1} parent=1 // pred_region
      _
    $region9: #{forward.1} parent=1 // pred_fallthru
      _
    // Predicated region
    $region10: #{forward.1} parent=1 // pred_check
      _
    $region11: #{forward.1} parent=1 // pred_check_branch
      %14 = sbr.rel (0) target = $region13
    $region12: #{forward.1} parent=1 // pred_region
      _
    $region13: #{forward.1} parent=1 // pred_fallthru
      _
    %v15 = vld [vmem:[%s2 + $0x30] sm:$0xff]
    %v16 = vld [vmem:[%s2 + $0x38] sm:$0xff]
    %v17 = vld [vmem:[%s2 + $0x40] sm:$0xff]
    %v18 = vld [vmem:[%s2 + $0x48] sm:$0xff]
    %v19 = vld [vmem:[%s2 + $0x50] sm:$0x3]
    %v20 = vld [vmem:[%s0] sm:$0xff]
    %v21 = vld [vmem:[%s0 + $0x8] sm:$0xff]
    %v22 = vld [vmem:[%s0 + $0x10] sm:$0xff]
    %v23 = vld [vmem:[%s0 + $0x18] sm:$0xff]
    %v24 = vld [vmem:[%s0 + $0x20] sm:$0x3]
    %v25 = vld [vmem:[%s2] sm:$0xff]
    %v26 = vld [vmem:[%s2 + $0x8] sm:$0xff]
    %v27 = vld [vmem:[%s2 + $0x10] sm:$0xff]
    %v28 = vld [vmem:[%s2 + $0x18] sm:$0xff]
    %v29 = vld [vmem:[%s2 + $0x20] sm:$0xff]
    %v30 = vld [vmem:[%s2 + $0x28] sm:$0xff]
    %vm31 = vcmask 392192
    %v33 = vsel %vm31, %v20, 0
    %v36 = vsel %vm31, %v21, 0
    %v39 = vsel %vm31, %v22, 0
    %v42 = vsel %vm31, %v23, 0
    %v45 = vsel %vm31, %v24, 0
    %47 = vmatprep.subr.mxu0 0.0
    %48 = vmatpush1.msra.mxu0 %v25
    %49 = vmatprep.subr.mxu0 0.0
    %50 = vmatpush1.msra.mxu0 %v26
    %51 = vmatprep.subr.mxu0 0.0
    %52 = vmatpush1.msra.mxu0 %v27
    %53 = vmatprep.subr.mxu0 0.0
    %54 = vmatpush1.msra.mxu0 %v28
    %55 = vmatprep.subr.mxu0 0.0
    %56 = vmatpush1.msra.mxu0 %v29
    %57 = vmatprep.subr.mxu0 0.0
    %58 = vmatpush1.msra.mxu0 %v30
    %59 = vmatprep.subr.mxu0 0.0
    %60 = vmatpush1.msra.mxu0 0.0
    %61 = vmatprep.subr.mxu0 0.0
    %62 = vmatpush1.msra.mxu0 0.0
    %63 = vmatprep.subr.mxu0 0.0
    %64 = vmatpush1.msra.mxu0 0.0
    %65 = vmatprep.subr.mxu0 0.0
    %66 = vmatpush1.msra.mxu0 0.0
    %67 = vmatprep.subr.mxu0 0.0
    %68 = vmatpush1.msra.mxu0 0.0
    %69 = vmatprep.subr.mxu0 0.0
    %70 = vmatpush1.msra.mxu0 0.0
    %71 = vmatprep.subr.mxu0 0.0
    %72 = vmatpush1.msra.mxu0 0.0
    %73 = vmatprep.subr.mxu0 0.0
    %74 = vmatpush1.msra.mxu0 0.0
    %75 = vmatprep.subr.mxu0 0.0
    %76 = vmatpush1.msra.mxu0 0.0
    %77 = vmatprep.subr.mxu0 0.0
    %78 = vmatpush1.msra.mxu0 0.0
    %79 = vmatprep.subr.mxu0 0.0
    %80 = vmatpush1.msra.mxu0 0.0
    %81 = vmatprep.subr.mxu0 0.0
    %82 = vmatpush1.msra.mxu0 0.0
    %83 = vmatprep.subr.mxu0 0.0
    %84 = vmatpush1.msra.mxu0 0.0
    %85 = vmatprep.subr.mxu0 0.0
    %86 = vmatpush1.msra.mxu0 0.0
    %87 = vmatprep.subr.mxu0 0.0
    %88 = vmatpush1.msra.mxu0 0.0
    %89 = vmatprep.subr.mxu0 0.0
    %90 = vmatpush1.msra.mxu0 0.0
    %91 = vmatprep.subr.mxu0 0.0
    %92 = vmatpush1.msra.mxu0 0.0
    %93 = vmatprep.subr.mxu0 0.0
    %94 = vmatpush1.msra.mxu0 0.0
    %95 = vmatprep.subr.mxu0 0.0
    %96 = vmatpush1.msra.mxu0 0.0
    %97 = vmatprep.subr.mxu0 0.0
    %98 = vmatpush1.msra.mxu0 0.0
    %99 = vmatprep.subr.mxu0 0.0
    %100 = vmatpush1.msra.mxu0 0.0
    %101 = vmatprep.subr.mxu0 0.0
    %102 = vmatpush1.msra.mxu0 0.0
    %103 = vmatprep.subr.mxu0 0.0
    %104 = vmatpush1.msra.mxu0 0.0
    %105 = vmatprep.subr.mxu0 0.0
    %106 = vmatpush1.msra.mxu0 0.0
    %107 = vmatprep.subr.mxu0 0.0
    %108 = vmatpush1.msra.mxu0 0.0
    %109 = vmatprep.subr.mxu0 0.0
    %110 = vmatpush1.msra.mxu0 0.0
    %111 = vmatprep.mubr.f32.mxu0 0.0
    %112 = vmatmul.mubr.f32.gmra.mrb[0].mxu0 %v33
    %v113 = vpop.f32.mrb[0].mxu0
    %v114 = vadd.f32 0.0, %v113
    %v115 = vpop.f32.mrb[0].mxu0
    %116 = vmatprep.mubr.f32.mxu0 0.0
    %117 = vmatmul.mubr.f32.gmra.mrb[0].mxu0 %v36
    %v118 = vpop.f32.mrb[0].mxu0
    %v119 = vadd.f32 0.0, %v118
    %v120 = vpop.f32.mrb[0].mxu0
    %121 = vmatprep.mubr.f32.mxu0 0.0
    %122 = vmatmul.mubr.f32.gmra.mrb[0].mxu0 %v39
    %v123 = vpop.f32.mrb[0].mxu0
    %v124 = vadd.f32 0.0, %v123
    %v125 = vpop.f32.mrb[0].mxu0
    %126 = vmatprep.mubr.f32.mxu0 0.0
    %127 = vmatmul.mubr.f32.gmra.mrb[0].mxu0 %v42
    %v128 = vpop.f32.mrb[0].mxu0
    %v129 = vadd.f32 0.0, %v128
    %v130 = vpop.f32.mrb[0].mxu0
    %131 = vmatprep.mubr.f32.mxu0 0.0
    %132 = vmatmul.mubr.f32.gmra.mrb[0].mxu0 %v45
    %v133 = vpop.f32.mrb[0].mxu0
    %v134 = vadd.f32 0.0, %v133
    %v135 = vpop.f32.mrb[0].mxu0
    %136 = vdwg.mxu0
    %v137 = vadd.f32 %v15, %v114
    %v138 = vadd.f32 %v16, %v119
    %v139 = vadd.f32 %v17, %v124
    %v140 = vadd.f32 %v18, %v129
    %v141 = vadd.f32 %v19, %v134
    %v142 = vld [vmem:[%s1 + $0x2bb] ss:$0 sm:$0xff]
    %v143 = vld [vmem:[%s1 + $0x2bc] ss:$0 sm:$0xff]
    %vm144 = vcmask 261120
    %v145 = vsel %vm144, %v137, 0.0
    %146 = vadd.xlane.f32.xlu0 %v145
    %v147 = vpop.xlane.xlu0 %146
    %v148 = vsel %vm144, %v138, 0.0
    %149 = vadd.xlane.f32.xlu0 %v148
    %v150 = vpop.xlane.xlu0 %149
    %v151 = vsel %vm144, %v139, 0.0
    %152 = vadd.xlane.f32.xlu0 %v151
    %v153 = vpop.xlane.xlu0 %152
    %v154 = vsel %vm144, %v140, 0.0
    %155 = vadd.xlane.f32.xlu0 %v154
    %v156 = vpop.xlane.xlu0 %155
    %vm157 = vcmask 254976
    %v158 = vsel %vm157, %v141, 0.0
    %159 = vadd.xlane.f32.xlu0 %v158
    %v160 = vpop.xlane.xlu0 %159
    %v161 = vrcp.pop 32.0
    %v162 = vmul.f32 %v147, %v161
    %v163 = vmul.f32 %v150, %v161
    %v164 = vmul.f32 %v153, %v161
    %v165 = vmul.f32 %v156, %v161
    %v166 = vmul.f32 %v160, %v161
    %v167 = vsub.f32 %v137, %v162
    %v168 = vsub.f32 %v138, %v163
    %v169 = vsub.f32 %v139, %v164
    %v170 = vsub.f32 %v140, %v165
    %v171 = vsub.f32 %v141, %v166
    %v172 = vmul.f32 %v167, %v167
    %v173 = vmul.f32 %v168, %v168
    %v174 = vmul.f32 %v169, %v169
    %v175 = vmul.f32 %v170, %v170
    %v176 = vmul.f32 %v171, %v171
    %v177 = vsel %vm144, %v172, 0.0
    %178 = vadd.xlane.f32.xlu0 %v177
    %v179 = vpop.xlane.xlu0 %178
    %v180 = vsel %vm144, %v173, 0.0
    %181 = vadd.xlane.f32.xlu0 %v180
    %v182 = vpop.xlane.xlu0 %181
    %v183 = vsel %vm144, %v174, 0.0
    %184 = vadd.xlane.f32.xlu0 %v183
    %v185 = vpop.xlane.xlu0 %184
    %v186 = vsel %vm144, %v175, 0.0
    %187 = vadd.xlane.f32.xlu0 %v186
    %v188 = vpop.xlane.xlu0 %187
    %v189 = vsel %vm157, %v176, 0.0
    %190 = vadd.xlane.f32.xlu0 %v189
    %v191 = vpop.xlane.xlu0 %190
    %v192 = vmul.f32 %v179, %v161
    %v193 = vmul.f32 %v182, %v161
    %v194 = vmul.f32 %v185, %v161
    %v195 = vmul.f32 %v188, %v161
    %v196 = vmul.f32 %v191, %v161
    %v197 = vadd.f32 %v192, 1e-06
    %v198 = vadd.f32 %v193, 1e-06
    %v199 = vadd.f32 %v194, 1e-06
    %v200 = vadd.f32 %v195, 1e-06
    %v201 = vadd.f32 %v196, 1e-06
    %v202 = vrsqrt.pop %v197
    %v203 = vrsqrt.pop %v198
    %v204 = vrsqrt.pop %v199
    %v205 = vrsqrt.pop %v200
    %v206 = vrsqrt.pop %v201
    %v207 = vmul.f32 %v167, %v202
    %v208 = vmul.f32 %v168, %v203
    %v209 = vmul.f32 %v169, %v204
    %v210 = vmul.f32 %v170, %v205
    %v211 = vmul.f32 %v171, %v206
    %v212 = vmul.f32 %v207, %v142
    %v213 = vmul.f32 %v208, %v142
    %v214 = vmul.f32 %v209, %v142
    %v215 = vmul.f32 %v210, %v142
    %v216 = vmul.f32 %v211, %v142
    %v217 = vadd.f32 %v212, %v143
    %v218 = vadd.f32 %v213, %v143
    %v219 = vadd.f32 %v214, %v143
    %v220 = vadd.f32 %v215, %v143
    %v221 = vadd.f32 %v216, %v143
    %v222 = vld [vmem:[%s1] sm:$0xff]
    %v223 = vld [vmem:[%s1 + $0x8] sm:$0xff]
    %v224 = vld [vmem:[%s1 + $0x10] sm:$0xff]
    %v225 = vld [vmem:[%s1 + $0x18] sm:$0xff]
    %v226 = vld [vmem:[%s1 + $0x20] sm:$0xff]
    %v227 = vld [vmem:[%s1 + $0x28] sm:$0xff]
    %v228 = vld [vmem:[%s1 + $0x30] sm:$0xff]
    %v229 = vld [vmem:[%s1 + $0x38] sm:$0xff]
    %v230 = vld [vmem:[%s1 + $0x40] sm:$0xff]
    %v231 = vld [vmem:[%s1 + $0x48] sm:$0xff]
    %v232 = vld [vmem:[%s1 + $0x50] sm:$0xff]
    %v233 = vld [vmem:[%s1 + $0x58] sm:$0xff]
    %s234 = scalar_lea.vmem %s1, 96
    %v235 = vld [vmem:[%s234] ss:$8 sm:$0x7]
    %v237 = vlaneseq
    %v238 = vshrl.u32 %v237, 7
    %v239 = vsub.s32 0, %v238
    %v240 = vrot.slane %v235, %v239
    %v241 = vlaneseq
    %v242 = vshrl.u32 %v241, 7
    %v243 = vsub.s32 1, %v242
    %v244 = vrot.slane %v235, %v243
    %v245 = vlaneseq
    %v246 = vshrl.u32 %v245, 7
    %v247 = vsub.s32 2, %v246
    %v248 = vrot.slane %v235, %v247
    %v253 = vsel %vm144, %v217, 0
    %v256 = vsel %vm144, %v218, 0
    %v259 = vsel %vm144, %v219, 0
    %v262 = vsel %vm144, %v220, 0
    %v265 = vsel %vm144, %v221, 0
    %267 = vmatprep.subr.mxu0 %v223
    %268 = vmatpush1.msra.mxu0 %v222
    %269 = vmatprep.subr.mxu0 %v226
    %270 = vmatpush1.msra.mxu0 %v225
    %271 = vmatprep.subr.mxu0 %v229
    %272 = vmatpush1.msra.mxu0 %v228
    %273 = vmatprep.subr.mxu0 %v232
    %274 = vmatpush1.msra.mxu0 %v231
    %275 = vmatprep.subr.mxu0 0.0
    %276 = vmatpush1.msra.mxu0 0.0
    %277 = vmatprep.subr.mxu0 0.0
    %278 = vmatpush1.msra.mxu0 0.0
    %279 = vmatprep.subr.mxu0 0.0
    %280 = vmatpush1.msra.mxu0 0.0
    %281 = vmatprep.subr.mxu0 0.0
    %282 = vmatpush1.msra.mxu0 0.0
    %283 = vmatprep.subr.mxu0 0.0
    %284 = vmatpush1.msra.mxu0 0.0
    %285 = vmatprep.subr.mxu0 0.0
    %286 = vmatpush1.msra.mxu0 0.0
    %287 = vmatprep.subr.mxu0 0.0
    %288 = vmatpush1.msra.mxu0 0.0
    %289 = vmatprep.subr.mxu0 0.0
    %290 = vmatpush1.msra.mxu0 0.0
    %291 = vmatprep.subr.mxu0 0.0
    %292 = vmatpush1.msra.mxu0 0.0
    %293 = vmatprep.subr.mxu0 0.0
    %294 = vmatpush1.msra.mxu0 0.0
    %295 = vmatprep.subr.mxu0 0.0
    %296 = vmatpush1.msra.mxu0 0.0
    %297 = vmatprep.subr.mxu0 0.0
    %298 = vmatpush1.msra.mxu0 0.0
    %299 = vmatprep.subr.mxu0 0.0
    %300 = vmatpush1.msra.mxu0 0.0
    %301 = vmatprep.subr.mxu0 0.0
    %302 = vmatpush1.msra.mxu0 0.0
    %303 = vmatprep.subr.mxu0 0.0
    %304 = vmatpush1.msra.mxu0 0.0
    %305 = vmatprep.subr.mxu0 0.0
    %306 = vmatpush1.msra.mxu0 0.0
    %307 = vmatprep.subr.mxu0 0.0
    %308 = vmatpush1.msra.mxu0 0.0
    %309 = vmatprep.subr.mxu0 0.0
    %310 = vmatpush1.msra.mxu0 0.0
    %311 = vmatprep.subr.mxu0 0.0
    %312 = vmatpush1.msra.mxu0 0.0
    %313 = vmatprep.subr.mxu0 0.0
    %314 = vmatpush1.msra.mxu0 0.0
    %315 = vmatprep.subr.mxu0 0.0
    %316 = vmatpush1.msra.mxu0 0.0
    %317 = vmatprep.subr.mxu0 0.0
    %318 = vmatpush1.msra.mxu0 0.0
    %319 = vmatprep.subr.mxu0 0.0
    %320 = vmatpush1.msra.mxu0 0.0
    %321 = vmatprep.subr.mxu0 0.0
    %322 = vmatpush1.msra.mxu0 0.0
    %323 = vmatprep.subr.mxu0 0.0
    %324 = vmatpush1.msra.mxu0 0.0
    %325 = vmatprep.subr.mxu0 0.0
    %326 = vmatpush1.msra.mxu0 0.0
    %327 = vmatprep.subr.mxu0 0.0
    %328 = vmatpush1.msra.mxu0 0.0
    %329 = vmatprep.subr.mxu0 0.0
    %330 = vmatpush1.msra.mxu0 0.0
    %331 = vmatprep.mubr.f32.mxu0 0.0
    %332 = vmatmul.mubr.f32.gmra.mrb[0].mxu0 %v253
    %v333 = vpop.f32.mrb[0].mxu0
    %v334 = vadd.f32 %v240, %v333
    %v335 = vpop.f32.mrb[0].mxu0
    %v336 = vadd.f32 %v244, %v335
    %337 = vmatprep.mubr.f32.mxu0 0.0
    %338 = vmatmul.mubr.f32.gmra.mrb[0].mxu0 %v256
    %v339 = vpop.f32.mrb[0].mxu0
    %v340 = vadd.f32 %v240, %v339
    %v341 = vpop.f32.mrb[0].mxu0
    %v342 = vadd.f32 %v244, %v341
    %343 = vmatprep.mubr.f32.mxu0 0.0
    %344 = vmatmul.mubr.f32.gmra.mrb[0].mxu0 %v259
    %v345 = vpop.f32.mrb[0].mxu0
    %v346 = vadd.f32 %v240, %v345
    %v347 = vpop.f32.mrb[0].mxu0
    %v348 = vadd.f32 %v244, %v347
    %349 = vmatprep.mubr.f32.mxu0 0.0
    %350 = vmatmul.mubr.f32.gmra.mrb[0].mxu0 %v262
    %v351 = vpop.f32.mrb[0].mxu0
    %v352 = vadd.f32 %v240, %v351
    %v353 = vpop.f32.mrb[0].mxu0
    %v354 = vadd.f32 %v244, %v353
    %355 = vmatprep.mubr.f32.mxu0 0.0
    %356 = vmatmul.mubr.f32.gmra.mrb[0].mxu0 %v265
    %v357 = vpop.f32.mrb[0].mxu0
    %v358 = vadd.f32 %v240, %v357
    %v359 = vpop.f32.mrb[0].mxu0
    %v360 = vadd.f32 %v244, %v359
    %361 = vdwg.mxu0
    %362 = vmatprep.subr.mxu0 0.0
    %363 = vmatpush1.msra.mxu0 %v224
    %364 = vmatprep.subr.mxu0 0.0
    %365 = vmatpush1.msra.mxu0 %v227
    %366 = vmatprep.subr.mxu0 0.0
    %367 = vmatpush1.msra.mxu0 %v230
    %368 = vmatprep.subr.mxu0 0.0
    %369 = vmatpush1.msra.mxu0 %v233
    %370 = vmatprep.subr.mxu0 0.0
    %371 = vmatpush1.msra.mxu0 0.0
    %372 = vmatprep.subr.mxu0 0.0
    %373 = vmatpush1.msra.mxu0 0.0
    %374 = vmatprep.subr.mxu0 0.0
    %375 = vmatpush1.msra.mxu0 0.0
    %376 = vmatprep.subr.mxu0 0.0
    %377 = vmatpush1.msra.mxu0 0.0
    %378 = vmatprep.subr.mxu0 0.0
    %379 = vmatpush1.msra.mxu0 0.0
    %380 = vmatprep.subr.mxu0 0.0
    %381 = vmatpush1.msra.mxu0 0.0
    %382 = vmatprep.subr.mxu0 0.0
    %383 = vmatpush1.msra.mxu0 0.0
    %384 = vmatprep.subr.mxu0 0.0
    %385 = vmatpush1.msra.mxu0 0.0
    %386 = vmatprep.subr.mxu0 0.0
    %387 = vmatpush1.msra.mxu0 0.0
    %388 = vmatprep.subr.mxu0 0.0
    %389 = vmatpush1.msra.mxu0 0.0
    %390 = vmatprep.subr.mxu0 0.0
    %391 = vmatpush1.msra.mxu0 0.0
    %392 = vmatprep.subr.mxu0 0.0
    %393 = vmatpush1.msra.mxu0 0.0
    %394 = vmatprep.subr.mxu0 0.0
    %395 = vmatpush1.msra.mxu0 0.0
    %396 = vmatprep.subr.mxu0 0.0
    %397 = vmatpush1.msra.mxu0 0.0
    %398 = vmatprep.subr.mxu0 0.0
    %399 = vmatpush1.msra.mxu0 0.0
    %400 = vmatprep.subr.mxu0 0.0
    %401 = vmatpush1.msra.mxu0 0.0
    %402 = vmatprep.subr.mxu0 0.0
    %403 = vmatpush1.msra.mxu0 0.0
    %404 = vmatprep.subr.mxu0 0.0
    %405 = vmatpush1.msra.mxu0 0.0
    %406 = vmatprep.subr.mxu0 0.0
    %407 = vmatpush1.msra.mxu0 0.0
    %408 = vmatprep.subr.mxu0 0.0
    %409 = vmatpush1.msra.mxu0 0.0
    %410 = vmatprep.subr.mxu0 0.0
    %411 = vmatpush1.msra.mxu0 0.0
    %412 = vmatprep.subr.mxu0 0.0
    %413 = vmatpush1.msra.mxu0 0.0
    %414 = vmatprep.subr.mxu0 0.0
    %415 = vmatpush1.msra.mxu0 0.0
    %416 = vmatprep.subr.mxu0 0.0
    %417 = vmatpush1.msra.mxu0 0.0
    %418 = vmatprep.subr.mxu0 0.0
    %419 = vmatpush1.msra.mxu0 0.0
    %420 = vmatprep.subr.mxu0 0.0
    %421 = vmatpush1.msra.mxu0 0.0
    %422 = vmatprep.subr.mxu0 0.0
    %423 = vmatpush1.msra.mxu0 0.0
    %424 = vmatprep.subr.mxu0 0.0
    %425 = vmatpush1.msra.mxu0 0.0
    %426 = vmatprep.mubr.f32.mxu0 0.0
    %427 = vmatmul.mubr.f32.gmra.mrb[0].mxu0 %v253
    %v428 = vpop.f32.mrb[0].mxu0
    %v429 = vadd.f32 %v248, %v428
    %v430 = vpop.f32.mrb[0].mxu0
    %431 = vmatprep.mubr.f32.mxu0 0.0
    %432 = vmatmul.mubr.f32.gmra.mrb[0].mxu0 %v256
    %v433 = vpop.f32.mrb[0].mxu0
    %v434 = vadd.f32 %v248, %v433
    %v435 = vpop.f32.mrb[0].mxu0
    %436 = vmatprep.mubr.f32.mxu0 0.0
    %437 = vmatmul.mubr.f32.gmra.mrb[0].mxu0 %v259
    %v438 = vpop.f32.mrb[0].mxu0
    %v439 = vadd.f32 %v248, %v438
    %v440 = vpop.f32.mrb[0].mxu0
    %441 = vmatprep.mubr.f32.mxu0 0.0
    %442 = vmatmul.mubr.f32.gmra.mrb[0].mxu0 %v262
    %v443 = vpop.f32.mrb[0].mxu0
    %v444 = vadd.f32 %v248, %v443
    %v445 = vpop.f32.mrb[0].mxu0
    %446 = vmatprep.mubr.f32.mxu0 0.0
    %447 = vmatmul.mubr.f32.gmra.mrb[0].mxu0 %v265
    %v448 = vpop.f32.mrb[0].mxu0
    %v449 = vadd.f32 %v248, %v448
    %v450 = vpop.f32.mrb[0].mxu0
    %451 = vdwg.mxu0
    %vm452 = vcmask 523264
    %v453 = vsel %vm452, %v336, -inf
    %454 = vmax.xlane.f32.xlu0 %v453
    %v455 = vpop.xlane.xlu0 %454
    %v456 = vsel %vm452, %v342, -inf
    %457 = vmax.xlane.f32.xlu0 %v456
    %v458 = vpop.xlane.xlu0 %457
    %v459 = vsel %vm452, %v348, -inf
    %460 = vmax.xlane.f32.xlu0 %v459
    %v461 = vpop.xlane.xlu0 %460
    %v462 = vsel %vm452, %v354, -inf
    %463 = vmax.xlane.f32.xlu0 %v462
    %v464 = vpop.xlane.xlu0 %463
    %vm465 = vcmask 517120
    %v466 = vsel %vm465, %v360, -inf
    %467 = vmax.xlane.f32.xlu0 %v466
    %v468 = vpop.xlane.xlu0 %467
    %vm469 = vcmask 1041408
    %v470 = vsel %vm469, %v468, -inf
    %v471 = vmax.f32 %v455, %v470
    %v472 = vmax.f32 %v471, %v458
    %v473 = vmax.f32 %v461, %v464
    %v474 = vmax.f32 %v472, %v473
    %v475 = vrot.slane %v474, 4
    %v476 = vmax.f32 %v474, %v475
    %v477 = vrot.slane %v476, 2
    %v478 = vmax.f32 %v476, %v477
    %v479 = vrot.slane %v478, 1
    %v480 = vmax.f32 %v478, %v479
    %v481 = vsub.f32 %v336, %v429
    %v482 = vsub.f32 %v342, %v434
    %v483 = vsub.f32 %v348, %v439
    %v484 = vsub.f32 %v354, %v444
    %v485 = vsub.f32 %v360, %v449
    %v486 = vsub.f32 %v481, %v480
    %v487 = vsub.f32 %v482, %v480
    %v488 = vsub.f32 %v483, %v480
    %v489 = vsub.f32 %v484, %v480
    %v490 = vsub.f32 %v485, %v480
    %v491 = vmul.f32 %v486, 1.442695
    %v492 = vpow.pop %v491
    %v493 = vmul.f32 %v487, 1.442695
    %v494 = vpow.pop %v493
    %v495 = vmul.f32 %v488, 1.442695
    %v496 = vpow.pop %v495
    %v497 = vmul.f32 %v489, 1.442695
    %v498 = vpow.pop %v497
    %v499 = vmul.f32 %v490, 1.442695
    %v500 = vpow.pop %v499
    %v501 = vadd.f32 %v492, 1e-06
    %v502 = vadd.f32 %v494, 1e-06
    %v503 = vadd.f32 %v496, 1e-06
    %v504 = vadd.f32 %v498, 1e-06
    %v505 = vadd.f32 %v500, 1e-06
    %v506 = vmul.f32 %v501, 0.5
    %v507 = vmul.f32 %v502, 0.5
    %v508 = vmul.f32 %v503, 0.5
    %v509 = vmul.f32 %v504, 0.5
    %v510 = vmul.f32 %v505, 0.5
    %vm511 = vcmask 654848
    %v512 = vsel %vm511, %v334, -inf
    %513 = vmax.xlane.f32.xlu0 %v512
    %v514 = vpop.xlane.xlu0 %513
    %v515 = vsel %vm511, %v340, -inf
    %516 = vmax.xlane.f32.xlu0 %v515
    %v517 = vpop.xlane.xlu0 %516
    %v518 = vsel %vm511, %v346, -inf
    %519 = vmax.xlane.f32.xlu0 %v518
    %v520 = vpop.xlane.xlu0 %519
    %v521 = vsel %vm511, %v352, -inf
    %522 = vmax.xlane.f32.xlu0 %v521
    %v523 = vpop.xlane.xlu0 %522
    %vm524 = vcmask 648704
    %v525 = vsel %vm524, %v358, -inf
    %526 = vmax.xlane.f32.xlu0 %v525
    %v527 = vpop.xlane.xlu0 %526
    %v528 = vld [vmem:[%s2 + $0x184] sm:$0x1]
    %v529 = vlaneseq
    %v530 = vshrl.u32 %v529, 7
    %v531 = vsub.s32 0, %v530
    %v532 = vrot.slane %v528, %v531
    %v533 = vmul.f32 %v532, %v514
    %v534 = vmul.f32 %v532, %v517
    %v535 = vmul.f32 %v532, %v520
    %v536 = vmul.f32 %v532, %v523
    %v537 = vmul.f32 %v532, %v527
    %v538 = vadd.f32 %v533, 0.0
    %v539 = vadd.f32 %v534, 0.0
    %v540 = vadd.f32 %v535, 0.0
    %v541 = vadd.f32 %v536, 0.0
    %v542 = vadd.f32 %v537, 0.0
    %vm543 = vcmask 786048
    %v544 = vsel %vm543, %v334, -inf
    %545 = vmax.xlane.f32.xlu0 %v544
    %v546 = vpop.xlane.xlu0 %545
    %v547 = vsel %vm543, %v340, -inf
    %548 = vmax.xlane.f32.xlu0 %v547
    %v549 = vpop.xlane.xlu0 %548
    %v550 = vsel %vm543, %v346, -inf
    %551 = vmax.xlane.f32.xlu0 %v550
    %v552 = vpop.xlane.xlu0 %551
    %v553 = vsel %vm543, %v352, -inf
    %554 = vmax.xlane.f32.xlu0 %v553
    %v555 = vpop.xlane.xlu0 %554
    %vm556 = vcmask 779904
    %v557 = vsel %vm556, %v358, -inf
    %558 = vmax.xlane.f32.xlu0 %v557
    %v559 = vpop.xlane.xlu0 %558
    %v560 = vld [vmem:[%s2 + $0x185] sm:$0x1]
    %v561 = vlaneseq
    %v562 = vshrl.u32 %v561, 7
    %v563 = vsub.s32 0, %v562
    %v564 = vrot.slane %v560, %v563
    %v565 = vmul.f32 %v564, %v546
    %v566 = vmul.f32 %v564, %v549
    %v567 = vmul.f32 %v564, %v552
    %v568 = vmul.f32 %v564, %v555
    %v569 = vmul.f32 %v564, %v559
    %v570 = vadd.f32 %v538, %v565
    %v571 = vadd.f32 %v539, %v566
    %v572 = vadd.f32 %v540, %v567
    %v573 = vadd.f32 %v541, %v568
    %v574 = vadd.f32 %v542, %v569
    %vm575 = vcmask 917248
    %v576 = vsel %vm575, %v334, -inf
    %577 = vmax.xlane.f32.xlu0 %v576
    %v578 = vpop.xlane.xlu0 %577
    %v579 = vsel %vm575, %v340, -inf
    %580 = vmax.xlane.f32.xlu0 %v579
    %v581 = vpop.xlane.xlu0 %580
    %v582 = vsel %vm575, %v346, -inf
    %583 = vmax.xlane.f32.xlu0 %v582
    %v584 = vpop.xlane.xlu0 %583
    %v585 = vsel %vm575, %v352, -inf
    %586 = vmax.xlane.f32.xlu0 %v585
    %v587 = vpop.xlane.xlu0 %586
    %vm588 = vcmask 911104
    %v589 = vsel %vm588, %v358, -inf
    %590 = vmax.xlane.f32.xlu0 %v589
    %v591 = vpop.xlane.xlu0 %590
    %v592 = vld [vmem:[%s2 + $0x186] sm:$0x1]
    %v593 = vlaneseq
    %v594 = vshrl.u32 %v593, 7
    %v595 = vsub.s32 0, %v594
    %v596 = vrot.slane %v592, %v595
    %v597 = vmul.f32 %v596, %v578
    %v598 = vmul.f32 %v596, %v581
    %v599 = vmul.f32 %v596, %v584
    %v600 = vmul.f32 %v596, %v587
    %v601 = vmul.f32 %v596, %v591
    %v602 = vadd.f32 %v570, %v597
    %v603 = vadd.f32 %v571, %v598
    %v604 = vadd.f32 %v572, %v599
    %v605 = vadd.f32 %v573, %v600
    %v606 = vadd.f32 %v574, %v601
    %vm607 = vcmask 1048448
    %v608 = vsel %vm607, %v334, -inf
    %609 = vmax.xlane.f32.xlu0 %v608
    %v610 = vpop.xlane.xlu0 %609
    %v611 = vsel %vm607, %v340, -inf
    %612 = vmax.xlane.f32.xlu0 %v611
    %v613 = vpop.xlane.xlu0 %612
    %v614 = vsel %vm607, %v346, -inf
    %615 = vmax.xlane.f32.xlu0 %v614
    %v616 = vpop.xlane.xlu0 %615
    %v617 = vsel %vm607, %v352, -inf
    %618 = vmax.xlane.f32.xlu0 %v617
    %v619 = vpop.xlane.xlu0 %618
    %vm620 = vcmask 1042304
    %v621 = vsel %vm620, %v358, -inf
    %622 = vmax.xlane.f32.xlu0 %v621
    %v623 = vpop.xlane.xlu0 %622
    %v624 = vld [vmem:[%s2 + $0x187] sm:$0x1]
    %v625 = vlaneseq
    %v626 = vshrl.u32 %v625, 7
    %v627 = vsub.s32 0, %v626
    %v628 = vrot.slane %v624, %v627
    %v629 = vmul.f32 %v628, %v610
    %v630 = vmul.f32 %v628, %v613
    %v631 = vmul.f32 %v628, %v616
    %v632 = vmul.f32 %v628, %v619
    %v633 = vmul.f32 %v628, %v623
    %v634 = vadd.f32 %v602, %v629
    %v635 = vadd.f32 %v603, %v630
    %v636 = vadd.f32 %v604, %v631
    %v637 = vadd.f32 %v605, %v632
    %v638 = vadd.f32 %v606, %v633
    %v639 = vsub.f32 %v334, %v336
    %v640 = vsub.f32 %v340, %v342
    %v641 = vsub.f32 %v346, %v348
    %v642 = vsub.f32 %v352, %v354
    %v643 = vsub.f32 %v358, %v360
    %649 = vrot.lane.b32.xlu0 %v634, 64
    %v650 = vpop.permute.xlu0 %649
    %651 = vrot.lane.b32.xlu0 %v635, 64
    %v652 = vpop.permute.xlu0 %651
    %653 = vrot.lane.b32.xlu0 %v636, 64
    %v654 = vpop.permute.xlu0 %653
    %655 = vrot.lane.b32.xlu0 %v637, 64
    %v656 = vpop.permute.xlu0 %655
    %657 = vrot.lane.b32.xlu0 %v638, 64
    %v658 = vpop.permute.xlu0 %657
    %v664 = vsub.f32 %v639, %v650
    %v665 = vsub.f32 %v640, %v652
    %v666 = vsub.f32 %v641, %v654
    %v667 = vsub.f32 %v642, %v656
    %v668 = vsub.f32 %v643, %v658
    %v669 = vmul.f32 %v664, 1.442695
    %v670 = vpow.pop %v669
    %v671 = vmul.f32 %v665, 1.442695
    %v672 = vpow.pop %v671
    %v673 = vmul.f32 %v666, 1.442695
    %v674 = vpow.pop %v673
    %v675 = vmul.f32 %v667, 1.442695
    %v676 = vpow.pop %v675
    %v677 = vmul.f32 %v668, 1.442695
    %v678 = vpow.pop %v677
    %v679 = vadd.f32 %v670, 1e-06
    %v680 = vadd.f32 %v672, 1e-06
    %v681 = vadd.f32 %v674, 1e-06
    %v682 = vadd.f32 %v676, 1e-06
    %v683 = vadd.f32 %v678, 1e-06
    %v684 = vmul.f32 %v679, 0.5
    %v685 = vmul.f32 %v680, 0.5
    %v686 = vmul.f32 %v681, 0.5
    %v687 = vmul.f32 %v682, 0.5
    %v688 = vmul.f32 %v683, 0.5
    %v689 = vld [vmem:[%s2 + $0x78] sm:$0xff]
    %v690 = vld [vmem:[%s2 + $0x80] sm:$0xff]
    %v691 = vld [vmem:[%s2 + $0x88] sm:$0xff]
    %v692 = vld [vmem:[%s2 + $0x90] sm:$0xff]
    %v693 = vld [vmem:[%s2 + $0x98] sm:$0x3]
    %v694 = vld [vmem:[%s2 + $0x120] sm:$0xff]
    %v695 = vld [vmem:[%s2 + $0x128] sm:$0xff]
    %v696 = vld [vmem:[%s2 + $0x130] sm:$0xff]
    %v697 = vld [vmem:[%s2 + $0x138] sm:$0xff]
    %v698 = vld [vmem:[%s2 + $0x140] sm:$0xff]
    %v699 = vld [vmem:[%s2 + $0x148] sm:$0xff]
    %v700 = vld [vmem:[%s2 + $0x150] sm:$0xff]
    %v701 = vld [vmem:[%s2 + $0x158] sm:$0xff]
    %v703 = vsel %vm452, %v506, 0
    %v706 = vsel %vm452, %v507, 0
    %v709 = vsel %vm452, %v508, 0
    %v712 = vsel %vm452, %v509, 0
    %v715 = vsel %vm452, %v510, 0
    %717 = vmatprep.subr.mxu0 0.0
    %718 = vmatpush1.msra.mxu0 %v694
    %719 = vmatprep.subr.mxu0 0.0
    %720 = vmatpush1.msra.mxu0 %v695
    %721 = vmatprep.subr.mxu0 0.0
    %722 = vmatpush1.msra.mxu0 %v696
    %723 = vmatprep.subr.mxu0 0.0
    %724 = vmatpush1.msra.mxu0 %v697
    %725 = vmatprep.subr.mxu0 0.0
    %726 = vmatpush1.msra.mxu0 %v698
    %727 = vmatprep.subr.mxu0 0.0
    %728 = vmatpush1.msra.mxu0 %v699
    %729 = vmatprep.subr.mxu0 0.0
    %730 = vmatpush1.msra.mxu0 %v700
    %731 = vmatprep.subr.mxu0 0.0
    %732 = vmatpush1.msra.mxu0 %v701
    %733 = vmatprep.subr.mxu0 0.0
    %734 = vmatpush1.msra.mxu0 0.0
    %735 = vmatprep.subr.mxu0 0.0
    %736 = vmatpush1.msra.mxu0 0.0
    %737 = vmatprep.subr.mxu0 0.0
    %738 = vmatpush1.msra.mxu0 0.0
    %739 = vmatprep.subr.mxu0 0.0
    %740 = vmatpush1.msra.mxu0 0.0
    %741 = vmatprep.subr.mxu0 0.0
    %742 = vmatpush1.msra.mxu0 0.0
    %743 = vmatprep.subr.mxu0 0.0
    %744 = vmatpush1.msra.mxu0 0.0
    %745 = vmatprep.subr.mxu0 0.0
    %746 = vmatpush1.msra.mxu0 0.0
    %747 = vmatprep.subr.mxu0 0.0
    %748 = vmatpush1.msra.mxu0 0.0
    %749 = vmatprep.subr.mxu0 0.0
    %750 = vmatpush1.msra.mxu0 0.0
    %751 = vmatprep.subr.mxu0 0.0
    %752 = vmatpush1.msra.mxu0 0.0
    %753 = vmatprep.subr.mxu0 0.0
    %754 = vmatpush1.msra.mxu0 0.0
    %755 = vmatprep.subr.mxu0 0.0
    %756 = vmatpush1.msra.mxu0 0.0
    %757 = vmatprep.subr.mxu0 0.0
    %758 = vmatpush1.msra.mxu0 0.0
    %759 = vmatprep.subr.mxu0 0.0
    %760 = vmatpush1.msra.mxu0 0.0
    %761 = vmatprep.subr.mxu0 0.0
    %762 = vmatpush1.msra.mxu0 0.0
    %763 = vmatprep.subr.mxu0 0.0
    %764 = vmatpush1.msra.mxu0 0.0
    %765 = vmatprep.subr.mxu0 0.0
    %766 = vmatpush1.msra.mxu0 0.0
    %767 = vmatprep.subr.mxu0 0.0
    %768 = vmatpush1.msra.mxu0 0.0
    %769 = vmatprep.subr.mxu0 0.0
    %770 = vmatpush1.msra.mxu0 0.0
    %771 = vmatprep.subr.mxu0 0.0
    %772 = vmatpush1.msra.mxu0 0.0
    %773 = vmatprep.subr.mxu0 0.0
    %774 = vmatpush1.msra.mxu0 0.0
    %775 = vmatprep.subr.mxu0 0.0
    %776 = vmatpush1.msra.mxu0 0.0
    %777 = vmatprep.subr.mxu0 0.0
    %778 = vmatpush1.msra.mxu0 0.0
    %779 = vmatprep.subr.mxu0 0.0
    %780 = vmatpush1.msra.mxu0 0.0
    %781 = vmatprep.mubr.f32.mxu0 0.0
    %782 = vmatmul.mubr.f32.gmra.mrb[0].mxu0 %v703
    %v783 = vpop.f32.mrb[0].mxu0
    %v784 = vadd.f32 0.0, %v783
    %v785 = vpop.f32.mrb[0].mxu0
    %786 = vmatprep.mubr.f32.mxu0 0.0
    %787 = vmatmul.mubr.f32.gmra.mrb[0].mxu0 %v706
    %v788 = vpop.f32.mrb[0].mxu0
    %v789 = vadd.f32 0.0, %v788
    %v790 = vpop.f32.mrb[0].mxu0
    %791 = vmatprep.mubr.f32.mxu0 0.0
    %792 = vmatmul.mubr.f32.gmra.mrb[0].mxu0 %v709
    %v793 = vpop.f32.mrb[0].mxu0
    %v794 = vadd.f32 0.0, %v793
    %v795 = vpop.f32.mrb[0].mxu0
    %796 = vmatprep.mubr.f32.mxu0 0.0
    %797 = vmatmul.mubr.f32.gmra.mrb[0].mxu0 %v712
    %v798 = vpop.f32.mrb[0].mxu0
    %v799 = vadd.f32 0.0, %v798
    %v800 = vpop.f32.mrb[0].mxu0
    %801 = vmatprep.mubr.f32.mxu0 0.0
    %802 = vmatmul.mubr.f32.gmra.mrb[0].mxu0 %v715
    %v803 = vpop.f32.mrb[0].mxu0
    %v804 = vadd.f32 0.0, %v803
    %v805 = vpop.f32.mrb[0].mxu0
    %806 = vdwg.mxu0
    %v807 = vmul.f32 %v784, %v689
    %v808 = vmul.f32 %v789, %v690
    %v809 = vmul.f32 %v794, %v691
    %v810 = vmul.f32 %v799, %v692
    %v811 = vmul.f32 %v804, %v693
    %817 = vrot.lane.b32.xlu0 %v684, 64
    %v818 = vpop.permute.xlu0 %817
    %819 = vrot.lane.b32.xlu0 %v685, 64
    %v820 = vpop.permute.xlu0 %819
    %821 = vrot.lane.b32.xlu0 %v686, 64
    %v822 = vpop.permute.xlu0 %821
    %823 = vrot.lane.b32.xlu0 %v687, 64
    %v824 = vpop.permute.xlu0 %823
    %825 = vrot.lane.b32.xlu0 %v688, 64
    %v826 = vpop.permute.xlu0 %825
    %v827 = vsel %vm452, %v818, 0
    %v829 = vsel %vm452, %v820, 0
    %v831 = vsel %vm452, %v822, 0
    %v833 = vsel %vm452, %v824, 0
    %v835 = vsel %vm452, %v826, 0
    %837 = vmatprep.subr.mxu0 0.0
    %838 = vmatpush1.msra.mxu0 %v694
    %839 = vmatprep.subr.mxu0 0.0
    %840 = vmatpush1.msra.mxu0 %v695
    %841 = vmatprep.subr.mxu0 0.0
    %842 = vmatpush1.msra.mxu0 %v696
    %843 = vmatprep.subr.mxu0 0.0
    %844 = vmatpush1.msra.mxu0 %v697
    %845 = vmatprep.subr.mxu0 0.0
    %846 = vmatpush1.msra.mxu0 %v698
    %847 = vmatprep.subr.mxu0 0.0
    %848 = vmatpush1.msra.mxu0 %v699
    %849 = vmatprep.subr.mxu0 0.0
    %850 = vmatpush1.msra.mxu0 %v700
    %851 = vmatprep.subr.mxu0 0.0
    %852 = vmatpush1.msra.mxu0 %v701
    %853 = vmatprep.subr.mxu0 0.0
    %854 = vmatpush1.msra.mxu0 0.0
    %855 = vmatprep.subr.mxu0 0.0
    %856 = vmatpush1.msra.mxu0 0.0
    %857 = vmatprep.subr.mxu0 0.0
    %858 = vmatpush1.msra.mxu0 0.0
    %859 = vmatprep.subr.mxu0 0.0
    %860 = vmatpush1.msra.mxu0 0.0
    %861 = vmatprep.subr.mxu0 0.0
    %862 = vmatpush1.msra.mxu0 0.0
    %863 = vmatprep.subr.mxu0 0.0
    %864 = vmatpush1.msra.mxu0 0.0
    %865 = vmatprep.subr.mxu0 0.0
    %866 = vmatpush1.msra.mxu0 0.0
    %867 = vmatprep.subr.mxu0 0.0
    %868 = vmatpush1.msra.mxu0 0.0
    %869 = vmatprep.subr.mxu0 0.0
    %870 = vmatpush1.msra.mxu0 0.0
    %871 = vmatprep.subr.mxu0 0.0
    %872 = vmatpush1.msra.mxu0 0.0
    %873 = vmatprep.subr.mxu0 0.0
    %874 = vmatpush1.msra.mxu0 0.0
    %875 = vmatprep.subr.mxu0 0.0
    %876 = vmatpush1.msra.mxu0 0.0
    %877 = vmatprep.subr.mxu0 0.0
    %878 = vmatpush1.msra.mxu0 0.0
    %879 = vmatprep.subr.mxu0 0.0
    %880 = vmatpush1.msra.mxu0 0.0
    %881 = vmatprep.subr.mxu0 0.0
    %882 = vmatpush1.msra.mxu0 0.0
    %883 = vmatprep.subr.mxu0 0.0
    %884 = vmatpush1.msra.mxu0 0.0
    %885 = vmatprep.subr.mxu0 0.0
    %886 = vmatpush1.msra.mxu0 0.0
    %887 = vmatprep.subr.mxu0 0.0
    %888 = vmatpush1.msra.mxu0 0.0
    %889 = vmatprep.subr.mxu0 0.0
    %890 = vmatpush1.msra.mxu0 0.0
    %891 = vmatprep.subr.mxu0 0.0
    %892 = vmatpush1.msra.mxu0 0.0
    %893 = vmatprep.subr.mxu0 0.0
    %894 = vmatpush1.msra.mxu0 0.0
    %895 = vmatprep.subr.mxu0 0.0
    %896 = vmatpush1.msra.mxu0 0.0
    %897 = vmatprep.subr.mxu0 0.0
    %898 = vmatpush1.msra.mxu0 0.0
    %899 = vmatprep.subr.mxu0 0.0
    %900 = vmatpush1.msra.mxu0 0.0
    %901 = vmatprep.mubr.f32.mxu0 0.0
    %902 = vmatmul.mubr.f32.gmra.mrb[0].mxu0 %v827
    %v903 = vpop.f32.mrb[0].mxu0
    %v904 = vadd.f32 0.0, %v903
    %v905 = vpop.f32.mrb[0].mxu0
    %906 = vmatprep.mubr.f32.mxu0 0.0
    %907 = vmatmul.mubr.f32.gmra.mrb[0].mxu0 %v829
    %v908 = vpop.f32.mrb[0].mxu0
    %v909 = vadd.f32 0.0, %v908
    %v910 = vpop.f32.mrb[0].mxu0
    %911 = vmatprep.mubr.f32.mxu0 0.0
    %912 = vmatmul.mubr.f32.gmra.mrb[0].mxu0 %v831
    %v913 = vpop.f32.mrb[0].mxu0
    %v914 = vadd.f32 0.0, %v913
    %v915 = vpop.f32.mrb[0].mxu0
    %916 = vmatprep.mubr.f32.mxu0 0.0
    %917 = vmatmul.mubr.f32.gmra.mrb[0].mxu0 %v833
    %v918 = vpop.f32.mrb[0].mxu0
    %v919 = vadd.f32 0.0, %v918
    %v920 = vpop.f32.mrb[0].mxu0
    %921 = vmatprep.mubr.f32.mxu0 0.0
    %922 = vmatmul.mubr.f32.gmra.mrb[0].mxu0 %v835
    %v923 = vpop.f32.mrb[0].mxu0
    %v924 = vadd.f32 0.0, %v923
    %v925 = vpop.f32.mrb[0].mxu0
    %926 = vdwg.mxu0
    %v927 = vmul.f32 %v904, %v689
    %v928 = vmul.f32 %v909, %v690
    %v929 = vmul.f32 %v914, %v691
    %v930 = vmul.f32 %v919, %v692
    %v931 = vmul.f32 %v924, %v693
    %932 = vxpose.xlu0.b32.start [1/16] %v807, 128
    %933 = vxpose.xlu0.b32.cont [2/16] %v808, 128
    %934 = vxpose.xlu0.b32.cont [3/16] %v809, 128
    %935 = vxpose.xlu0.b32.cont [4/16] %v810, 128
    %936 = vxpose.xlu0.b32.cont [5/16] %v811, 128
    %937 = vxpose.xlu0.b32.cont [6/16] 0.0, 128
    %938 = vxpose.xlu0.b32.cont [7/16] 0.0, 128
    %939 = vxpose.xlu0.b32.cont [8/16] 0.0, 128
    %940 = vxpose.xlu0.b32.cont [9/16] 0.0, 128
    %941 = vxpose.xlu0.b32.cont [10/16] 0.0, 128
    %942 = vxpose.xlu0.b32.cont [11/16] 0.0, 128
    %943 = vxpose.xlu0.b32.cont [12/16] 0.0, 128
    %944 = vxpose.xlu0.b32.cont [13/16] 0.0, 128
    %945 = vxpose.xlu0.b32.cont [14/16] 0.0, 128
    %946 = vxpose.xlu0.b32.cont [15/16] 0.0, 128
    %947 = vxpose.xlu0.b32.end [16/16] 0.0, 128
    %v948 = vpop.trf.xlu0
    %v949 = vpop.trf.xlu0
    %v950 = vpop.trf.xlu0
    %v951 = vpop.trf.xlu0
    %v952 = vpop.trf.xlu0
    %v953 = vpop.trf.xlu0
    %v954 = vpop.trf.xlu0
    %v955 = vpop.trf.xlu0
    %v956 = vpop.trf.xlu0
    %v957 = vpop.trf.xlu0
    %v958 = vpop.trf.xlu0
    %v959 = vpop.trf.xlu0
    %v960 = vpop.trf.xlu0
    %v961 = vpop.trf.xlu0
    %v962 = vpop.trf.xlu0
    %v963 = vpop.trf.xlu0
    %vm964 = vcmask 277504
    %v966 = vsel %vm964, %v948, 0
    %v969 = vsel %vm964, %v949, 0
    %v972 = vsel %vm964, %v950, 0
    %v975 = vsel %vm964, %v951, 0
    %v978 = vsel %vm964, %v952, 0
    %v981 = vsel %vm964, %v953, 0
    %v984 = vsel %vm964, %v954, 0
    %v987 = vsel %vm964, %v955, 0
    %v990 = vsel %vm964, %v956, 0
    %v993 = vsel %vm964, %v957, 0
    %v996 = vsel %vm964, %v958, 0
    %v999 = vsel %vm964, %v959, 0
    %v1002 = vsel %vm964, %v960, 0
    %v1005 = vsel %vm964, %v961, 0
    %v1008 = vsel %vm964, %v962, 0
    %v1011 = vsel %vm964, %v963, 0
    %v1014 = vsel %vm469, %v358, 0
    %1016 = vmatprep.subr.mxu0 0.0
    %1017 = vmatpush1.msra.mxu0 %v334
    %1018 = vmatprep.subr.mxu0 0.0
    %1019 = vmatpush1.msra.mxu0 %v340
    %1020 = vmatprep.subr.mxu0 0.0
    %1021 = vmatpush1.msra.mxu0 %v346
    %1022 = vmatprep.subr.mxu0 0.0
    %1023 = vmatpush1.msra.mxu0 %v352
    %1024 = vmatprep.subr.mxu0 0.0
    %1025 = vmatpush1.msra.mxu0 %v1014
    %1026 = vmatprep.subr.mxu0 0.0
    %1027 = vmatpush1.msra.mxu0 0.0
    %1028 = vmatprep.subr.mxu0 0.0
    %1029 = vmatpush1.msra.mxu0 0.0
    %1030 = vmatprep.subr.mxu0 0.0
    %1031 = vmatpush1.msra.mxu0 0.0
    %1032 = vmatprep.subr.mxu0 0.0
    %1033 = vmatpush1.msra.mxu0 0.0
    %1034 = vmatprep.subr.mxu0 0.0
    %1035 = vmatpush1.msra.mxu0 0.0
    %1036 = vmatprep.subr.mxu0 0.0
    %1037 = vmatpush1.msra.mxu0 0.0
    %1038 = vmatprep.subr.mxu0 0.0
    %1039 = vmatpush1.msra.mxu0 0.0
    %1040 = vmatprep.subr.mxu0 0.0
    %1041 = vmatpush1.msra.mxu0 0.0
    %1042 = vmatprep.subr.mxu0 0.0
    %1043 = vmatpush1.msra.mxu0 0.0
    %1044 = vmatprep.subr.mxu0 0.0
    %1045 = vmatpush1.msra.mxu0 0.0
    %1046 = vmatprep.subr.mxu0 0.0
    %1047 = vmatpush1.msra.mxu0 0.0
    %1048 = vmatprep.subr.mxu0 0.0
    %1049 = vmatpush1.msra.mxu0 0.0
    %1050 = vmatprep.subr.mxu0 0.0
    %1051 = vmatpush1.msra.mxu0 0.0
    %1052 = vmatprep.subr.mxu0 0.0
    %1053 = vmatpush1.msra.mxu0 0.0
    %1054 = vmatprep.subr.mxu0 0.0
    %1055 = vmatpush1.msra.mxu0 0.0
    %1056 = vmatprep.subr.mxu0 0.0
    %1057 = vmatpush1.msra.mxu0 0.0
    %1058 = vmatprep.subr.mxu0 0.0
    %1059 = vmatpush1.msra.mxu0 0.0
    %1060 = vmatprep.subr.mxu0 0.0
    %1061 = vmatpush1.msra.mxu0 0.0
    %1062 = vmatprep.subr.mxu0 0.0
    %1063 = vmatpush1.msra.mxu0 0.0
    %1064 = vmatprep.subr.mxu0 0.0
    %1065 = vmatpush1.msra.mxu0 0.0
    %1066 = vmatprep.subr.mxu0 0.0
    %1067 = vmatpush1.msra.mxu0 0.0
    %1068 = vmatprep.subr.mxu0 0.0
    %1069 = vmatpush1.msra.mxu0 0.0
    %1070 = vmatprep.subr.mxu0 0.0
    %1071 = vmatpush1.msra.mxu0 0.0
    %1072 = vmatprep.subr.mxu0 0.0
    %1073 = vmatpush1.msra.mxu0 0.0
    %1074 = vmatprep.subr.mxu0 0.0
    %1075 = vmatpush1.msra.mxu0 0.0
    %1076 = vmatprep.subr.mxu0 0.0
    %1077 = vmatpush1.msra.mxu0 0.0
    %1078 = vmatprep.subr.mxu0 0.0
    %1079 = vmatpush1.msra.mxu0 0.0
    %1080 = vmatprep.mubr.f32.mxu0 0.0
    %1081 = vmatmul.mubr.f32.gmra.mrb[0].mxu0 %v966
    %v1082 = vpop.f32.mrb[0].mxu0
    %v1083 = vadd.f32 0.0, %v1082
    %v1084 = vpop.f32.mrb[0].mxu0
    %1085 = vmatprep.mubr.f32.mxu0 0.0
    %1086 = vmatmul.mubr.f32.gmra.mrb[0].mxu0 %v969
    %v1087 = vpop.f32.mrb[0].mxu0
    %v1088 = vadd.f32 0.0, %v1087
    %v1089 = vpop.f32.mrb[0].mxu0
    %1090 = vmatprep.mubr.f32.mxu0 0.0
    %1091 = vmatmul.mubr.f32.gmra.mrb[0].mxu0 %v972
    %v1092 = vpop.f32.mrb[0].mxu0
    %v1093 = vadd.f32 0.0, %v1092
    %v1094 = vpop.f32.mrb[0].mxu0
    %1095 = vmatprep.mubr.f32.mxu0 0.0
    %1096 = vmatmul.mubr.f32.gmra.mrb[0].mxu0 %v975
    %v1097 = vpop.f32.mrb[0].mxu0
    %v1098 = vadd.f32 0.0, %v1097
    %v1099 = vpop.f32.mrb[0].mxu0
    %1100 = vmatprep.mubr.f32.mxu0 0.0
    %1101 = vmatmul.mubr.f32.gmra.mrb[0].mxu0 %v978
    %v1102 = vpop.f32.mrb[0].mxu0
    %v1103 = vadd.f32 0.0, %v1102
    %v1104 = vpop.f32.mrb[0].mxu0
    %1105 = vmatprep.mubr.f32.mxu0 0.0
    %1106 = vmatmul.mubr.f32.gmra.mrb[0].mxu0 %v981
    %v1107 = vpop.f32.mrb[0].mxu0
    %v1108 = vadd.f32 0.0, %v1107
    %v1109 = vpop.f32.mrb[0].mxu0
    %1110 = vmatprep.mubr.f32.mxu0 0.0
    %1111 = vmatmul.mubr.f32.gmra.mrb[0].mxu0 %v984
    %v1112 = vpop.f32.mrb[0].mxu0
    %v1113 = vadd.f32 0.0, %v1112
    %v1114 = vpop.f32.mrb[0].mxu0
    %1115 = vmatprep.mubr.f32.mxu0 0.0
    %1116 = vmatmul.mubr.f32.gmra.mrb[0].mxu0 %v987
    %v1117 = vpop.f32.mrb[0].mxu0
    %v1118 = vadd.f32 0.0, %v1117
    %v1119 = vpop.f32.mrb[0].mxu0
    %1120 = vmatprep.mubr.f32.mxu0 0.0
    %1121 = vmatmul.mubr.f32.gmra.mrb[0].mxu0 %v990
    %v1122 = vpop.f32.mrb[0].mxu0
    %v1123 = vadd.f32 0.0, %v1122
    %v1124 = vpop.f32.mrb[0].mxu0
    %1125 = vmatprep.mubr.f32.mxu0 0.0
    %1126 = vmatmul.mubr.f32.gmra.mrb[0].mxu0 %v993
    %v1127 = vpop.f32.mrb[0].mxu0
    %v1128 = vadd.f32 0.0, %v1127
    %v1129 = vpop.f32.mrb[0].mxu0
    %1130 = vmatprep.mubr.f32.mxu0 0.0
    %1131 = vmatmul.mubr.f32.gmra.mrb[0].mxu0 %v996
    %v1132 = vpop.f32.mrb[0].mxu0
    %v1133 = vadd.f32 0.0, %v1132
    %v1134 = vpop.f32.mrb[0].mxu0
    %1135 = vmatprep.mubr.f32.mxu0 0.0
    %1136 = vmatmul.mubr.f32.gmra.mrb[0].mxu0 %v999
    %v1137 = vpop.f32.mrb[0].mxu0
    %v1138 = vadd.f32 0.0, %v1137
    %v1139 = vpop.f32.mrb[0].mxu0
    %1140 = vmatprep.mubr.f32.mxu0 0.0
    %1141 = vmatmul.mubr.f32.gmra.mrb[0].mxu0 %v1002
    %v1142 = vpop.f32.mrb[0].mxu0
    %v1143 = vadd.f32 0.0, %v1142
    %v1144 = vpop.f32.mrb[0].mxu0
    %1145 = vmatprep.mubr.f32.mxu0 0.0
    %1146 = vmatmul.mubr.f32.gmra.mrb[0].mxu0 %v1005
    %v1147 = vpop.f32.mrb[0].mxu0
    %v1148 = vadd.f32 0.0, %v1147
    %v1149 = vpop.f32.mrb[0].mxu0
    %1150 = vmatprep.mubr.f32.mxu0 0.0
    %1151 = vmatmul.mubr.f32.gmra.mrb[0].mxu0 %v1008
    %v1152 = vpop.f32.mrb[0].mxu0
    %v1153 = vadd.f32 0.0, %v1152
    %v1154 = vpop.f32.mrb[0].mxu0
    %1155 = vmatprep.mubr.f32.mxu0 0.0
    %1156 = vmatmul.mubr.f32.gmra.mrb[0].mxu0 %v1011
    %v1157 = vpop.f32.mrb[0].mxu0
    %v1158 = vadd.f32 0.0, %v1157
    %v1159 = vpop.f32.mrb[0].mxu0
    %1160 = vdwg.mxu0
    %v1161 = vld [vmem:[%s2 + $0x160] sm:$0xff]
    %v1162 = vld [vmem:[%s2 + $0x168] sm:$0xff]
    %v1163 = vld [vmem:[%s2 + $0x170] sm:$0xff]
    %v1164 = vld [vmem:[%s2 + $0x178] sm:$0xff]
    %v1165 = vld [vmem:[%s2 + $0x180] sm:$0x1]
    %vm1166 = vcmask 269312
    %v1168 = vsel %vm1166, %v1083, 0
    %v1171 = vsel %vm1166, %v1088, 0
    %v1174 = vsel %vm1166, %v1093, 0
    %v1177 = vsel %vm1166, %v1098, 0
    %v1180 = vsel %vm1166, %v1103, 0
    %v1183 = vsel %vm1166, %v1108, 0
    %v1186 = vsel %vm1166, %v1113, 0
    %v1189 = vsel %vm1166, %v1118, 0
    %v1192 = vsel %vm1166, %v1123, 0
    %v1195 = vsel %vm1166, %v1128, 0
    %v1198 = vsel %vm1166, %v1133, 0
    %v1201 = vsel %vm1166, %v1138, 0
    %v1204 = vsel %vm1166, %v1143, 0
    %v1207 = vsel %vm1166, %v1148, 0
    %v1210 = vsel %vm1166, %v1153, 0
    %v1213 = vsel %vm1166, %v1158, 0
    %vm1215 = vcmask 1040384
    %v1217 = vsel %vm1215, %v1165, 0
    %1219 = vmatprep.subr.mxu0 0.0
    %1220 = vmatpush1.msra.mxu0 %v1161
    %1221 = vmatprep.subr.mxu0 0.0
    %1222 = vmatpush1.msra.mxu0 %v1162
    %1223 = vmatprep.subr.mxu0 0.0
    %1224 = vmatpush1.msra.mxu0 %v1163
    %1225 = vmatprep.subr.mxu0 0.0
    %1226 = vmatpush1.msra.mxu0 %v1164
    %1227 = vmatprep.subr.mxu0 0.0
    %1228 = vmatpush1.msra.mxu0 %v1217
    %1229 = vmatprep.subr.mxu0 0.0
    %1230 = vmatpush1.msra.mxu0 0.0
    %1231 = vmatprep.subr.mxu0 0.0
    %1232 = vmatpush1.msra.mxu0 0.0
    %1233 = vmatprep.subr.mxu0 0.0
    %1234 = vmatpush1.msra.mxu0 0.0
    %1235 = vmatprep.subr.mxu0 0.0
    %1236 = vmatpush1.msra.mxu0 0.0
    %1237 = vmatprep.subr.mxu0 0.0
    %1238 = vmatpush1.msra.mxu0 0.0
    %1239 = vmatprep.subr.mxu0 0.0
    %1240 = vmatpush1.msra.mxu0 0.0
    %1241 = vmatprep.subr.mxu0 0.0
    %1242 = vmatpush1.msra.mxu0 0.0
    %1243 = vmatprep.subr.mxu0 0.0
    %1244 = vmatpush1.msra.mxu0 0.0
    %1245 = vmatprep.subr.mxu0 0.0
    %1246 = vmatpush1.msra.mxu0 0.0
    %1247 = vmatprep.subr.mxu0 0.0
    %1248 = vmatpush1.msra.mxu0 0.0
    %1249 = vmatprep.subr.mxu0 0.0
    %1250 = vmatpush1.msra.mxu0 0.0
    %1251 = vmatprep.subr.mxu0 0.0
    %1252 = vmatpush1.msra.mxu0 0.0
    %1253 = vmatprep.subr.mxu0 0.0
    %1254 = vmatpush1.msra.mxu0 0.0
    %1255 = vmatprep.subr.mxu0 0.0
    %1256 = vmatpush1.msra.mxu0 0.0
    %1257 = vmatprep.subr.mxu0 0.0
    %1258 = vmatpush1.msra.mxu0 0.0
    %1259 = vmatprep.subr.mxu0 0.0
    %1260 = vmatpush1.msra.mxu0 0.0
    %1261 = vmatprep.subr.mxu0 0.0
    %1262 = vmatpush1.msra.mxu0 0.0
    %1263 = vmatprep.subr.mxu0 0.0
    %1264 = vmatpush1.msra.mxu0 0.0
    %1265 = vmatprep.subr.mxu0 0.0
    %1266 = vmatpush1.msra.mxu0 0.0
    %1267 = vmatprep.subr.mxu0 0.0
    %1268 = vmatpush1.msra.mxu0 0.0
    %1269 = vmatprep.subr.mxu0 0.0
    %1270 = vmatpush1.msra.mxu0 0.0
    %1271 = vmatprep.subr.mxu0 0.0
    %1272 = vmatpush1.msra.mxu0 0.0
    %1273 = vmatprep.subr.mxu0 0.0
    %1274 = vmatpush1.msra.mxu0 0.0
    %1275 = vmatprep.subr.mxu0 0.0
    %1276 = vmatpush1.msra.mxu0 0.0
    %1277 = vmatprep.subr.mxu0 0.0
    %1278 = vmatpush1.msra.mxu0 0.0
    %1279 = vmatprep.subr.mxu0 0.0
    %1280 = vmatpush1.msra.mxu0 0.0
    %1281 = vmatprep.subr.mxu0 0.0
    %1282 = vmatpush1.msra.mxu0 0.0
    %1283 = vmatprep.mubr.f32.mxu0 0.0
    %1284 = vmatmul.mubr.f32.gmra.mrb[0].mxu0 %v1168
    %v1285 = vpop.f32.mrb[0].mxu0
    %v1286 = vadd.f32 0.0, %v1285
    %v1287 = vpop.f32.mrb[0].mxu0
    %1288 = vmatprep.mubr.f32.mxu0 0.0
    %1289 = vmatmul.mubr.f32.gmra.mrb[0].mxu0 %v1171
    %v1290 = vpop.f32.mrb[0].mxu0
    %v1291 = vadd.f32 0.0, %v1290
    %v1292 = vpop.f32.mrb[0].mxu0
    %1293 = vmatprep.mubr.f32.mxu0 0.0
    %1294 = vmatmul.mubr.f32.gmra.mrb[0].mxu0 %v1174
    %v1295 = vpop.f32.mrb[0].mxu0
    %v1296 = vadd.f32 0.0, %v1295
    %v1297 = vpop.f32.mrb[0].mxu0
    %1298 = vmatprep.mubr.f32.mxu0 0.0
    %1299 = vmatmul.mubr.f32.gmra.mrb[0].mxu0 %v1177
    %v1300 = vpop.f32.mrb[0].mxu0
    %v1301 = vadd.f32 0.0, %v1300
    %v1302 = vpop.f32.mrb[0].mxu0
    %1303 = vmatprep.mubr.f32.mxu0 0.0
    %1304 = vmatmul.mubr.f32.gmra.mrb[0].mxu0 %v1180
    %v1305 = vpop.f32.mrb[0].mxu0
    %v1306 = vadd.f32 0.0, %v1305
    %v1307 = vpop.f32.mrb[0].mxu0
    %1308 = vmatprep.mubr.f32.mxu0 0.0
    %1309 = vmatmul.mubr.f32.gmra.mrb[0].mxu0 %v1183
    %v1310 = vpop.f32.mrb[0].mxu0
    %v1311 = vadd.f32 0.0, %v1310
    %v1312 = vpop.f32.mrb[0].mxu0
    %1313 = vmatprep.mubr.f32.mxu0 0.0
    %1314 = vmatmul.mubr.f32.gmra.mrb[0].mxu0 %v1186
    %v1315 = vpop.f32.mrb[0].mxu0
    %v1316 = vadd.f32 0.0, %v1315
    %v1317 = vpop.f32.mrb[0].mxu0
    %1318 = vmatprep.mubr.f32.mxu0 0.0
    %1319 = vmatmul.mubr.f32.gmra.mrb[0].mxu0 %v1189
    %v1320 = vpop.f32.mrb[0].mxu0
    %v1321 = vadd.f32 0.0, %v1320
    %v1322 = vpop.f32.mrb[0].mxu0
    %1323 = vmatprep.mubr.f32.mxu0 0.0
    %1324 = vmatmul.mubr.f32.gmra.mrb[0].mxu0 %v1192
    %v1325 = vpop.f32.mrb[0].mxu0
    %v1326 = vadd.f32 0.0, %v1325
    %v1327 = vpop.f32.mrb[0].mxu0
    %1328 = vmatprep.mubr.f32.mxu0 0.0
    %1329 = vmatmul.mubr.f32.gmra.mrb[0].mxu0 %v1195
    %v1330 = vpop.f32.mrb[0].mxu0
    %v1331 = vadd.f32 0.0, %v1330
    %v1332 = vpop.f32.mrb[0].mxu0
    %1333 = vmatprep.mubr.f32.mxu0 0.0
    %1334 = vmatmul.mubr.f32.gmra.mrb[0].mxu0 %v1198
    %v1335 = vpop.f32.mrb[0].mxu0
    %v1336 = vadd.f32 0.0, %v1335
    %v1337 = vpop.f32.mrb[0].mxu0
    %1338 = vmatprep.mubr.f32.mxu0 0.0
    %1339 = vmatmul.mubr.f32.gmra.mrb[0].mxu0 %v1201
    %v1340 = vpop.f32.mrb[0].mxu0
    %v1341 = vadd.f32 0.0, %v1340
    %v1342 = vpop.f32.mrb[0].mxu0
    %1343 = vmatprep.mubr.f32.mxu0 0.0
    %1344 = vmatmul.mubr.f32.gmra.mrb[0].mxu0 %v1204
    %v1345 = vpop.f32.mrb[0].mxu0
    %v1346 = vadd.f32 0.0, %v1345
    %v1347 = vpop.f32.mrb[0].mxu0
    %1348 = vmatprep.mubr.f32.mxu0 0.0
    %1349 = vmatmul.mubr.f32.gmra.mrb[0].mxu0 %v1207
    %v1350 = vpop.f32.mrb[0].mxu0
    %v1351 = vadd.f32 0.0, %v1350
    %v1352 = vpop.f32.mrb[0].mxu0
    %1353 = vmatprep.mubr.f32.mxu0 0.0
    %1354 = vmatmul.mubr.f32.gmra.mrb[0].mxu0 %v1210
    %v1355 = vpop.f32.mrb[0].mxu0
    %v1356 = vadd.f32 0.0, %v1355
    %v1357 = vpop.f32.mrb[0].mxu0
    %1358 = vmatprep.mubr.f32.mxu0 0.0
    %1359 = vmatmul.mubr.f32.gmra.mrb[0].mxu0 %v1213
    %v1360 = vpop.f32.mrb[0].mxu0
    %v1361 = vadd.f32 0.0, %v1360
    %v1362 = vpop.f32.mrb[0].mxu0
    %1363 = vdwg.mxu0
    %v1364 = vld [vmem:[%s2 + $0xa0] sm:$0xff]
    %v1365 = vld [vmem:[%s2 + $0xa8] sm:$0xff]
    %v1366 = vld [vmem:[%s2 + $0xb0] sm:$0xff]
    %v1367 = vld [vmem:[%s2 + $0xb8] sm:$0xff]
    %v1368 = vld [vmem:[%s2 + $0xc0] sm:$0xff]
    %v1369 = vld [vmem:[%s2 + $0xc8] sm:$0xff]
    %v1370 = vld [vmem:[%s2 + $0xd0] sm:$0xff]
    %v1371 = vld [vmem:[%s2 + $0xd8] sm:$0xff]
    %v1372 = vld [vmem:[%s2 + $0xe0] sm:$0xff]
    %v1373 = vld [vmem:[%s2 + $0xe8] sm:$0xff]
    %v1374 = vld [vmem:[%s2 + $0xf0] sm:$0xff]
    %v1375 = vld [vmem:[%s2 + $0xf8] sm:$0xff]
    %v1376 = vld [vmem:[%s2 + $0x100] sm:$0xff]
    %v1377 = vld [vmem:[%s2 + $0x108] sm:$0xff]
    %v1378 = vld [vmem:[%s2 + $0x110] sm:$0xff]
    %v1379 = vld [vmem:[%s2 + $0x118] sm:$0xff]
    %v1380 = vmul.f32 %v1286, %v1364
    %v1381 = vmul.f32 %v1291, %v1365
    %v1382 = vmul.f32 %v1296, %v1366
    %v1383 = vmul.f32 %v1301, %v1367
    %v1384 = vmul.f32 %v1306, %v1368
    %v1385 = vmul.f32 %v1311, %v1369
    %v1386 = vmul.f32 %v1316, %v1370
    %v1387 = vmul.f32 %v1321, %v1371
    %v1388 = vmul.f32 %v1326, %v1372
    %v1389 = vmul.f32 %v1331, %v1373
    %v1390 = vmul.f32 %v1336, %v1374
    %v1391 = vmul.f32 %v1341, %v1375
    %v1392 = vmul.f32 %v1346, %v1376
    %v1393 = vmul.f32 %v1351, %v1377
    %v1394 = vmul.f32 %v1356, %v1378
    %v1395 = vmul.f32 %v1361, %v1379
    %1396 = vmatprep.subr.mxu0 0.0
    %1397 = vmatpush1.msra.mxu0 %v1380
    %1398 = vmatprep.subr.mxu0 0.0
    %1399 = vmatpush1.msra.mxu0 %v1381
    %1400 = vmatprep.subr.mxu0 0.0
    %1401 = vmatpush1.msra.mxu0 %v1382
    %1402 = vmatprep.subr.mxu0 0.0
    %1403 = vmatpush1.msra.mxu0 %v1383
    %1404 = vmatprep.subr.mxu0 0.0
    %1405 = vmatpush1.msra.mxu0 %v1384
    %1406 = vmatprep.subr.mxu0 0.0
    %1407 = vmatpush1.msra.mxu0 %v1385
    %1408 = vmatprep.subr.mxu0 0.0
    %1409 = vmatpush1.msra.mxu0 %v1386
    %1410 = vmatprep.subr.mxu0 0.0
    %1411 = vmatpush1.msra.mxu0 %v1387
    %1412 = vmatprep.subr.mxu0 0.0
    %1413 = vmatpush1.msra.mxu0 %v1388
    %1414 = vmatprep.subr.mxu0 0.0
    %1415 = vmatpush1.msra.mxu0 %v1389
    %1416 = vmatprep.subr.mxu0 0.0
    %1417 = vmatpush1.msra.mxu0 %v1390
    %1418 = vmatprep.subr.mxu0 0.0
    %1419 = vmatpush1.msra.mxu0 %v1391
    %1420 = vmatprep.subr.mxu0 0.0
    %1421 = vmatpush1.msra.mxu0 %v1392
    %1422 = vmatprep.subr.mxu0 0.0
    %1423 = vmatpush1.msra.mxu0 %v1393
    %1424 = vmatprep.subr.mxu0 0.0
    %1425 = vmatpush1.msra.mxu0 %v1394
    %1426 = vmatprep.subr.mxu0 0.0
    %1427 = vmatpush1.msra.mxu0 %v1395
    %1428 = vmatprep.subr.mxu0 0.0
    %1429 = vmatpush1.msra.mxu0 0.0
    %1430 = vmatprep.subr.mxu0 0.0
    %1431 = vmatpush1.msra.mxu0 0.0
    %1432 = vmatprep.subr.mxu0 0.0
    %1433 = vmatpush1.msra.mxu0 0.0
    %1434 = vmatprep.subr.mxu0 0.0
    %1435 = vmatpush1.msra.mxu0 0.0
    %1436 = vmatprep.subr.mxu0 0.0
    %1437 = vmatpush1.msra.mxu0 0.0
    %1438 = vmatprep.subr.mxu0 0.0
    %1439 = vmatpush1.msra.mxu0 0.0
    %1440 = vmatprep.subr.mxu0 0.0
    %1441 = vmatpush1.msra.mxu0 0.0
    %1442 = vmatprep.subr.mxu0 0.0
    %1443 = vmatpush1.msra.mxu0 0.0
    %1444 = vmatprep.subr.mxu0 0.0
    %1445 = vmatpush1.msra.mxu0 0.0
    %1446 = vmatprep.subr.mxu0 0.0
    %1447 = vmatpush1.msra.mxu0 0.0
    %1448 = vmatprep.subr.mxu0 0.0
    %1449 = vmatpush1.msra.mxu0 0.0
    %1450 = vmatprep.subr.mxu0 0.0
    %1451 = vmatpush1.msra.mxu0 0.0
    %1452 = vmatprep.subr.mxu0 0.0
    %1453 = vmatpush1.msra.mxu0 0.0
    %1454 = vmatprep.subr.mxu0 0.0
    %1455 = vmatpush1.msra.mxu0 0.0
    %1456 = vmatprep.subr.mxu0 0.0
    %1457 = vmatpush1.msra.mxu0 0.0
    %1458 = vmatprep.subr.mxu0 0.0
    %1459 = vmatpush1.msra.mxu0 0.0
    %1460 = vmatprep.mubr.f32.mxu0 0.0
    %1461 = vmatmul.mubr.f32.gmra.mrb[0].mxu0 %v927
    %v1462 = vpop.f32.mrb[0].mxu0
    %v1463 = vadd.f32 0.0, %v1462
    %v1464 = vpop.f32.mrb[0].mxu0
    %1465 = vmatprep.mubr.f32.mxu0 0.0
    %1466 = vmatmul.mubr.f32.gmra.mrb[0].mxu0 %v928
    %v1467 = vpop.f32.mrb[0].mxu0
    %v1468 = vadd.f32 0.0, %v1467
    %v1469 = vpop.f32.mrb[0].mxu0
    %1470 = vmatprep.mubr.f32.mxu0 0.0
    %1471 = vmatmul.mubr.f32.gmra.mrb[0].mxu0 %v929
    %v1472 = vpop.f32.mrb[0].mxu0
    %v1473 = vadd.f32 0.0, %v1472
    %v1474 = vpop.f32.mrb[0].mxu0
    %1475 = vmatprep.mubr.f32.mxu0 0.0
    %1476 = vmatmul.mubr.f32.gmra.mrb[0].mxu0 %v930
    %v1477 = vpop.f32.mrb[0].mxu0
    %v1478 = vadd.f32 0.0, %v1477
    %v1479 = vpop.f32.mrb[0].mxu0
    %1480 = vmatprep.mubr.f32.mxu0 0.0
    %1481 = vmatmul.mubr.f32.gmra.mrb[0].mxu0 %v931
    %v1482 = vpop.f32.mrb[0].mxu0
    %v1483 = vadd.f32 0.0, %v1482
    %v1484 = vpop.f32.mrb[0].mxu0
    %1485 = vdwg.mxu0
    %v1486 = vrcp.pop %v1463
    %v1487 = vrcp.pop %v1468
    %v1488 = vrcp.pop %v1473
    %v1489 = vrcp.pop %v1478
    %v1490 = vrcp.pop %v1483
    %1496 = vrot.lane.b32.xlu0 %v1486, 96
    %v1497 = vpop.permute.xlu0 %1496
    %1498 = vrot.lane.b32.xlu0 %v1487, 96
    %v1499 = vpop.permute.xlu0 %1498
    %1500 = vrot.lane.b32.xlu0 %v1488, 96
    %v1501 = vpop.permute.xlu0 %1500
    %1502 = vrot.lane.b32.xlu0 %v1489, 96
    %v1503 = vpop.permute.xlu0 %1502
    %1504 = vrot.lane.b32.xlu0 %v1490, 96
    %v1505 = vpop.permute.xlu0 %1504
    %v1511 = vmul.f32 %v1463, %v1497
    %v1512 = vmul.f32 %v1468, %v1499
    %v1513 = vmul.f32 %v1473, %v1501
    %v1514 = vmul.f32 %v1478, %v1503
    %v1515 = vmul.f32 %v1483, %v1505
    %v1516 = vld [vmem:[%s1 + $0x78] sm:$0xff]
    %v1517 = vld [vmem:[%s1 + $0x90] sm:$0xff]
    %v1518 = vld [vmem:[%s1 + $0xa8] sm:$0xff]
    %v1519 = vld [vmem:[%s1 + $0xc0] sm:$0xff]
    %v1521 = vsel %vm144, %v1511, 0
    %v1524 = vsel %vm144, %v1512, 0
    %v1527 = vsel %vm144, %v1513, 0
    %v1530 = vsel %vm144, %v1514, 0
    %v1533 = vsel %vm144, %v1515, 0
    %1535 = vmatprep.subr.mxu0 0.0
    %1536 = vmatpush1.msra.mxu0 %v1516
    %1537 = vmatprep.subr.mxu0 0.0
    %1538 = vmatpush1.msra.mxu0 %v1517
    %1539 = vmatprep.subr.mxu0 0.0
    %1540 = vmatpush1.msra.mxu0 %v1518
    %1541 = vmatprep.subr.mxu0 0.0
    %1542 = vmatpush1.msra.mxu0 %v1519
    %1543 = vmatprep.subr.mxu0 0.0
    %1544 = vmatpush1.msra.mxu0 0.0
    %1545 = vmatprep.subr.mxu0 0.0
    %1546 = vmatpush1.msra.mxu0 0.0
    %1547 = vmatprep.subr.mxu0 0.0
    %1548 = vmatpush1.msra.mxu0 0.0
    %1549 = vmatprep.subr.mxu0 0.0
    %1550 = vmatpush1.msra.mxu0 0.0
    %1551 = vmatprep.subr.mxu0 0.0
    %1552 = vmatpush1.msra.mxu0 0.0
    %1553 = vmatprep.subr.mxu0 0.0
    %1554 = vmatpush1.msra.mxu0 0.0
    %1555 = vmatprep.subr.mxu0 0.0
    %1556 = vmatpush1.msra.mxu0 0.0
    %1557 = vmatprep.subr.mxu0 0.0
    %1558 = vmatpush1.msra.mxu0 0.0
    %1559 = vmatprep.subr.mxu0 0.0
    %1560 = vmatpush1.msra.mxu0 0.0
    %1561 = vmatprep.subr.mxu0 0.0
    %1562 = vmatpush1.msra.mxu0 0.0
    %1563 = vmatprep.subr.mxu0 0.0
    %1564 = vmatpush1.msra.mxu0 0.0
    %1565 = vmatprep.subr.mxu0 0.0
    %1566 = vmatpush1.msra.mxu0 0.0
    %1567 = vmatprep.subr.mxu0 0.0
    %1568 = vmatpush1.msra.mxu0 0.0
    %1569 = vmatprep.subr.mxu0 0.0
    %1570 = vmatpush1.msra.mxu0 0.0
    %1571 = vmatprep.subr.mxu0 0.0
    %1572 = vmatpush1.msra.mxu0 0.0
    %1573 = vmatprep.subr.mxu0 0.0
    %1574 = vmatpush1.msra.mxu0 0.0
    %1575 = vmatprep.subr.mxu0 0.0
    %1576 = vmatpush1.msra.mxu0 0.0
    %1577 = vmatprep.subr.mxu0 0.0
    %1578 = vmatpush1.msra.mxu0 0.0
    %1579 = vmatprep.subr.mxu0 0.0
    %1580 = vmatpush1.msra.mxu0 0.0
    %1581 = vmatprep.subr.mxu0 0.0
    %1582 = vmatpush1.msra.mxu0 0.0
    %1583 = vmatprep.subr.mxu0 0.0
    %1584 = vmatpush1.msra.mxu0 0.0
    %1585 = vmatprep.subr.mxu0 0.0
    %1586 = vmatpush1.msra.mxu0 0.0
    %1587 = vmatprep.subr.mxu0 0.0
    %1588 = vmatpush1.msra.mxu0 0.0
    %1589 = vmatprep.subr.mxu0 0.0
    %1590 = vmatpush1.msra.mxu0 0.0
    %1591 = vmatprep.subr.mxu0 0.0
    %1592 = vmatpush1.msra.mxu0 0.0
    %1593 = vmatprep.subr.mxu0 0.0
    %1594 = vmatpush1.msra.mxu0 0.0
    %1595 = vmatprep.subr.mxu0 0.0
    %1596 = vmatpush1.msra.mxu0 0.0
    %1597 = vmatprep.subr.mxu0 0.0
    %1598 = vmatpush1.msra.mxu0 0.0
    %1599 = vmatprep.mubr.f32.mxu0 0.0
    %1600 = vmatmul.mubr.f32.gmra.mrb[0].mxu0 %v1521
    %v1601 = vpop.f32.mrb[0].mxu0
    %v1602 = vadd.f32 0.0, %v1601
    %v1603 = vpop.f32.mrb[0].mxu0
    %1604 = vmatprep.mubr.f32.mxu0 0.0
    %1605 = vmatmul.mubr.f32.gmra.mrb[0].mxu0 %v1524
    %v1606 = vpop.f32.mrb[0].mxu0
    %v1607 = vadd.f32 0.0, %v1606
    %v1608 = vpop.f32.mrb[0].mxu0
    %1609 = vmatprep.mubr.f32.mxu0 0.0
    %1610 = vmatmul.mubr.f32.gmra.mrb[0].mxu0 %v1527
    %v1611 = vpop.f32.mrb[0].mxu0
    %v1612 = vadd.f32 0.0, %v1611
    %v1613 = vpop.f32.mrb[0].mxu0
    %1614 = vmatprep.mubr.f32.mxu0 0.0
    %1615 = vmatmul.mubr.f32.gmra.mrb[0].mxu0 %v1530
    %v1616 = vpop.f32.mrb[0].mxu0
    %v1617 = vadd.f32 0.0, %v1616
    %v1618 = vpop.f32.mrb[0].mxu0
    %1619 = vmatprep.mubr.f32.mxu0 0.0
    %1620 = vmatmul.mubr.f32.gmra.mrb[0].mxu0 %v1533
    %v1621 = vpop.f32.mrb[0].mxu0
    %v1622 = vadd.f32 0.0, %v1621
    %v1623 = vpop.f32.mrb[0].mxu0
    %1624 = vdwg.mxu0
    %v1625 = vadd.f32 %v137, %v1602
    %v1626 = vadd.f32 %v138, %v1607
    %v1627 = vadd.f32 %v139, %v1612
    %v1628 = vadd.f32 %v140, %v1617
    %v1629 = vadd.f32 %v141, %v1622
    %v1630 = vld [vmem:[%s1 + $0x2b8] ss:$0 sm:$0xff]
    %v1631 = vadd.f32 %v1625, %v1630
    %v1632 = vadd.f32 %v1626, %v1630
    %v1633 = vadd.f32 %v1627, %v1630
    %v1634 = vadd.f32 %v1628, %v1630
    %v1635 = vadd.f32 %v1629, %v1630
    %v1636 = vld [vmem:[%s1 + $0x2bd] ss:$0 sm:$0xff]
    %v1637 = vld [vmem:[%s1 + $0x2be] ss:$0 sm:$0xff]
    %v1638 = vsel %vm144, %v1631, 0.0
    %1639 = vadd.xlane.f32.xlu0 %v1638
    %v1640 = vpop.xlane.xlu0 %1639
    %v1641 = vsel %vm144, %v1632, 0.0
    %1642 = vadd.xlane.f32.xlu0 %v1641
    %v1643 = vpop.xlane.xlu0 %1642
    %v1644 = vsel %vm144, %v1633, 0.0
    %1645 = vadd.xlane.f32.xlu0 %v1644
    %v1646 = vpop.xlane.xlu0 %1645
    %v1647 = vsel %vm144, %v1634, 0.0
    %1648 = vadd.xlane.f32.xlu0 %v1647
    %v1649 = vpop.xlane.xlu0 %1648
    %v1650 = vsel %vm157, %v1635, 0.0
    %1651 = vadd.xlane.f32.xlu0 %v1650
    %v1652 = vpop.xlane.xlu0 %1651
    %v1653 = vmul.f32 %v1640, %v161
    %v1654 = vmul.f32 %v1643, %v161
    %v1655 = vmul.f32 %v1646, %v161
    %v1656 = vmul.f32 %v1649, %v161
    %v1657 = vmul.f32 %v1652, %v161
    %v1658 = vsub.f32 %v1631, %v1653
    %v1659 = vsub.f32 %v1632, %v1654
    %v1660 = vsub.f32 %v1633, %v1655
    %v1661 = vsub.f32 %v1634, %v1656
    %v1662 = vsub.f32 %v1635, %v1657
    %v1663 = vmul.f32 %v1658, %v1658
    %v1664 = vmul.f32 %v1659, %v1659
    %v1665 = vmul.f32 %v1660, %v1660
    %v1666 = vmul.f32 %v1661, %v1661
    %v1667 = vmul.f32 %v1662, %v1662
    %v1668 = vsel %vm144, %v1663, 0.0
    %1669 = vadd.xlane.f32.xlu0 %v1668
    %v1670 = vpop.xlane.xlu0 %1669
    %v1671 = vsel %vm144, %v1664, 0.0
    %1672 = vadd.xlane.f32.xlu0 %v1671
    %v1673 = vpop.xlane.xlu0 %1672
    %v1674 = vsel %vm144, %v1665, 0.0
    %1675 = vadd.xlane.f32.xlu0 %v1674
    %v1676 = vpop.xlane.xlu0 %1675
    %v1677 = vsel %vm144, %v1666, 0.0
    %1678 = vadd.xlane.f32.xlu0 %v1677
    %v1679 = vpop.xlane.xlu0 %1678
    %v1680 = vsel %vm157, %v1667, 0.0
    %1681 = vadd.xlane.f32.xlu0 %v1680
    %v1682 = vpop.xlane.xlu0 %1681
    %v1683 = vmul.f32 %v1670, %v161
    %v1684 = vmul.f32 %v1673, %v161
    %v1685 = vmul.f32 %v1676, %v161
    %v1686 = vmul.f32 %v1679, %v161
    %v1687 = vmul.f32 %v1682, %v161
    %v1688 = vadd.f32 %v1683, 1e-06
    %v1689 = vadd.f32 %v1684, 1e-06
    %v1690 = vadd.f32 %v1685, 1e-06
    %v1691 = vadd.f32 %v1686, 1e-06
    %v1692 = vadd.f32 %v1687, 1e-06
    %v1693 = vrsqrt.pop %v1688
    %v1694 = vrsqrt.pop %v1689
    %v1695 = vrsqrt.pop %v1690
    %v1696 = vrsqrt.pop %v1691
    %v1697 = vrsqrt.pop %v1692
    %v1698 = vmul.f32 %v1658, %v1693
    %v1699 = vmul.f32 %v1659, %v1694
    %v1700 = vmul.f32 %v1660, %v1695
    %v1701 = vmul.f32 %v1661, %v1696
    %v1702 = vmul.f32 %v1662, %v1697
    %v1703 = vmul.f32 %v1698, %v1636
    %v1704 = vmul.f32 %v1699, %v1636
    %v1705 = vmul.f32 %v1700, %v1636
    %v1706 = vmul.f32 %v1701, %v1636
    %v1707 = vmul.f32 %v1702, %v1636
    %v1708 = vadd.f32 %v1703, %v1637
    %v1709 = vadd.f32 %v1704, %v1637
    %v1710 = vadd.f32 %v1705, %v1637
    %v1711 = vadd.f32 %v1706, %v1637
    %v1712 = vadd.f32 %v1707, %v1637
    %v1713 = vld [vmem:[%s1 + $0xd8] sm:$0xff]
    %v1714 = vld [vmem:[%s1 + $0xf0] sm:$0xff]
    %v1715 = vld [vmem:[%s1 + $0x108] sm:$0xff]
    %v1716 = vld [vmem:[%s1 + $0x120] sm:$0xff]
    %v1717 = vld [vmem:[%s1 + $0x2b9] ss:$0 sm:$0xff]
    %v1719 = vsel %vm144, %v1708, 0
    %v1722 = vsel %vm144, %v1709, 0
    %v1725 = vsel %vm144, %v1710, 0
    %v1728 = vsel %vm144, %v1711, 0
    %v1731 = vsel %vm144, %v1712, 0
    %1733 = vmatprep.subr.mxu0 0.0
    %1734 = vmatpush1.msra.mxu0 %v1713
    %1735 = vmatprep.subr.mxu0 0.0
    %1736 = vmatpush1.msra.mxu0 %v1714
    %1737 = vmatprep.subr.mxu0 0.0
    %1738 = vmatpush1.msra.mxu0 %v1715
    %1739 = vmatprep.subr.mxu0 0.0
    %1740 = vmatpush1.msra.mxu0 %v1716
    %1741 = vmatprep.subr.mxu0 0.0
    %1742 = vmatpush1.msra.mxu0 0.0
    %1743 = vmatprep.subr.mxu0 0.0
    %1744 = vmatpush1.msra.mxu0 0.0
    %1745 = vmatprep.subr.mxu0 0.0
    %1746 = vmatpush1.msra.mxu0 0.0
    %1747 = vmatprep.subr.mxu0 0.0
    %1748 = vmatpush1.msra.mxu0 0.0
    %1749 = vmatprep.subr.mxu0 0.0
    %1750 = vmatpush1.msra.mxu0 0.0
    %1751 = vmatprep.subr.mxu0 0.0
    %1752 = vmatpush1.msra.mxu0 0.0
    %1753 = vmatprep.subr.mxu0 0.0
    %1754 = vmatpush1.msra.mxu0 0.0
    %1755 = vmatprep.subr.mxu0 0.0
    %1756 = vmatpush1.msra.mxu0 0.0
    %1757 = vmatprep.subr.mxu0 0.0
    %1758 = vmatpush1.msra.mxu0 0.0
    %1759 = vmatprep.subr.mxu0 0.0
    %1760 = vmatpush1.msra.mxu0 0.0
    %1761 = vmatprep.subr.mxu0 0.0
    %1762 = vmatpush1.msra.mxu0 0.0
    %1763 = vmatprep.subr.mxu0 0.0
    %1764 = vmatpush1.msra.mxu0 0.0
    %1765 = vmatprep.subr.mxu0 0.0
    %1766 = vmatpush1.msra.mxu0 0.0
    %1767 = vmatprep.subr.mxu0 0.0
    %1768 = vmatpush1.msra.mxu0 0.0
    %1769 = vmatprep.subr.mxu0 0.0
    %1770 = vmatpush1.msra.mxu0 0.0
    %1771 = vmatprep.subr.mxu0 0.0
    %1772 = vmatpush1.msra.mxu0 0.0
    %1773 = vmatprep.subr.mxu0 0.0
    %1774 = vmatpush1.msra.mxu0 0.0
    %1775 = vmatprep.subr.mxu0 0.0
    %1776 = vmatpush1.msra.mxu0 0.0
    %1777 = vmatprep.subr.mxu0 0.0
    %1778 = vmatpush1.msra.mxu0 0.0
    %1779 = vmatprep.subr.mxu0 0.0
    %1780 = vmatpush1.msra.mxu0 0.0
    %1781 = vmatprep.subr.mxu0 0.0
    %1782 = vmatpush1.msra.mxu0 0.0
    %1783 = vmatprep.subr.mxu0 0.0
    %1784 = vmatpush1.msra.mxu0 0.0
    %1785 = vmatprep.subr.mxu0 0.0
    %1786 = vmatpush1.msra.mxu0 0.0
    %1787 = vmatprep.subr.mxu0 0.0
    %1788 = vmatpush1.msra.mxu0 0.0
    %1789 = vmatprep.subr.mxu0 0.0
    %1790 = vmatpush1.msra.mxu0 0.0
    %1791 = vmatprep.subr.mxu0 0.0
    %1792 = vmatpush1.msra.mxu0 0.0
    %1793 = vmatprep.subr.mxu0 0.0
    %1794 = vmatpush1.msra.mxu0 0.0
    %1795 = vmatprep.subr.mxu0 0.0
    %1796 = vmatpush1.msra.mxu0 0.0
    %1797 = vmatprep.mubr.f32.mxu0 0.0
    %1798 = vmatmul.mubr.f32.gmra.mrb[0].mxu0 %v1719
    %v1799 = vpop.f32.mrb[0].mxu0
    %v1800 = vadd.f32 %v1717, %v1799
    %v1801 = vpop.f32.mrb[0].mxu0
    %1802 = vmatprep.mubr.f32.mxu0 0.0
    %1803 = vmatmul.mubr.f32.gmra.mrb[0].mxu0 %v1722
    %v1804 = vpop.f32.mrb[0].mxu0
    %v1805 = vadd.f32 %v1717, %v1804
    %v1806 = vpop.f32.mrb[0].mxu0
    %1807 = vmatprep.mubr.f32.mxu0 0.0
    %1808 = vmatmul.mubr.f32.gmra.mrb[0].mxu0 %v1725
    %v1809 = vpop.f32.mrb[0].mxu0
    %v1810 = vadd.f32 %v1717, %v1809
    %v1811 = vpop.f32.mrb[0].mxu0
    %1812 = vmatprep.mubr.f32.mxu0 0.0
    %1813 = vmatmul.mubr.f32.gmra.mrb[0].mxu0 %v1728
    %v1814 = vpop.f32.mrb[0].mxu0
    %v1815 = vadd.f32 %v1717, %v1814
    %v1816 = vpop.f32.mrb[0].mxu0
    %1817 = vmatprep.mubr.f32.mxu0 0.0
    %1818 = vmatmul.mubr.f32.gmra.mrb[0].mxu0 %v1731
    %v1819 = vpop.f32.mrb[0].mxu0
    %v1820 = vadd.f32 %v1717, %v1819
    %v1821 = vpop.f32.mrb[0].mxu0
    %1822 = vdwg.mxu0
    %v1823 = vmul.f32 %v1800, 0.5
    %v1824 = vmul.f32 %v1805, 0.5
    %v1825 = vmul.f32 %v1810, 0.5
    %v1826 = vmul.f32 %v1815, 0.5
    %v1827 = vmul.f32 %v1820, 0.5
    %v1828 = vmul.f32 %v1800, 0.70710677
    %v1829 = vmul.f32 %v1805, 0.70710677
    %v1830 = vmul.f32 %v1810, 0.70710677
    %v1831 = vmul.f32 %v1815, 0.70710677
    %v1832 = vmul.f32 %v1820, 0.70710677
    %vm1833 = vcmp.ge.f32.partialorder %v1828, 0.0
    %vm1834 = vcmp.ge.f32.partialorder %v1829, 0.0
    %vm1835 = vcmp.ge.f32.partialorder %v1830, 0.0
    %vm1836 = vcmp.ge.f32.partialorder %v1831, 0.0
    %vm1837 = vcmp.ge.f32.partialorder %v1832, 0.0
    %v1838 = vsel %vm1833, 1.0, -1.0
    %v1839 = vsel %vm1834, 1.0, -1.0
    %v1840 = vsel %vm1835, 1.0, -1.0
    %v1841 = vsel %vm1836, 1.0, -1.0
    %v1842 = vsel %vm1837, 1.0, -1.0
    %v1843 = vmul.f32 %v1828, %v1838
    %v1844 = vmul.f32 %v1829, %v1839
    %v1845 = vmul.f32 %v1830, %v1840
    %v1846 = vmul.f32 %v1831, %v1841
    %v1847 = vmul.f32 %v1832, %v1842
    %v1848 = vmul.f32 %v1843, 0.3275911
    %v1849 = vmul.f32 %v1844, 0.3275911
    %v1850 = vmul.f32 %v1845, 0.3275911
    %v1851 = vmul.f32 %v1846, 0.3275911
    %v1852 = vmul.f32 %v1847, 0.3275911
    %v1853 = vadd.f32 %v1848, 1.0
    %v1854 = vadd.f32 %v1849, 1.0
    %v1855 = vadd.f32 %v1850, 1.0
    %v1856 = vadd.f32 %v1851, 1.0
    %v1857 = vadd.f32 %v1852, 1.0
    %v1858 = vrcp.pop %v1853
    %v1859 = vmul.f32 1.0, %v1858
    %v1860 = vrcp.pop %v1854
    %v1861 = vmul.f32 1.0, %v1860
    %v1862 = vrcp.pop %v1855
    %v1863 = vmul.f32 1.0, %v1862
    %v1864 = vrcp.pop %v1856
    %v1865 = vmul.f32 1.0, %v1864
    %v1866 = vrcp.pop %v1857
    %v1867 = vmul.f32 1.0, %v1866
    %v1868 = vmul.f32 %v1859, 1.0614054
    %v1869 = vmul.f32 %v1861, 1.0614054
    %v1870 = vmul.f32 %v1863, 1.0614054
    %v1871 = vmul.f32 %v1865, 1.0614054
    %v1872 = vmul.f32 %v1867, 1.0614054
    %v1873 = vadd.f32 %v1868, -1.4531521
    %v1874 = vadd.f32 %v1869, -1.4531521
    %v1875 = vadd.f32 %v1870, -1.4531521
    %v1876 = vadd.f32 %v1871, -1.4531521
    %v1877 = vadd.f32 %v1872, -1.4531521
    %v1878 = vmul.f32 %v1873, %v1859
    %v1879 = vmul.f32 %v1874, %v1861
    %v1880 = vmul.f32 %v1875, %v1863
    %v1881 = vmul.f32 %v1876, %v1865
    %v1882 = vmul.f32 %v1877, %v1867
    %v1883 = vadd.f32 %v1878, 1.4214138
    %v1884 = vadd.f32 %v1879, 1.4214138
    %v1885 = vadd.f32 %v1880, 1.4214138
    %v1886 = vadd.f32 %v1881, 1.4214138
    %v1887 = vadd.f32 %v1882, 1.4214138
    %v1888 = vmul.f32 %v1883, %v1859
    %v1889 = vmul.f32 %v1884, %v1861
    %v1890 = vmul.f32 %v1885, %v1863
    %v1891 = vmul.f32 %v1886, %v1865
    %v1892 = vmul.f32 %v1887, %v1867
    %v1893 = vadd.f32 %v1888, -0.28449672
    %v1894 = vadd.f32 %v1889, -0.28449672
    %v1895 = vadd.f32 %v1890, -0.28449672
    %v1896 = vadd.f32 %v1891, -0.28449672
    %v1897 = vadd.f32 %v1892, -0.28449672
    %v1898 = vmul.f32 %v1893, %v1859
    %v1899 = vmul.f32 %v1894, %v1861
    %v1900 = vmul.f32 %v1895, %v1863
    %v1901 = vmul.f32 %v1896, %v1865
    %v1902 = vmul.f32 %v1897, %v1867
    %v1903 = vadd.f32 %v1898, 0.2548296
    %v1904 = vadd.f32 %v1899, 0.2548296
    %v1905 = vadd.f32 %v1900, 0.2548296
    %v1906 = vadd.f32 %v1901, 0.2548296
    %v1907 = vadd.f32 %v1902, 0.2548296
    %v1908 = vmul.f32 %v1903, %v1859
    %v1909 = vmul.f32 %v1904, %v1861
    %v1910 = vmul.f32 %v1905, %v1863
    %v1911 = vmul.f32 %v1906, %v1865
    %v1912 = vmul.f32 %v1907, %v1867
    %v1913 = vsub.f32 0.0, %v1843
    %v1914 = vsub.f32 0.0, %v1844
    %v1915 = vsub.f32 0.0, %v1845
    %v1916 = vsub.f32 0.0, %v1846
    %v1917 = vsub.f32 0.0, %v1847
    %v1918 = vmul.f32 %v1913, %v1843
    %v1919 = vmul.f32 %v1914, %v1844
    %v1920 = vmul.f32 %v1915, %v1845
    %v1921 = vmul.f32 %v1916, %v1846
    %v1922 = vmul.f32 %v1917, %v1847
    %v1923 = vmul.f32 %v1918, 1.442695
    %v1924 = vpow.pop %v1923
    %v1925 = vmul.f32 %v1919, 1.442695
    %v1926 = vpow.pop %v1925
    %v1927 = vmul.f32 %v1920, 1.442695
    %v1928 = vpow.pop %v1927
    %v1929 = vmul.f32 %v1921, 1.442695
    %v1930 = vpow.pop %v1929
    %v1931 = vmul.f32 %v1922, 1.442695
    %v1932 = vpow.pop %v1931
    %v1933 = vmul.f32 %v1908, %v1924
    %v1934 = vmul.f32 %v1909, %v1926
    %v1935 = vmul.f32 %v1910, %v1928
    %v1936 = vmul.f32 %v1911, %v1930
    %v1937 = vmul.f32 %v1912, %v1932
    %v1938 = vsub.f32 1.0, %v1933
    %v1939 = vsub.f32 1.0, %v1934
    %v1940 = vsub.f32 1.0, %v1935
    %v1941 = vsub.f32 1.0, %v1936
    %v1942 = vsub.f32 1.0, %v1937
    %v1943 = vmul.f32 %v1838, %v1938
    %v1944 = vmul.f32 %v1839, %v1939
    %v1945 = vmul.f32 %v1840, %v1940
    %v1946 = vmul.f32 %v1841, %v1941
    %v1947 = vmul.f32 %v1842, %v1942
    %v1948 = vadd.f32 %v1943, 1.0
    %v1949 = vadd.f32 %v1944, 1.0
    %v1950 = vadd.f32 %v1945, 1.0
    %v1951 = vadd.f32 %v1946, 1.0
    %v1952 = vadd.f32 %v1947, 1.0
    %v1953 = vmul.f32 %v1823, %v1948
    %v1954 = vmul.f32 %v1824, %v1949
    %v1955 = vmul.f32 %v1825, %v1950
    %v1956 = vmul.f32 %v1826, %v1951
    %v1957 = vmul.f32 %v1827, %v1952
    %v1958 = vld [vmem:[%s1 + $0x138] sm:$0xff]
    %v1959 = vld [vmem:[%s1 + $0x150] sm:$0xff]
    %v1960 = vld [vmem:[%s1 + $0x168] sm:$0xff]
    %v1961 = vld [vmem:[%s1 + $0x180] sm:$0xff]
    %v1962 = vld [vmem:[%s1 + $0x198] sm:$0xff]
    %v1963 = vld [vmem:[%s1 + $0x1b0] sm:$0xff]
    %v1964 = vld [vmem:[%s1 + $0x1c8] sm:$0xff]
    %v1965 = vld [vmem:[%s1 + $0x1e0] sm:$0xff]
    %v1966 = vld [vmem:[%s1 + $0x1f8] sm:$0xff]
    %v1967 = vld [vmem:[%s1 + $0x210] sm:$0xff]
    %v1968 = vld [vmem:[%s1 + $0x228] sm:$0xff]
    %v1969 = vld [vmem:[%s1 + $0x240] sm:$0xff]
    %v1970 = vld [vmem:[%s1 + $0x258] sm:$0xff]
    %v1971 = vld [vmem:[%s1 + $0x270] sm:$0xff]
    %v1972 = vld [vmem:[%s1 + $0x288] sm:$0xff]
    %v1973 = vld [vmem:[%s1 + $0x2a0] sm:$0xff]
    %1974 = vmatprep.subr.mxu0 0.0
    %1975 = vmatpush1.msra.mxu0 %v1958
    %1976 = vmatprep.subr.mxu0 0.0
    %1977 = vmatpush1.msra.mxu0 %v1959
    %1978 = vmatprep.subr.mxu0 0.0
    %1979 = vmatpush1.msra.mxu0 %v1960
    %1980 = vmatprep.subr.mxu0 0.0
    %1981 = vmatpush1.msra.mxu0 %v1961
    %1982 = vmatprep.subr.mxu0 0.0
    %1983 = vmatpush1.msra.mxu0 %v1962
    %1984 = vmatprep.subr.mxu0 0.0
    %1985 = vmatpush1.msra.mxu0 %v1963
    %1986 = vmatprep.subr.mxu0 0.0
    %1987 = vmatpush1.msra.mxu0 %v1964
    %1988 = vmatprep.subr.mxu0 0.0
    %1989 = vmatpush1.msra.mxu0 %v1965
    %1990 = vmatprep.subr.mxu0 0.0
    %1991 = vmatpush1.msra.mxu0 %v1966
    %1992 = vmatprep.subr.mxu0 0.0
    %1993 = vmatpush1.msra.mxu0 %v1967
    %1994 = vmatprep.subr.mxu0 0.0
    %1995 = vmatpush1.msra.mxu0 %v1968
    %1996 = vmatprep.subr.mxu0 0.0
    %1997 = vmatpush1.msra.mxu0 %v1969
    %1998 = vmatprep.subr.mxu0 0.0
    %1999 = vmatpush1.msra.mxu0 %v1970
    %2000 = vmatprep.subr.mxu0 0.0
    %2001 = vmatpush1.msra.mxu0 %v1971
    %2002 = vmatprep.subr.mxu0 0.0
    %2003 = vmatpush1.msra.mxu0 %v1972
    %2004 = vmatprep.subr.mxu0 0.0
    %2005 = vmatpush1.msra.mxu0 %v1973
    %2006 = vmatprep.subr.mxu0 0.0
    %2007 = vmatpush1.msra.mxu0 0.0
    %2008 = vmatprep.subr.mxu0 0.0
    %2009 = vmatpush1.msra.mxu0 0.0
    %2010 = vmatprep.subr.mxu0 0.0
    %2011 = vmatpush1.msra.mxu0 0.0
    %2012 = vmatprep.subr.mxu0 0.0
    %2013 = vmatpush1.msra.mxu0 0.0
    %2014 = vmatprep.subr.mxu0 0.0
    %2015 = vmatpush1.msra.mxu0 0.0
    %2016 = vmatprep.subr.mxu0 0.0
    %2017 = vmatpush1.msra.mxu0 0.0
    %2018 = vmatprep.subr.mxu0 0.0
    %2019 = vmatpush1.msra.mxu0 0.0
    %2020 = vmatprep.subr.mxu0 0.0
    %2021 = vmatpush1.msra.mxu0 0.0
    %2022 = vmatprep.subr.mxu0 0.0
    %2023 = vmatpush1.msra.mxu0 0.0
    %2024 = vmatprep.subr.mxu0 0.0
    %2025 = vmatpush1.msra.mxu0 0.0
    %2026 = vmatprep.subr.mxu0 0.0
    %2027 = vmatpush1.msra.mxu0 0.0
    %2028 = vmatprep.subr.mxu0 0.0
    %2029 = vmatpush1.msra.mxu0 0.0
    %2030 = vmatprep.subr.mxu0 0.0
    %2031 = vmatpush1.msra.mxu0 0.0
    %2032 = vmatprep.subr.mxu0 0.0
    %2033 = vmatpush1.msra.mxu0 0.0
    %2034 = vmatprep.subr.mxu0 0.0
    %2035 = vmatpush1.msra.mxu0 0.0
    %2036 = vmatprep.subr.mxu0 0.0
    %2037 = vmatpush1.msra.mxu0 0.0
    %2038 = vmatprep.mubr.f32.mxu0 0.0
    %2039 = vmatmul.mubr.f32.gmra.mrb[0].mxu0 %v1953
    %v2040 = vpop.f32.mrb[0].mxu0
    %v2041 = vadd.f32 0.0, %v2040
    %v2042 = vpop.f32.mrb[0].mxu0
    %2043 = vmatprep.mubr.f32.mxu0 0.0
    %2044 = vmatmul.mubr.f32.gmra.mrb[0].mxu0 %v1954
    %v2045 = vpop.f32.mrb[0].mxu0
    %v2046 = vadd.f32 0.0, %v2045
    %v2047 = vpop.f32.mrb[0].mxu0
    %2048 = vmatprep.mubr.f32.mxu0 0.0
    %2049 = vmatmul.mubr.f32.gmra.mrb[0].mxu0 %v1955
    %v2050 = vpop.f32.mrb[0].mxu0
    %v2051 = vadd.f32 0.0, %v2050
    %v2052 = vpop.f32.mrb[0].mxu0
    %2053 = vmatprep.mubr.f32.mxu0 0.0
    %2054 = vmatmul.mubr.f32.gmra.mrb[0].mxu0 %v1956
    %v2055 = vpop.f32.mrb[0].mxu0
    %v2056 = vadd.f32 0.0, %v2055
    %v2057 = vpop.f32.mrb[0].mxu0
    %2058 = vmatprep.mubr.f32.mxu0 0.0
    %2059 = vmatmul.mubr.f32.gmra.mrb[0].mxu0 %v1957
    %v2060 = vpop.f32.mrb[0].mxu0
    %v2061 = vadd.f32 0.0, %v2060
    %v2062 = vpop.f32.mrb[0].mxu0
    %2063 = vdwg.mxu0
    %v2064 = vadd.f32 %v1631, %v2041
    %v2065 = vadd.f32 %v1632, %v2046
    %v2066 = vadd.f32 %v1633, %v2051
    %v2067 = vadd.f32 %v1634, %v2056
    %v2068 = vadd.f32 %v1635, %v2061
    %v2069 = vld [vmem:[%s1 + $0x2ba] ss:$0 sm:$0xff]
    %v2070 = vadd.f32 %v2064, %v2069
    %v2071 = vadd.f32 %v2065, %v2069
    %v2072 = vadd.f32 %v2066, %v2069
    %v2073 = vadd.f32 %v2067, %v2069
    %v2074 = vadd.f32 %v2068, %v2069
    %s2075 = scalar_lea.vmem %s1, 720
    %v2076 = vld [vmem:[%s2075 + $0x2bb] ss:$0 sm:$0xff]
    %v2077 = vld [vmem:[%s2075 + $0x2bc] ss:$0 sm:$0xff]
    %v2078 = vsel %vm144, %v2070, 0.0
    %2079 = vadd.xlane.f32.xlu0 %v2078
    %v2080 = vpop.xlane.xlu0 %2079
    %v2081 = vsel %vm144, %v2071, 0.0
    %2082 = vadd.xlane.f32.xlu0 %v2081
    %v2083 = vpop.xlane.xlu0 %2082
    %v2084 = vsel %vm144, %v2072, 0.0
    %2085 = vadd.xlane.f32.xlu0 %v2084
    %v2086 = vpop.xlane.xlu0 %2085
    %v2087 = vsel %vm144, %v2073, 0.0
    %2088 = vadd.xlane.f32.xlu0 %v2087
    %v2089 = vpop.xlane.xlu0 %2088
    %v2090 = vsel %vm157, %v2074, 0.0
    %2091 = vadd.xlane.f32.xlu0 %v2090
    %v2092 = vpop.xlane.xlu0 %2091
    %v2093 = vmul.f32 %v2080, %v161
    %v2094 = vmul.f32 %v2083, %v161
    %v2095 = vmul.f32 %v2086, %v161
    %v2096 = vmul.f32 %v2089, %v161
    %v2097 = vmul.f32 %v2092, %v161
    %v2098 = vsub.f32 %v2070, %v2093
    %v2099 = vsub.f32 %v2071, %v2094
    %v2100 = vsub.f32 %v2072, %v2095
    %v2101 = vsub.f32 %v2073, %v2096
    %v2102 = vsub.f32 %v2074, %v2097
    %v2103 = vmul.f32 %v2098, %v2098
    %v2104 = vmul.f32 %v2099, %v2099
    %v2105 = vmul.f32 %v2100, %v2100
    %v2106 = vmul.f32 %v2101, %v2101
    %v2107 = vmul.f32 %v2102, %v2102
    %v2108 = vsel %vm144, %v2103, 0.0
    %2109 = vadd.xlane.f32.xlu0 %v2108
    %v2110 = vpop.xlane.xlu0 %2109
    %v2111 = vsel %vm144, %v2104, 0.0
    %2112 = vadd.xlane.f32.xlu0 %v2111
    %v2113 = vpop.xlane.xlu0 %2112
    %v2114 = vsel %vm144, %v2105, 0.0
    %2115 = vadd.xlane.f32.xlu0 %v2114
    %v2116 = vpop.xlane.xlu0 %2115
    %v2117 = vsel %vm144, %v2106, 0.0
    %2118 = vadd.xlane.f32.xlu0 %v2117
    %v2119 = vpop.xlane.xlu0 %2118
    %v2120 = vsel %vm157, %v2107, 0.0
    %2121 = vadd.xlane.f32.xlu0 %v2120
    %v2122 = vpop.xlane.xlu0 %2121
    %v2123 = vmul.f32 %v2110, %v161
    %v2124 = vmul.f32 %v2113, %v161
    %v2125 = vmul.f32 %v2116, %v161
    %v2126 = vmul.f32 %v2119, %v161
    %v2127 = vmul.f32 %v2122, %v161
    %v2128 = vadd.f32 %v2123, 1e-06
    %v2129 = vadd.f32 %v2124, 1e-06
    %v2130 = vadd.f32 %v2125, 1e-06
    %v2131 = vadd.f32 %v2126, 1e-06
    %v2132 = vadd.f32 %v2127, 1e-06
    %v2133 = vrsqrt.pop %v2128
    %v2134 = vrsqrt.pop %v2129
    %v2135 = vrsqrt.pop %v2130
    %v2136 = vrsqrt.pop %v2131
    %v2137 = vrsqrt.pop %v2132
    %v2138 = vmul.f32 %v2098, %v2133
    %v2139 = vmul.f32 %v2099, %v2134
    %v2140 = vmul.f32 %v2100, %v2135
    %v2141 = vmul.f32 %v2101, %v2136
    %v2142 = vmul.f32 %v2102, %v2137
    %v2143 = vmul.f32 %v2138, %v2076
    %v2144 = vmul.f32 %v2139, %v2076
    %v2145 = vmul.f32 %v2140, %v2076
    %v2146 = vmul.f32 %v2141, %v2076
    %v2147 = vmul.f32 %v2142, %v2076
    %v2148 = vadd.f32 %v2143, %v2077
    %v2149 = vadd.f32 %v2144, %v2077
    %v2150 = vadd.f32 %v2145, %v2077
    %v2151 = vadd.f32 %v2146, %v2077
    %v2152 = vadd.f32 %v2147, %v2077
    %v2153 = vld [vmem:[%s2075] sm:$0xff]
    %v2154 = vld [vmem:[%s2075 + $0x8] sm:$0xff]
    %v2155 = vld [vmem:[%s2075 + $0x10] sm:$0xff]
    %v2156 = vld [vmem:[%s2075 + $0x18] sm:$0xff]
    %v2157 = vld [vmem:[%s2075 + $0x20] sm:$0xff]
    %v2158 = vld [vmem:[%s2075 + $0x28] sm:$0xff]
    %v2159 = vld [vmem:[%s2075 + $0x30] sm:$0xff]
    %v2160 = vld [vmem:[%s2075 + $0x38] sm:$0xff]
    %v2161 = vld [vmem:[%s2075 + $0x40] sm:$0xff]
    %v2162 = vld [vmem:[%s2075 + $0x48] sm:$0xff]
    %v2163 = vld [vmem:[%s2075 + $0x50] sm:$0xff]
    %v2164 = vld [vmem:[%s2075 + $0x58] sm:$0xff]
    %s2165 = scalar_lea.vmem %s2075, 96
    %v2166 = vld [vmem:[%s2165] ss:$8 sm:$0x7]
    %v2168 = vlaneseq
    %v2169 = vshrl.u32 %v2168, 7
    %v2170 = vsub.s32 0, %v2169
    %v2171 = vrot.slane %v2166, %v2170
    %v2172 = vlaneseq
    %v2173 = vshrl.u32 %v2172, 7
    %v2174 = vsub.s32 1, %v2173
    %v2175 = vrot.slane %v2166, %v2174
    %v2176 = vlaneseq
    %v2177 = vshrl.u32 %v2176, 7
    %v2178 = vsub.s32 2, %v2177
    %v2179 = vrot.slane %v2166, %v2178
    %v2184 = vsel %vm144, %v2148, 0
    %v2187 = vsel %vm144, %v2149, 0
    %v2190 = vsel %vm144, %v2150, 0
    %v2193 = vsel %vm144, %v2151, 0
    %v2196 = vsel %vm144, %v2152, 0
    %2198 = vmatprep.subr.mxu0 %v2154
    %2199 = vmatpush1.msra.mxu0 %v2153
    %2200 = vmatprep.subr.mxu0 %v2157
    %2201 = vmatpush1.msra.mxu0 %v2156
    %2202 = vmatprep.subr.mxu0 %v2160
    %2203 = vmatpush1.msra.mxu0 %v2159
    %2204 = vmatprep.subr.mxu0 %v2163
    %2205 = vmatpush1.msra.mxu0 %v2162
    %2206 = vmatprep.subr.mxu0 0.0
    %2207 = vmatpush1.msra.mxu0 0.0
    %2208 = vmatprep.subr.mxu0 0.0
    %2209 = vmatpush1.msra.mxu0 0.0
    %2210 = vmatprep.subr.mxu0 0.0
    %2211 = vmatpush1.msra.mxu0 0.0
    %2212 = vmatprep.subr.mxu0 0.0
    %2213 = vmatpush1.msra.mxu0 0.0
    %2214 = vmatprep.subr.mxu0 0.0
    %2215 = vmatpush1.msra.mxu0 0.0
    %2216 = vmatprep.subr.mxu0 0.0
    %2217 = vmatpush1.msra.mxu0 0.0
    %2218 = vmatprep.subr.mxu0 0.0
    %2219 = vmatpush1.msra.mxu0 0.0
    %2220 = vmatprep.subr.mxu0 0.0
    %2221 = vmatpush1.msra.mxu0 0.0
    %2222 = vmatprep.subr.mxu0 0.0
    %2223 = vmatpush1.msra.mxu0 0.0
    %2224 = vmatprep.subr.mxu0 0.0
    %2225 = vmatpush1.msra.mxu0 0.0
    %2226 = vmatprep.subr.mxu0 0.0
    %2227 = vmatpush1.msra.mxu0 0.0
    %2228 = vmatprep.subr.mxu0 0.0
    %2229 = vmatpush1.msra.mxu0 0.0
    %2230 = vmatprep.subr.mxu0 0.0
    %2231 = vmatpush1.msra.mxu0 0.0
    %2232 = vmatprep.subr.mxu0 0.0
    %2233 = vmatpush1.msra.mxu0 0.0
    %2234 = vmatprep.subr.mxu0 0.0
    %2235 = vmatpush1.msra.mxu0 0.0
    %2236 = vmatprep.subr.mxu0 0.0
    %2237 = vmatpush1.msra.mxu0 0.0
    %2238 = vmatprep.subr.mxu0 0.0
    %2239 = vmatpush1.msra.mxu0 0.0
    %2240 = vmatprep.subr.mxu0 0.0
    %2241 = vmatpush1.msra.mxu0 0.0
    %2242 = vmatprep.subr.mxu0 0.0
    %2243 = vmatpush1.msra.mxu0 0.0
    %2244 = vmatprep.subr.mxu0 0.0
    %2245 = vmatpush1.msra.mxu0 0.0
    %2246 = vmatprep.subr.mxu0 0.0
    %2247 = vmatpush1.msra.mxu0 0.0
    %2248 = vmatprep.subr.mxu0 0.0
    %2249 = vmatpush1.msra.mxu0 0.0
    %2250 = vmatprep.subr.mxu0 0.0
    %2251 = vmatpush1.msra.mxu0 0.0
    %2252 = vmatprep.subr.mxu0 0.0
    %2253 = vmatpush1.msra.mxu0 0.0
    %2254 = vmatprep.subr.mxu0 0.0
    %2255 = vmatpush1.msra.mxu0 0.0
    %2256 = vmatprep.subr.mxu0 0.0
    %2257 = vmatpush1.msra.mxu0 0.0
    %2258 = vmatprep.subr.mxu0 0.0
    %2259 = vmatpush1.msra.mxu0 0.0
    %2260 = vmatprep.subr.mxu0 0.0
    %2261 = vmatpush1.msra.mxu0 0.0
    %2262 = vmatprep.mubr.f32.mxu0 0.0
    %2263 = vmatmul.mubr.f32.gmra.mrb[0].mxu0 %v2184
    %v2264 = vpop.f32.mrb[0].mxu0
    %v2265 = vadd.f32 %v2171, %v2264
    %v2266 = vpop.f32.mrb[0].mxu0
    %v2267 = vadd.f32 %v2175, %v2266
    %2268 = vmatprep.mubr.f32.mxu0 0.0
    %2269 = vmatmul.mubr.f32.gmra.mrb[0].mxu0 %v2187
    %v2270 = vpop.f32.mrb[0].mxu0
    %v2271 = vadd.f32 %v2171, %v2270
    %v2272 = vpop.f32.mrb[0].mxu0
    %v2273 = vadd.f32 %v2175, %v2272
    %2274 = vmatprep.mubr.f32.mxu0 0.0
    %2275 = vmatmul.mubr.f32.gmra.mrb[0].mxu0 %v2190
    %v2276 = vpop.f32.mrb[0].mxu0
    %v2277 = vadd.f32 %v2171, %v2276
    %v2278 = vpop.f32.mrb[0].mxu0
    %v2279 = vadd.f32 %v2175, %v2278
    %2280 = vmatprep.mubr.f32.mxu0 0.0
    %2281 = vmatmul.mubr.f32.gmra.mrb[0].mxu0 %v2193
    %v2282 = vpop.f32.mrb[0].mxu0
    %v2283 = vadd.f32 %v2171, %v2282
    %v2284 = vpop.f32.mrb[0].mxu0
    %v2285 = vadd.f32 %v2175, %v2284
    %2286 = vmatprep.mubr.f32.mxu0 0.0
    %2287 = vmatmul.mubr.f32.gmra.mrb[0].mxu0 %v2196
    %v2288 = vpop.f32.mrb[0].mxu0
    %v2289 = vadd.f32 %v2171, %v2288
    %v2290 = vpop.f32.mrb[0].mxu0
    %v2291 = vadd.f32 %v2175, %v2290
    %2292 = vdwg.mxu0
    %2293 = vmatprep.subr.mxu0 0.0
    %2294 = vmatpush1.msra.mxu0 %v2155
    %2295 = vmatprep.subr.mxu0 0.0
    %2296 = vmatpush1.msra.mxu0 %v2158
    %2297 = vmatprep.subr.mxu0 0.0
    %2298 = vmatpush1.msra.mxu0 %v2161
    %2299 = vmatprep.subr.mxu0 0.0
    %2300 = vmatpush1.msra.mxu0 %v2164
    %2301 = vmatprep.subr.mxu0 0.0
    %2302 = vmatpush1.msra.mxu0 0.0
    %2303 = vmatprep.subr.mxu0 0.0
    %2304 = vmatpush1.msra.mxu0 0.0
    %2305 = vmatprep.subr.mxu0 0.0
    %2306 = vmatpush1.msra.mxu0 0.0
    %2307 = vmatprep.subr.mxu0 0.0
    %2308 = vmatpush1.msra.mxu0 0.0
    %2309 = vmatprep.subr.mxu0 0.0
    %2310 = vmatpush1.msra.mxu0 0.0
    %2311 = vmatprep.subr.mxu0 0.0
    %2312 = vmatpush1.msra.mxu0 0.0
    %2313 = vmatprep.subr.mxu0 0.0
    %2314 = vmatpush1.msra.mxu0 0.0
    %2315 = vmatprep.subr.mxu0 0.0
    %2316 = vmatpush1.msra.mxu0 0.0
    %2317 = vmatprep.subr.mxu0 0.0
    %2318 = vmatpush1.msra.mxu0 0.0
    %2319 = vmatprep.subr.mxu0 0.0
    %2320 = vmatpush1.msra.mxu0 0.0
    %2321 = vmatprep.subr.mxu0 0.0
    %2322 = vmatpush1.msra.mxu0 0.0
    %2323 = vmatprep.subr.mxu0 0.0
    %2324 = vmatpush1.msra.mxu0 0.0
    %2325 = vmatprep.subr.mxu0 0.0
    %2326 = vmatpush1.msra.mxu0 0.0
    %2327 = vmatprep.subr.mxu0 0.0
    %2328 = vmatpush1.msra.mxu0 0.0
    %2329 = vmatprep.subr.mxu0 0.0
    %2330 = vmatpush1.msra.mxu0 0.0
    %2331 = vmatprep.subr.mxu0 0.0
    %2332 = vmatpush1.msra.mxu0 0.0
    %2333 = vmatprep.subr.mxu0 0.0
    %2334 = vmatpush1.msra.mxu0 0.0
    %2335 = vmatprep.subr.mxu0 0.0
    %2336 = vmatpush1.msra.mxu0 0.0
    %2337 = vmatprep.subr.mxu0 0.0
    %2338 = vmatpush1.msra.mxu0 0.0
    %2339 = vmatprep.subr.mxu0 0.0
    %2340 = vmatpush1.msra.mxu0 0.0
    %2341 = vmatprep.subr.mxu0 0.0
    %2342 = vmatpush1.msra.mxu0 0.0
    %2343 = vmatprep.subr.mxu0 0.0
    %2344 = vmatpush1.msra.mxu0 0.0
    %2345 = vmatprep.subr.mxu0 0.0
    %2346 = vmatpush1.msra.mxu0 0.0
    %2347 = vmatprep.subr.mxu0 0.0
    %2348 = vmatpush1.msra.mxu0 0.0
    %2349 = vmatprep.subr.mxu0 0.0
    %2350 = vmatpush1.msra.mxu0 0.0
    %2351 = vmatprep.subr.mxu0 0.0
    %2352 = vmatpush1.msra.mxu0 0.0
    %2353 = vmatprep.subr.mxu0 0.0
    %2354 = vmatpush1.msra.mxu0 0.0
    %2355 = vmatprep.subr.mxu0 0.0
    %2356 = vmatpush1.msra.mxu0 0.0
    %2357 = vmatprep.mubr.f32.mxu0 0.0
    %2358 = vmatmul.mubr.f32.gmra.mrb[0].mxu0 %v2184
    %v2359 = vpop.f32.mrb[0].mxu0
    %v2360 = vadd.f32 %v2179, %v2359
    %v2361 = vpop.f32.mrb[0].mxu0
    %2362 = vmatprep.mubr.f32.mxu0 0.0
    %2363 = vmatmul.mubr.f32.gmra.mrb[0].mxu0 %v2187
    %v2364 = vpop.f32.mrb[0].mxu0
    %v2365 = vadd.f32 %v2179, %v2364
    %v2366 = vpop.f32.mrb[0].mxu0
    %2367 = vmatprep.mubr.f32.mxu0 0.0
    %2368 = vmatmul.mubr.f32.gmra.mrb[0].mxu0 %v2190
    %v2369 = vpop.f32.mrb[0].mxu0
    %v2370 = vadd.f32 %v2179, %v2369
    %v2371 = vpop.f32.mrb[0].mxu0
    %2372 = vmatprep.mubr.f32.mxu0 0.0
    %2373 = vmatmul.mubr.f32.gmra.mrb[0].mxu0 %v2193
    %v2374 = vpop.f32.mrb[0].mxu0
    %v2375 = vadd.f32 %v2179, %v2374
    %v2376 = vpop.f32.mrb[0].mxu0
    %2377 = vmatprep.mubr.f32.mxu0 0.0
    %2378 = vmatmul.mubr.f32.gmra.mrb[0].mxu0 %v2196
    %v2379 = vpop.f32.mrb[0].mxu0
    %v2380 = vadd.f32 %v2179, %v2379
    %v2381 = vpop.f32.mrb[0].mxu0
    %2382 = vdwg.mxu0
    %v2383 = vsel %vm452, %v2267, -inf
    %2384 = vmax.xlane.f32.xlu0 %v2383
    %v2385 = vpop.xlane.xlu0 %2384
    %v2386 = vsel %vm452, %v2273, -inf
    %2387 = vmax.xlane.f32.xlu0 %v2386
    %v2388 = vpop.xlane.xlu0 %2387
    %v2389 = vsel %vm452, %v2279, -inf
    %2390 = vmax.xlane.f32.xlu0 %v2389
    %v2391 = vpop.xlane.xlu0 %2390
    %v2392 = vsel %vm452, %v2285, -inf
    %2393 = vmax.xlane.f32.xlu0 %v2392
    %v2394 = vpop.xlane.xlu0 %2393
    %v2395 = vsel %vm465, %v2291, -inf
    %2396 = vmax.xlane.f32.xlu0 %v2395
    %v2397 = vpop.xlane.xlu0 %2396
    %v2398 = vsel %vm469, %v2397, -inf
    %v2399 = vmax.f32 %v2385, %v2398
    %v2400 = vmax.f32 %v2399, %v2388
    %v2401 = vmax.f32 %v2391, %v2394
    %v2402 = vmax.f32 %v2400, %v2401
    %v2403 = vrot.slane %v2402, 4
    %v2404 = vmax.f32 %v2402, %v2403
    %v2405 = vrot.slane %v2404, 2
    %v2406 = vmax.f32 %v2404, %v2405
    %v2407 = vrot.slane %v2406, 1
    %v2408 = vmax.f32 %v2406, %v2407
    %v2409 = vsub.f32 %v2267, %v2360
    %v2410 = vsub.f32 %v2273, %v2365
    %v2411 = vsub.f32 %v2279, %v2370
    %v2412 = vsub.f32 %v2285, %v2375
    %v2413 = vsub.f32 %v2291, %v2380
    %v2414 = vsub.f32 %v2409, %v2408
    %v2415 = vsub.f32 %v2410, %v2408
    %v2416 = vsub.f32 %v2411, %v2408
    %v2417 = vsub.f32 %v2412, %v2408
    %v2418 = vsub.f32 %v2413, %v2408
    %v2419 = vmul.f32 %v2414, 1.442695
    %v2420 = vpow.pop %v2419
    %v2421 = vmul.f32 %v2415, 1.442695
    %v2422 = vpow.pop %v2421
    %v2423 = vmul.f32 %v2416, 1.442695
    %v2424 = vpow.pop %v2423
    %v2425 = vmul.f32 %v2417, 1.442695
    %v2426 = vpow.pop %v2425
    %v2427 = vmul.f32 %v2418, 1.442695
    %v2428 = vpow.pop %v2427
    %v2429 = vadd.f32 %v2420, 1e-06
    %v2430 = vadd.f32 %v2422, 1e-06
    %v2431 = vadd.f32 %v2424, 1e-06
    %v2432 = vadd.f32 %v2426, 1e-06
    %v2433 = vadd.f32 %v2428, 1e-06
    %v2434 = vmul.f32 %v2429, 0.5
    %v2435 = vmul.f32 %v2430, 0.5
    %v2436 = vmul.f32 %v2431, 0.5
    %v2437 = vmul.f32 %v2432, 0.5
    %v2438 = vmul.f32 %v2433, 0.5
    %v2439 = vsel %vm511, %v2265, -inf
    %2440 = vmax.xlane.f32.xlu0 %v2439
    %v2441 = vpop.xlane.xlu0 %2440
    %v2442 = vsel %vm511, %v2271, -inf
    %2443 = vmax.xlane.f32.xlu0 %v2442
    %v2444 = vpop.xlane.xlu0 %2443
    %v2445 = vsel %vm511, %v2277, -inf
    %2446 = vmax.xlane.f32.xlu0 %v2445
    %v2447 = vpop.xlane.xlu0 %2446
    %v2448 = vsel %vm511, %v2283, -inf
    %2449 = vmax.xlane.f32.xlu0 %v2448
    %v2450 = vpop.xlane.xlu0 %2449
    %v2451 = vsel %vm524, %v2289, -inf
    %2452 = vmax.xlane.f32.xlu0 %v2451
    %v2453 = vpop.xlane.xlu0 %2452
    %v2454 = vmul.f32 %v532, %v2441
    %v2455 = vmul.f32 %v532, %v2444
    %v2456 = vmul.f32 %v532, %v2447
    %v2457 = vmul.f32 %v532, %v2450
    %v2458 = vmul.f32 %v532, %v2453
    %v2459 = vadd.f32 %v2454, 0.0
    %v2460 = vadd.f32 %v2455, 0.0
    %v2461 = vadd.f32 %v2456, 0.0
    %v2462 = vadd.f32 %v2457, 0.0
    %v2463 = vadd.f32 %v2458, 0.0
    %v2464 = vsel %vm543, %v2265, -inf
    %2465 = vmax.xlane.f32.xlu0 %v2464
    %v2466 = vpop.xlane.xlu0 %2465
    %v2467 = vsel %vm543, %v2271, -inf
    %2468 = vmax.xlane.f32.xlu0 %v2467
    %v2469 = vpop.xlane.xlu0 %2468
    %v2470 = vsel %vm543, %v2277, -inf
    %2471 = vmax.xlane.f32.xlu0 %v2470
    %v2472 = vpop.xlane.xlu0 %2471
    %v2473 = vsel %vm543, %v2283, -inf
    %2474 = vmax.xlane.f32.xlu0 %v2473
    %v2475 = vpop.xlane.xlu0 %2474
    %v2476 = vsel %vm556, %v2289, -inf
    %2477 = vmax.xlane.f32.xlu0 %v2476
    %v2478 = vpop.xlane.xlu0 %2477
    %v2479 = vmul.f32 %v564, %v2466
    %v2480 = vmul.f32 %v564, %v2469
    %v2481 = vmul.f32 %v564, %v2472
    %v2482 = vmul.f32 %v564, %v2475
    %v2483 = vmul.f32 %v564, %v2478
    %v2484 = vadd.f32 %v2459, %v2479
    %v2485 = vadd.f32 %v2460, %v2480
    %v2486 = vadd.f32 %v2461, %v2481
    %v2487 = vadd.f32 %v2462, %v2482
    %v2488 = vadd.f32 %v2463, %v2483
    %v2489 = vsel %vm575, %v2265, -inf
    %2490 = vmax.xlane.f32.xlu0 %v2489
    %v2491 = vpop.xlane.xlu0 %2490
    %v2492 = vsel %vm575, %v2271, -inf
    %2493 = vmax.xlane.f32.xlu0 %v2492
    %v2494 = vpop.xlane.xlu0 %2493
    %v2495 = vsel %vm575, %v2277, -inf
    %2496 = vmax.xlane.f32.xlu0 %v2495
    %v2497 = vpop.xlane.xlu0 %2496
    %v2498 = vsel %vm575, %v2283, -inf
    %2499 = vmax.xlane.f32.xlu0 %v2498
    %v2500 = vpop.xlane.xlu0 %2499
    %v2501 = vsel %vm588, %v2289, -inf
    %2502 = vmax.xlane.f32.xlu0 %v2501
    %v2503 = vpop.xlane.xlu0 %2502
    %v2504 = vmul.f32 %v596, %v2491
    %v2505 = vmul.f32 %v596, %v2494
    %v2506 = vmul.f32 %v596, %v2497
    %v2507 = vmul.f32 %v596, %v2500
    %v2508 = vmul.f32 %v596, %v2503
    %v2509 = vadd.f32 %v2484, %v2504
    %v2510 = vadd.f32 %v2485, %v2505
    %v2511 = vadd.f32 %v2486, %v2506
    %v2512 = vadd.f32 %v2487, %v2507
    %v2513 = vadd.f32 %v2488, %v2508
    %v2514 = vsel %vm607, %v2265, -inf
    %2515 = vmax.xlane.f32.xlu0 %v2514
    %v2516 = vpop.xlane.xlu0 %2515
    %v2517 = vsel %vm607, %v2271, -inf
    %2518 = vmax.xlane.f32.xlu0 %v2517
    %v2519 = vpop.xlane.xlu0 %2518
    %v2520 = vsel %vm607, %v2277, -inf
    %2521 = vmax.xlane.f32.xlu0 %v2520
    %v2522 = vpop.xlane.xlu0 %2521
    %v2523 = vsel %vm607, %v2283, -inf
    %2524 = vmax.xlane.f32.xlu0 %v2523
    %v2525 = vpop.xlane.xlu0 %2524
    %v2526 = vsel %vm620, %v2289, -inf
    %2527 = vmax.xlane.f32.xlu0 %v2526
    %v2528 = vpop.xlane.xlu0 %2527
    %v2529 = vmul.f32 %v628, %v2516
    %v2530 = vmul.f32 %v628, %v2519
    %v2531 = vmul.f32 %v628, %v2522
    %v2532 = vmul.f32 %v628, %v2525
    %v2533 = vmul.f32 %v628, %v2528
    %v2534 = vadd.f32 %v2509, %v2529
    %v2535 = vadd.f32 %v2510, %v2530
    %v2536 = vadd.f32 %v2511, %v2531
    %v2537 = vadd.f32 %v2512, %v2532
    %v2538 = vadd.f32 %v2513, %v2533
    %v2539 = vsub.f32 %v2265, %v2267
    %v2540 = vsub.f32 %v2271, %v2273
    %v2541 = vsub.f32 %v2277, %v2279
    %v2542 = vsub.f32 %v2283, %v2285
    %v2543 = vsub.f32 %v2289, %v2291
    %2549 = vrot.lane.b32.xlu0 %v2534, 64
    %v2550 = vpop.permute.xlu0 %2549
    %2551 = vrot.lane.b32.xlu0 %v2535, 64
    %v2552 = vpop.permute.xlu0 %2551
    %2553 = vrot.lane.b32.xlu0 %v2536, 64
    %v2554 = vpop.permute.xlu0 %2553
    %2555 = vrot.lane.b32.xlu0 %v2537, 64
    %v2556 = vpop.permute.xlu0 %2555
    %2557 = vrot.lane.b32.xlu0 %v2538, 64
    %v2558 = vpop.permute.xlu0 %2557
    %v2564 = vsub.f32 %v2539, %v2550
    %v2565 = vsub.f32 %v2540, %v2552
    %v2566 = vsub.f32 %v2541, %v2554
    %v2567 = vsub.f32 %v2542, %v2556
    %v2568 = vsub.f32 %v2543, %v2558
    %v2569 = vmul.f32 %v2564, 1.442695
    %v2570 = vpow.pop %v2569
    %v2571 = vmul.f32 %v2565, 1.442695
    %v2572 = vpow.pop %v2571
    %v2573 = vmul.f32 %v2566, 1.442695
    %v2574 = vpow.pop %v2573
    %v2575 = vmul.f32 %v2567, 1.442695
    %v2576 = vpow.pop %v2575
    %v2577 = vmul.f32 %v2568, 1.442695
    %v2578 = vpow.pop %v2577
    %v2579 = vadd.f32 %v2570, 1e-06
    %v2580 = vadd.f32 %v2572, 1e-06
    %v2581 = vadd.f32 %v2574, 1e-06
    %v2582 = vadd.f32 %v2576, 1e-06
    %v2583 = vadd.f32 %v2578, 1e-06
    %v2584 = vmul.f32 %v2579, 0.5
    %v2585 = vmul.f32 %v2580, 0.5
    %v2586 = vmul.f32 %v2581, 0.5
    %v2587 = vmul.f32 %v2582, 0.5
    %v2588 = vmul.f32 %v2583, 0.5
    %v2590 = vsel %vm452, %v2434, 0
    %v2593 = vsel %vm452, %v2435, 0
    %v2596 = vsel %vm452, %v2436, 0
    %v2599 = vsel %vm452, %v2437, 0
    %v2602 = vsel %vm452, %v2438, 0
    %2604 = vmatprep.subr.mxu0 0.0
    %2605 = vmatpush1.msra.mxu0 %v694
    %2606 = vmatprep.subr.mxu0 0.0
    %2607 = vmatpush1.msra.mxu0 %v695
    %2608 = vmatprep.subr.mxu0 0.0
    %2609 = vmatpush1.msra.mxu0 %v696
    %2610 = vmatprep.subr.mxu0 0.0
    %2611 = vmatpush1.msra.mxu0 %v697
    %2612 = vmatprep.subr.mxu0 0.0
    %2613 = vmatpush1.msra.mxu0 %v698
    %2614 = vmatprep.subr.mxu0 0.0
    %2615 = vmatpush1.msra.mxu0 %v699
    %2616 = vmatprep.subr.mxu0 0.0
    %2617 = vmatpush1.msra.mxu0 %v700
    %2618 = vmatprep.subr.mxu0 0.0
    %2619 = vmatpush1.msra.mxu0 %v701
    %2620 = vmatprep.subr.mxu0 0.0
    %2621 = vmatpush1.msra.mxu0 0.0
    %2622 = vmatprep.subr.mxu0 0.0
    %2623 = vmatpush1.msra.mxu0 0.0
    %2624 = vmatprep.subr.mxu0 0.0
    %2625 = vmatpush1.msra.mxu0 0.0
    %2626 = vmatprep.subr.mxu0 0.0
    %2627 = vmatpush1.msra.mxu0 0.0
    %2628 = vmatprep.subr.mxu0 0.0
    %2629 = vmatpush1.msra.mxu0 0.0
    %2630 = vmatprep.subr.mxu0 0.0
    %2631 = vmatpush1.msra.mxu0 0.0
    %2632 = vmatprep.subr.mxu0 0.0
    %2633 = vmatpush1.msra.mxu0 0.0
    %2634 = vmatprep.subr.mxu0 0.0
    %2635 = vmatpush1.msra.mxu0 0.0
    %2636 = vmatprep.subr.mxu0 0.0
    %2637 = vmatpush1.msra.mxu0 0.0
    %2638 = vmatprep.subr.mxu0 0.0
    %2639 = vmatpush1.msra.mxu0 0.0
    %2640 = vmatprep.subr.mxu0 0.0
    %2641 = vmatpush1.msra.mxu0 0.0
    %2642 = vmatprep.subr.mxu0 0.0
    %2643 = vmatpush1.msra.mxu0 0.0
    %2644 = vmatprep.subr.mxu0 0.0
    %2645 = vmatpush1.msra.mxu0 0.0
    %2646 = vmatprep.subr.mxu0 0.0
    %2647 = vmatpush1.msra.mxu0 0.0
    %2648 = vmatprep.subr.mxu0 0.0
    %2649 = vmatpush1.msra.mxu0 0.0
    %2650 = vmatprep.subr.mxu0 0.0
    %2651 = vmatpush1.msra.mxu0 0.0
    %2652 = vmatprep.subr.mxu0 0.0
    %2653 = vmatpush1.msra.mxu0 0.0
    %2654 = vmatprep.subr.mxu0 0.0
    %2655 = vmatpush1.msra.mxu0 0.0
    %2656 = vmatprep.subr.mxu0 0.0
    %2657 = vmatpush1.msra.mxu0 0.0
    %2658 = vmatprep.subr.mxu0 0.0
    %2659 = vmatpush1.msra.mxu0 0.0
    %2660 = vmatprep.subr.mxu0 0.0
    %2661 = vmatpush1.msra.mxu0 0.0
    %2662 = vmatprep.subr.mxu0 0.0
    %2663 = vmatpush1.msra.mxu0 0.0
    %2664 = vmatprep.subr.mxu0 0.0
    %2665 = vmatpush1.msra.mxu0 0.0
    %2666 = vmatprep.subr.mxu0 0.0
    %2667 = vmatpush1.msra.mxu0 0.0
    %2668 = vmatprep.mubr.f32.mxu0 0.0
    %2669 = vmatmul.mubr.f32.gmra.mrb[0].mxu0 %v2590
    %v2670 = vpop.f32.mrb[0].mxu0
    %v2671 = vadd.f32 0.0, %v2670
    %v2672 = vpop.f32.mrb[0].mxu0
    %2673 = vmatprep.mubr.f32.mxu0 0.0
    %2674 = vmatmul.mubr.f32.gmra.mrb[0].mxu0 %v2593
    %v2675 = vpop.f32.mrb[0].mxu0
    %v2676 = vadd.f32 0.0, %v2675
    %v2677 = vpop.f32.mrb[0].mxu0
    %2678 = vmatprep.mubr.f32.mxu0 0.0
    %2679 = vmatmul.mubr.f32.gmra.mrb[0].mxu0 %v2596
    %v2680 = vpop.f32.mrb[0].mxu0
    %v2681 = vadd.f32 0.0, %v2680
    %v2682 = vpop.f32.mrb[0].mxu0
    %2683 = vmatprep.mubr.f32.mxu0 0.0
    %2684 = vmatmul.mubr.f32.gmra.mrb[0].mxu0 %v2599
    %v2685 = vpop.f32.mrb[0].mxu0
    %v2686 = vadd.f32 0.0, %v2685
    %v2687 = vpop.f32.mrb[0].mxu0
    %2688 = vmatprep.mubr.f32.mxu0 0.0
    %2689 = vmatmul.mubr.f32.gmra.mrb[0].mxu0 %v2602
    %v2690 = vpop.f32.mrb[0].mxu0
    %v2691 = vadd.f32 0.0, %v2690
    %v2692 = vpop.f32.mrb[0].mxu0
    %2693 = vdwg.mxu0
    %v2694 = vmul.f32 %v2671, %v689
    %v2695 = vmul.f32 %v2676, %v690
    %v2696 = vmul.f32 %v2681, %v691
    %v2697 = vmul.f32 %v2686, %v692
    %v2698 = vmul.f32 %v2691, %v693
    %2704 = vrot.lane.b32.xlu0 %v2584, 64
    %v2705 = vpop.permute.xlu0 %2704
    %2706 = vrot.lane.b32.xlu0 %v2585, 64
    %v2707 = vpop.permute.xlu0 %2706
    %2708 = vrot.lane.b32.xlu0 %v2586, 64
    %v2709 = vpop.permute.xlu0 %2708
    %2710 = vrot.lane.b32.xlu0 %v2587, 64
    %v2711 = vpop.permute.xlu0 %2710
    %2712 = vrot.lane.b32.xlu0 %v2588, 64
    %v2713 = vpop.permute.xlu0 %2712
    %v2714 = vsel %vm452, %v2705, 0
    %v2716 = vsel %vm452, %v2707, 0
    %v2718 = vsel %vm452, %v2709, 0
    %v2720 = vsel %vm452, %v2711, 0
    %v2722 = vsel %vm452, %v2713, 0
    %2724 = vmatprep.subr.mxu0 0.0
    %2725 = vmatpush1.msra.mxu0 %v694
    %2726 = vmatprep.subr.mxu0 0.0
    %2727 = vmatpush1.msra.mxu0 %v695
    %2728 = vmatprep.subr.mxu0 0.0
    %2729 = vmatpush1.msra.mxu0 %v696
    %2730 = vmatprep.subr.mxu0 0.0
    %2731 = vmatpush1.msra.mxu0 %v697
    %2732 = vmatprep.subr.mxu0 0.0
    %2733 = vmatpush1.msra.mxu0 %v698
    %2734 = vmatprep.subr.mxu0 0.0
    %2735 = vmatpush1.msra.mxu0 %v699
    %2736 = vmatprep.subr.mxu0 0.0
    %2737 = vmatpush1.msra.mxu0 %v700
    %2738 = vmatprep.subr.mxu0 0.0
    %2739 = vmatpush1.msra.mxu0 %v701
    %2740 = vmatprep.subr.mxu0 0.0
    %2741 = vmatpush1.msra.mxu0 0.0
    %2742 = vmatprep.subr.mxu0 0.0
    %2743 = vmatpush1.msra.mxu0 0.0
    %2744 = vmatprep.subr.mxu0 0.0
    %2745 = vmatpush1.msra.mxu0 0.0
    %2746 = vmatprep.subr.mxu0 0.0
    %2747 = vmatpush1.msra.mxu0 0.0
    %2748 = vmatprep.subr.mxu0 0.0
    %2749 = vmatpush1.msra.mxu0 0.0
    %2750 = vmatprep.subr.mxu0 0.0
    %2751 = vmatpush1.msra.mxu0 0.0
    %2752 = vmatprep.subr.mxu0 0.0
    %2753 = vmatpush1.msra.mxu0 0.0
    %2754 = vmatprep.subr.mxu0 0.0
    %2755 = vmatpush1.msra.mxu0 0.0
    %2756 = vmatprep.subr.mxu0 0.0
    %2757 = vmatpush1.msra.mxu0 0.0
    %2758 = vmatprep.subr.mxu0 0.0
    %2759 = vmatpush1.msra.mxu0 0.0
    %2760 = vmatprep.subr.mxu0 0.0
    %2761 = vmatpush1.msra.mxu0 0.0
    %2762 = vmatprep.subr.mxu0 0.0
    %2763 = vmatpush1.msra.mxu0 0.0
    %2764 = vmatprep.subr.mxu0 0.0
    %2765 = vmatpush1.msra.mxu0 0.0
    %2766 = vmatprep.subr.mxu0 0.0
    %2767 = vmatpush1.msra.mxu0 0.0
    %2768 = vmatprep.subr.mxu0 0.0
    %2769 = vmatpush1.msra.mxu0 0.0
    %2770 = vmatprep.subr.mxu0 0.0
    %2771 = vmatpush1.msra.mxu0 0.0
    %2772 = vmatprep.subr.mxu0 0.0
    %2773 = vmatpush1.msra.mxu0 0.0
    %2774 = vmatprep.subr.mxu0 0.0
    %2775 = vmatpush1.msra.mxu0 0.0
    %2776 = vmatprep.subr.mxu0 0.0
    %2777 = vmatpush1.msra.mxu0 0.0
    %2778 = vmatprep.subr.mxu0 0.0
    %2779 = vmatpush1.msra.mxu0 0.0
    %2780 = vmatprep.subr.mxu0 0.0
    %2781 = vmatpush1.msra.mxu0 0.0
    %2782 = vmatprep.subr.mxu0 0.0
    %2783 = vmatpush1.msra.mxu0 0.0
    %2784 = vmatprep.subr.mxu0 0.0
    %2785 = vmatpush1.msra.mxu0 0.0
    %2786 = vmatprep.subr.mxu0 0.0
    %2787 = vmatpush1.msra.mxu0 0.0
    %2788 = vmatprep.mubr.f32.mxu0 0.0
    %2789 = vmatmul.mubr.f32.gmra.mrb[0].mxu0 %v2714
    %v2790 = vpop.f32.mrb[0].mxu0
    %v2791 = vadd.f32 0.0, %v2790
    %v2792 = vpop.f32.mrb[0].mxu0
    %2793 = vmatprep.mubr.f32.mxu0 0.0
    %2794 = vmatmul.mubr.f32.gmra.mrb[0].mxu0 %v2716
    %v2795 = vpop.f32.mrb[0].mxu0
    %v2796 = vadd.f32 0.0, %v2795
    %v2797 = vpop.f32.mrb[0].mxu0
    %2798 = vmatprep.mubr.f32.mxu0 0.0
    %2799 = vmatmul.mubr.f32.gmra.mrb[0].mxu0 %v2718
    %v2800 = vpop.f32.mrb[0].mxu0
    %v2801 = vadd.f32 0.0, %v2800
    %v2802 = vpop.f32.mrb[0].mxu0
    %2803 = vmatprep.mubr.f32.mxu0 0.0
    %2804 = vmatmul.mubr.f32.gmra.mrb[0].mxu0 %v2720
    %v2805 = vpop.f32.mrb[0].mxu0
    %v2806 = vadd.f32 0.0, %v2805
    %v2807 = vpop.f32.mrb[0].mxu0
    %2808 = vmatprep.mubr.f32.mxu0 0.0
    %2809 = vmatmul.mubr.f32.gmra.mrb[0].mxu0 %v2722
    %v2810 = vpop.f32.mrb[0].mxu0
    %v2811 = vadd.f32 0.0, %v2810
    %v2812 = vpop.f32.mrb[0].mxu0
    %2813 = vdwg.mxu0
    %v2814 = vmul.f32 %v2791, %v689
    %v2815 = vmul.f32 %v2796, %v690
    %v2816 = vmul.f32 %v2801, %v691
    %v2817 = vmul.f32 %v2806, %v692
    %v2818 = vmul.f32 %v2811, %v693
    %2819 = vxpose.xlu0.b32.start [1/16] %v2694, 128
    %2820 = vxpose.xlu0.b32.cont [2/16] %v2695, 128
    %2821 = vxpose.xlu0.b32.cont [3/16] %v2696, 128
    %2822 = vxpose.xlu0.b32.cont [4/16] %v2697, 128
    %2823 = vxpose.xlu0.b32.cont [5/16] %v2698, 128
    %2824 = vxpose.xlu0.b32.cont [6/16] 0.0, 128
    %2825 = vxpose.xlu0.b32.cont [7/16] 0.0, 128
    %2826 = vxpose.xlu0.b32.cont [8/16] 0.0, 128
    %2827 = vxpose.xlu0.b32.cont [9/16] 0.0, 128
    %2828 = vxpose.xlu0.b32.cont [10/16] 0.0, 128
    %2829 = vxpose.xlu0.b32.cont [11/16] 0.0, 128
    %2830 = vxpose.xlu0.b32.cont [12/16] 0.0, 128
    %2831 = vxpose.xlu0.b32.cont [13/16] 0.0, 128
    %2832 = vxpose.xlu0.b32.cont [14/16] 0.0, 128
    %2833 = vxpose.xlu0.b32.cont [15/16] 0.0, 128
    %2834 = vxpose.xlu0.b32.end [16/16] 0.0, 128
    %v2835 = vpop.trf.xlu0
    %v2836 = vpop.trf.xlu0
    %v2837 = vpop.trf.xlu0
    %v2838 = vpop.trf.xlu0
    %v2839 = vpop.trf.xlu0
    %v2840 = vpop.trf.xlu0
    %v2841 = vpop.trf.xlu0
    %v2842 = vpop.trf.xlu0
    %v2843 = vpop.trf.xlu0
    %v2844 = vpop.trf.xlu0
    %v2845 = vpop.trf.xlu0
    %v2846 = vpop.trf.xlu0
    %v2847 = vpop.trf.xlu0
    %v2848 = vpop.trf.xlu0
    %v2849 = vpop.trf.xlu0
    %v2850 = vpop.trf.xlu0
    %v2852 = vsel %vm964, %v2835, 0
    %v2855 = vsel %vm964, %v2836, 0
    %v2858 = vsel %vm964, %v2837, 0
    %v2861 = vsel %vm964, %v2838, 0
    %v2864 = vsel %vm964, %v2839, 0
    %v2867 = vsel %vm964, %v2840, 0
    %v2870 = vsel %vm964, %v2841, 0
    %v2873 = vsel %vm964, %v2842, 0
    %v2876 = vsel %vm964, %v2843, 0
    %v2879 = vsel %vm964, %v2844, 0
    %v2882 = vsel %vm964, %v2845, 0
    %v2885 = vsel %vm964, %v2846, 0
    %v2888 = vsel %vm964, %v2847, 0
    %v2891 = vsel %vm964, %v2848, 0
    %v2894 = vsel %vm964, %v2849, 0
    %v2897 = vsel %vm964, %v2850, 0
    %v2900 = vsel %vm469, %v2289, 0
    %2902 = vmatprep.subr.mxu0 0.0
    %2903 = vmatpush1.msra.mxu0 %v2265
    %2904 = vmatprep.subr.mxu0 0.0
    %2905 = vmatpush1.msra.mxu0 %v2271
    %2906 = vmatprep.subr.mxu0 0.0
    %2907 = vmatpush1.msra.mxu0 %v2277
    %2908 = vmatprep.subr.mxu0 0.0
    %2909 = vmatpush1.msra.mxu0 %v2283
    %2910 = vmatprep.subr.mxu0 0.0
    %2911 = vmatpush1.msra.mxu0 %v2900
    %2912 = vmatprep.subr.mxu0 0.0
    %2913 = vmatpush1.msra.mxu0 0.0
    %2914 = vmatprep.subr.mxu0 0.0
    %2915 = vmatpush1.msra.mxu0 0.0
    %2916 = vmatprep.subr.mxu0 0.0
    %2917 = vmatpush1.msra.mxu0 0.0
    %2918 = vmatprep.subr.mxu0 0.0
    %2919 = vmatpush1.msra.mxu0 0.0
    %2920 = vmatprep.subr.mxu0 0.0
    %2921 = vmatpush1.msra.mxu0 0.0
    %2922 = vmatprep.subr.mxu0 0.0
    %2923 = vmatpush1.msra.mxu0 0.0
    %2924 = vmatprep.subr.mxu0 0.0
    %2925 = vmatpush1.msra.mxu0 0.0
    %2926 = vmatprep.subr.mxu0 0.0
    %2927 = vmatpush1.msra.mxu0 0.0
    %2928 = vmatprep.subr.mxu0 0.0
    %2929 = vmatpush1.msra.mxu0 0.0
    %2930 = vmatprep.subr.mxu0 0.0
    %2931 = vmatpush1.msra.mxu0 0.0
    %2932 = vmatprep.subr.mxu0 0.0
    %2933 = vmatpush1.msra.mxu0 0.0
    %2934 = vmatprep.subr.mxu0 0.0
    %2935 = vmatpush1.msra.mxu0 0.0
    %2936 = vmatprep.subr.mxu0 0.0
    %2937 = vmatpush1.msra.mxu0 0.0
    %2938 = vmatprep.subr.mxu0 0.0
    %2939 = vmatpush1.msra.mxu0 0.0
    %2940 = vmatprep.subr.mxu0 0.0
    %2941 = vmatpush1.msra.mxu0 0.0
    %2942 = vmatprep.subr.mxu0 0.0
    %2943 = vmatpush1.msra.mxu0 0.0
    %2944 = vmatprep.subr.mxu0 0.0
    %2945 = vmatpush1.msra.mxu0 0.0
    %2946 = vmatprep.subr.mxu0 0.0
    %2947 = vmatpush1.msra.mxu0 0.0
    %2948 = vmatprep.subr.mxu0 0.0
    %2949 = vmatpush1.msra.mxu0 0.0
    %2950 = vmatprep.subr.mxu0 0.0
    %2951 = vmatpush1.msra.mxu0 0.0
    %2952 = vmatprep.subr.mxu0 0.0
    %2953 = vmatpush1.msra.mxu0 0.0
    %2954 = vmatprep.subr.mxu0 0.0
    %2955 = vmatpush1.msra.mxu0 0.0
    %2956 = vmatprep.subr.mxu0 0.0
    %2957 = vmatpush1.msra.mxu0 0.0
    %2958 = vmatprep.subr.mxu0 0.0
    %2959 = vmatpush1.msra.mxu0 0.0
    %2960 = vmatprep.subr.mxu0 0.0
    %2961 = vmatpush1.msra.mxu0 0.0
    %2962 = vmatprep.subr.mxu0 0.0
    %2963 = vmatpush1.msra.mxu0 0.0
    %2964 = vmatprep.subr.mxu0 0.0
    %2965 = vmatpush1.msra.mxu0 0.0
    %2966 = vmatprep.mubr.f32.mxu0 0.0
    %2967 = vmatmul.mubr.f32.gmra.mrb[0].mxu0 %v2852
    %v2968 = vpop.f32.mrb[0].mxu0
    %v2969 = vadd.f32 0.0, %v2968
    %v2970 = vpop.f32.mrb[0].mxu0
    %2971 = vmatprep.mubr.f32.mxu0 0.0
    %2972 = vmatmul.mubr.f32.gmra.mrb[0].mxu0 %v2855
    %v2973 = vpop.f32.mrb[0].mxu0
    %v2974 = vadd.f32 0.0, %v2973
    %v2975 = vpop.f32.mrb[0].mxu0
    %2976 = vmatprep.mubr.f32.mxu0 0.0
    %2977 = vmatmul.mubr.f32.gmra.mrb[0].mxu0 %v2858
    %v2978 = vpop.f32.mrb[0].mxu0
    %v2979 = vadd.f32 0.0, %v2978
    %v2980 = vpop.f32.mrb[0].mxu0
    %2981 = vmatprep.mubr.f32.mxu0 0.0
    %2982 = vmatmul.mubr.f32.gmra.mrb[0].mxu0 %v2861
    %v2983 = vpop.f32.mrb[0].mxu0
    %v2984 = vadd.f32 0.0, %v2983
    %v2985 = vpop.f32.mrb[0].mxu0
    %2986 = vmatprep.mubr.f32.mxu0 0.0
    %2987 = vmatmul.mubr.f32.gmra.mrb[0].mxu0 %v2864
    %v2988 = vpop.f32.mrb[0].mxu0
    %v2989 = vadd.f32 0.0, %v2988
    %v2990 = vpop.f32.mrb[0].mxu0
    %2991 = vmatprep.mubr.f32.mxu0 0.0
    %2992 = vmatmul.mubr.f32.gmra.mrb[0].mxu0 %v2867
    %v2993 = vpop.f32.mrb[0].mxu0
    %v2994 = vadd.f32 0.0, %v2993
    %v2995 = vpop.f32.mrb[0].mxu0
    %2996 = vmatprep.mubr.f32.mxu0 0.0
    %2997 = vmatmul.mubr.f32.gmra.mrb[0].mxu0 %v2870
    %v2998 = vpop.f32.mrb[0].mxu0
    %v2999 = vadd.f32 0.0, %v2998
    %v3000 = vpop.f32.mrb[0].mxu0
    %3001 = vmatprep.mubr.f32.mxu0 0.0
    %3002 = vmatmul.mubr.f32.gmra.mrb[0].mxu0 %v2873
    %v3003 = vpop.f32.mrb[0].mxu0
    %v3004 = vadd.f32 0.0, %v3003
    %v3005 = vpop.f32.mrb[0].mxu0
    %3006 = vmatprep.mubr.f32.mxu0 0.0
    %3007 = vmatmul.mubr.f32.gmra.mrb[0].mxu0 %v2876
    %v3008 = vpop.f32.mrb[0].mxu0
    %v3009 = vadd.f32 0.0, %v3008
    %v3010 = vpop.f32.mrb[0].mxu0
    %3011 = vmatprep.mubr.f32.mxu0 0.0
    %3012 = vmatmul.mubr.f32.gmra.mrb[0].mxu0 %v2879
    %v3013 = vpop.f32.mrb[0].mxu0
    %v3014 = vadd.f32 0.0, %v3013
    %v3015 = vpop.f32.mrb[0].mxu0
    %3016 = vmatprep.mubr.f32.mxu0 0.0
    %3017 = vmatmul.mubr.f32.gmra.mrb[0].mxu0 %v2882
    %v3018 = vpop.f32.mrb[0].mxu0
    %v3019 = vadd.f32 0.0, %v3018
    %v3020 = vpop.f32.mrb[0].mxu0
    %3021 = vmatprep.mubr.f32.mxu0 0.0
    %3022 = vmatmul.mubr.f32.gmra.mrb[0].mxu0 %v2885
    %v3023 = vpop.f32.mrb[0].mxu0
    %v3024 = vadd.f32 0.0, %v3023
    %v3025 = vpop.f32.mrb[0].mxu0
    %3026 = vmatprep.mubr.f32.mxu0 0.0
    %3027 = vmatmul.mubr.f32.gmra.mrb[0].mxu0 %v2888
    %v3028 = vpop.f32.mrb[0].mxu0
    %v3029 = vadd.f32 0.0, %v3028
    %v3030 = vpop.f32.mrb[0].mxu0
    %3031 = vmatprep.mubr.f32.mxu0 0.0
    %3032 = vmatmul.mubr.f32.gmra.mrb[0].mxu0 %v2891
    %v3033 = vpop.f32.mrb[0].mxu0
    %v3034 = vadd.f32 0.0, %v3033
    %v3035 = vpop.f32.mrb[0].mxu0
    %3036 = vmatprep.mubr.f32.mxu0 0.0
    %3037 = vmatmul.mubr.f32.gmra.mrb[0].mxu0 %v2894
    %v3038 = vpop.f32.mrb[0].mxu0
    %v3039 = vadd.f32 0.0, %v3038
    %v3040 = vpop.f32.mrb[0].mxu0
    %3041 = vmatprep.mubr.f32.mxu0 0.0
    %3042 = vmatmul.mubr.f32.gmra.mrb[0].mxu0 %v2897
    %v3043 = vpop.f32.mrb[0].mxu0
    %v3044 = vadd.f32 0.0, %v3043
    %v3045 = vpop.f32.mrb[0].mxu0
    %3046 = vdwg.mxu0
    %v3048 = vsel %vm1166, %v2969, 0
    %v3051 = vsel %vm1166, %v2974, 0
    %v3054 = vsel %vm1166, %v2979, 0
    %v3057 = vsel %vm1166, %v2984, 0
    %v3060 = vsel %vm1166, %v2989, 0
    %v3063 = vsel %vm1166, %v2994, 0
    %v3066 = vsel %vm1166, %v2999, 0
    %v3069 = vsel %vm1166, %v3004, 0
    %v3072 = vsel %vm1166, %v3009, 0
    %v3075 = vsel %vm1166, %v3014, 0
    %v3078 = vsel %vm1166, %v3019, 0
    %v3081 = vsel %vm1166, %v3024, 0
    %v3084 = vsel %vm1166, %v3029, 0
    %v3087 = vsel %vm1166, %v3034, 0
    %v3090 = vsel %vm1166, %v3039, 0
    %v3093 = vsel %vm1166, %v3044, 0
    %3095 = vmatprep.subr.mxu0 0.0
    %3096 = vmatpush1.msra.mxu0 %v1161
    %3097 = vmatprep.subr.mxu0 0.0
    %3098 = vmatpush1.msra.mxu0 %v1162
    %3099 = vmatprep.subr.mxu0 0.0
    %3100 = vmatpush1.msra.mxu0 %v1163
    %3101 = vmatprep.subr.mxu0 0.0
    %3102 = vmatpush1.msra.mxu0 %v1164
    %3103 = vmatprep.subr.mxu0 0.0
    %3104 = vmatpush1.msra.mxu0 %v1217
    %3105 = vmatprep.subr.mxu0 0.0
    %3106 = vmatpush1.msra.mxu0 0.0
    %3107 = vmatprep.subr.mxu0 0.0
    %3108 = vmatpush1.msra.mxu0 0.0
    %3109 = vmatprep.subr.mxu0 0.0
    %3110 = vmatpush1.msra.mxu0 0.0
    %3111 = vmatprep.subr.mxu0 0.0
    %3112 = vmatpush1.msra.mxu0 0.0
    %3113 = vmatprep.subr.mxu0 0.0
    %3114 = vmatpush1.msra.mxu0 0.0
    %3115 = vmatprep.subr.mxu0 0.0
    %3116 = vmatpush1.msra.mxu0 0.0
    %3117 = vmatprep.subr.mxu0 0.0
    %3118 = vmatpush1.msra.mxu0 0.0
    %3119 = vmatprep.subr.mxu0 0.0
    %3120 = vmatpush1.msra.mxu0 0.0
    %3121 = vmatprep.subr.mxu0 0.0
    %3122 = vmatpush1.msra.mxu0 0.0
    %3123 = vmatprep.subr.mxu0 0.0
    %3124 = vmatpush1.msra.mxu0 0.0
    %3125 = vmatprep.subr.mxu0 0.0
    %3126 = vmatpush1.msra.mxu0 0.0
    %3127 = vmatprep.subr.mxu0 0.0
    %3128 = vmatpush1.msra.mxu0 0.0
    %3129 = vmatprep.subr.mxu0 0.0
    %3130 = vmatpush1.msra.mxu0 0.0
    %3131 = vmatprep.subr.mxu0 0.0
    %3132 = vmatpush1.msra.mxu0 0.0
    %3133 = vmatprep.subr.mxu0 0.0
    %3134 = vmatpush1.msra.mxu0 0.0
    %3135 = vmatprep.subr.mxu0 0.0
    %3136 = vmatpush1.msra.mxu0 0.0
    %3137 = vmatprep.subr.mxu0 0.0
    %3138 = vmatpush1.msra.mxu0 0.0
    %3139 = vmatprep.subr.mxu0 0.0
    %3140 = vmatpush1.msra.mxu0 0.0
    %3141 = vmatprep.subr.mxu0 0.0
    %3142 = vmatpush1.msra.mxu0 0.0
    %3143 = vmatprep.subr.mxu0 0.0
    %3144 = vmatpush1.msra.mxu0 0.0
    %3145 = vmatprep.subr.mxu0 0.0
    %3146 = vmatpush1.msra.mxu0 0.0
    %3147 = vmatprep.subr.mxu0 0.0
    %3148 = vmatpush1.msra.mxu0 0.0
    %3149 = vmatprep.subr.mxu0 0.0
    %3150 = vmatpush1.msra.mxu0 0.0
    %3151 = vmatprep.subr.mxu0 0.0
    %3152 = vmatpush1.msra.mxu0 0.0
    %3153 = vmatprep.subr.mxu0 0.0
    %3154 = vmatpush1.msra.mxu0 0.0
    %3155 = vmatprep.subr.mxu0 0.0
    %3156 = vmatpush1.msra.mxu0 0.0
    %3157 = vmatprep.subr.mxu0 0.0
    %3158 = vmatpush1.msra.mxu0 0.0
    %3159 = vmatprep.mubr.f32.mxu0 0.0
    %3160 = vmatmul.mubr.f32.gmra.mrb[0].mxu0 %v3048
    %v3161 = vpop.f32.mrb[0].mxu0
    %v3162 = vadd.f32 0.0, %v3161
    %v3163 = vpop.f32.mrb[0].mxu0
    %3164 = vmatprep.mubr.f32.mxu0 0.0
    %3165 = vmatmul.mubr.f32.gmra.mrb[0].mxu0 %v3051
    %v3166 = vpop.f32.mrb[0].mxu0
    %v3167 = vadd.f32 0.0, %v3166
    %v3168 = vpop.f32.mrb[0].mxu0
    %3169 = vmatprep.mubr.f32.mxu0 0.0
    %3170 = vmatmul.mubr.f32.gmra.mrb[0].mxu0 %v3054
    %v3171 = vpop.f32.mrb[0].mxu0
    %v3172 = vadd.f32 0.0, %v3171
    %v3173 = vpop.f32.mrb[0].mxu0
    %3174 = vmatprep.mubr.f32.mxu0 0.0
    %3175 = vmatmul.mubr.f32.gmra.mrb[0].mxu0 %v3057
    %v3176 = vpop.f32.mrb[0].mxu0
    %v3177 = vadd.f32 0.0, %v3176
    %v3178 = vpop.f32.mrb[0].mxu0
    %3179 = vmatprep.mubr.f32.mxu0 0.0
    %3180 = vmatmul.mubr.f32.gmra.mrb[0].mxu0 %v3060
    %v3181 = vpop.f32.mrb[0].mxu0
    %v3182 = vadd.f32 0.0, %v3181
    %v3183 = vpop.f32.mrb[0].mxu0
    %3184 = vmatprep.mubr.f32.mxu0 0.0
    %3185 = vmatmul.mubr.f32.gmra.mrb[0].mxu0 %v3063
    %v3186 = vpop.f32.mrb[0].mxu0
    %v3187 = vadd.f32 0.0, %v3186
    %v3188 = vpop.f32.mrb[0].mxu0
    %3189 = vmatprep.mubr.f32.mxu0 0.0
    %3190 = vmatmul.mubr.f32.gmra.mrb[0].mxu0 %v3066
    %v3191 = vpop.f32.mrb[0].mxu0
    %v3192 = vadd.f32 0.0, %v3191
    %v3193 = vpop.f32.mrb[0].mxu0
    %3194 = vmatprep.mubr.f32.mxu0 0.0
    %3195 = vmatmul.mubr.f32.gmra.mrb[0].mxu0 %v3069
    %v3196 = vpop.f32.mrb[0].mxu0
    %v3197 = vadd.f32 0.0, %v3196
    %v3198 = vpop.f32.mrb[0].mxu0
    %3199 = vmatprep.mubr.f32.mxu0 0.0
    %3200 = vmatmul.mubr.f32.gmra.mrb[0].mxu0 %v3072
    %v3201 = vpop.f32.mrb[0].mxu0
    %v3202 = vadd.f32 0.0, %v3201
    %v3203 = vpop.f32.mrb[0].mxu0
    %3204 = vmatprep.mubr.f32.mxu0 0.0
    %3205 = vmatmul.mubr.f32.gmra.mrb[0].mxu0 %v3075
    %v3206 = vpop.f32.mrb[0].mxu0
    %v3207 = vadd.f32 0.0, %v3206
    %v3208 = vpop.f32.mrb[0].mxu0
    %3209 = vmatprep.mubr.f32.mxu0 0.0
    %3210 = vmatmul.mubr.f32.gmra.mrb[0].mxu0 %v3078
    %v3211 = vpop.f32.mrb[0].mxu0
    %v3212 = vadd.f32 0.0, %v3211
    %v3213 = vpop.f32.mrb[0].mxu0
    %3214 = vmatprep.mubr.f32.mxu0 0.0
    %3215 = vmatmul.mubr.f32.gmra.mrb[0].mxu0 %v3081
    %v3216 = vpop.f32.mrb[0].mxu0
    %v3217 = vadd.f32 0.0, %v3216
    %v3218 = vpop.f32.mrb[0].mxu0
    %3219 = vmatprep.mubr.f32.mxu0 0.0
    %3220 = vmatmul.mubr.f32.gmra.mrb[0].mxu0 %v3084
    %v3221 = vpop.f32.mrb[0].mxu0
    %v3222 = vadd.f32 0.0, %v3221
    %v3223 = vpop.f32.mrb[0].mxu0
    %3224 = vmatprep.mubr.f32.mxu0 0.0
    %3225 = vmatmul.mubr.f32.gmra.mrb[0].mxu0 %v3087
    %v3226 = vpop.f32.mrb[0].mxu0
    %v3227 = vadd.f32 0.0, %v3226
    %v3228 = vpop.f32.mrb[0].mxu0
    %3229 = vmatprep.mubr.f32.mxu0 0.0
    %3230 = vmatmul.mubr.f32.gmra.mrb[0].mxu0 %v3090
    %v3231 = vpop.f32.mrb[0].mxu0
    %v3232 = vadd.f32 0.0, %v3231
    %v3233 = vpop.f32.mrb[0].mxu0
    %3234 = vmatprep.mubr.f32.mxu0 0.0
    %3235 = vmatmul.mubr.f32.gmra.mrb[0].mxu0 %v3093
    %v3236 = vpop.f32.mrb[0].mxu0
    %v3237 = vadd.f32 0.0, %v3236
    %v3238 = vpop.f32.mrb[0].mxu0
    %3239 = vdwg.mxu0
    %v3240 = vmul.f32 %v3162, %v1364
    %v3241 = vmul.f32 %v3167, %v1365
    %v3242 = vmul.f32 %v3172, %v1366
    %v3243 = vmul.f32 %v3177, %v1367
    %v3244 = vmul.f32 %v3182, %v1368
    %v3245 = vmul.f32 %v3187, %v1369
    %v3246 = vmul.f32 %v3192, %v1370
    %v3247 = vmul.f32 %v3197, %v1371
    %v3248 = vmul.f32 %v3202, %v1372
    %v3249 = vmul.f32 %v3207, %v1373
    %v3250 = vmul.f32 %v3212, %v1374
    %v3251 = vmul.f32 %v3217, %v1375
    %v3252 = vmul.f32 %v3222, %v1376
    %v3253 = vmul.f32 %v3227, %v1377
    %v3254 = vmul.f32 %v3232, %v1378
    %v3255 = vmul.f32 %v3237, %v1379
    %3256 = vmatprep.subr.mxu0 0.0
    %3257 = vmatpush1.msra.mxu0 %v3240
    %3258 = vmatprep.subr.mxu0 0.0
    %3259 = vmatpush1.msra.mxu0 %v3241
    %3260 = vmatprep.subr.mxu0 0.0
    %3261 = vmatpush1.msra.mxu0 %v3242
    %3262 = vmatprep.subr.mxu0 0.0
    %3263 = vmatpush1.msra.mxu0 %v3243
    %3264 = vmatprep.subr.mxu0 0.0
    %3265 = vmatpush1.msra.mxu0 %v3244
    %3266 = vmatprep.subr.mxu0 0.0
    %3267 = vmatpush1.msra.mxu0 %v3245
    %3268 = vmatprep.subr.mxu0 0.0
    %3269 = vmatpush1.msra.mxu0 %v3246
    %3270 = vmatprep.subr.mxu0 0.0
    %3271 = vmatpush1.msra.mxu0 %v3247
    %3272 = vmatprep.subr.mxu0 0.0
    %3273 = vmatpush1.msra.mxu0 %v3248
    %3274 = vmatprep.subr.mxu0 0.0
    %3275 = vmatpush1.msra.mxu0 %v3249
    %3276 = vmatprep.subr.mxu0 0.0
    %3277 = vmatpush1.msra.mxu0 %v3250
    %3278 = vmatprep.subr.mxu0 0.0
    %3279 = vmatpush1.msra.mxu0 %v3251
    %3280 = vmatprep.subr.mxu0 0.0
    %3281 = vmatpush1.msra.mxu0 %v3252
    %3282 = vmatprep.subr.mxu0 0.0
    %3283 = vmatpush1.msra.mxu0 %v3253
    %3284 = vmatprep.subr.mxu0 0.0
    %3285 = vmatpush1.msra.mxu0 %v3254
    %3286 = vmatprep.subr.mxu0 0.0
    %3287 = vmatpush1.msra.mxu0 %v3255
    %3288 = vmatprep.subr.mxu0 0.0
    %3289 = vmatpush1.msra.mxu0 0.0
    %3290 = vmatprep.subr.mxu0 0.0
    %3291 = vmatpush1.msra.mxu0 0.0
    %3292 = vmatprep.subr.mxu0 0.0
    %3293 = vmatpush1.msra.mxu0 0.0
    %3294 = vmatprep.subr.mxu0 0.0
    %3295 = vmatpush1.msra.mxu0 0.0
    %3296 = vmatprep.subr.mxu0 0.0
    %3297 = vmatpush1.msra.mxu0 0.0
    %3298 = vmatprep.subr.mxu0 0.0
    %3299 = vmatpush1.msra.mxu0 0.0
    %3300 = vmatprep.subr.mxu0 0.0
    %3301 = vmatpush1.msra.mxu0 0.0
    %3302 = vmatprep.subr.mxu0 0.0
    %3303 = vmatpush1.msra.mxu0 0.0
    %3304 = vmatprep.subr.mxu0 0.0
    %3305 = vmatpush1.msra.mxu0 0.0
    %3306 = vmatprep.subr.mxu0 0.0
    %3307 = vmatpush1.msra.mxu0 0.0
    %3308 = vmatprep.subr.mxu0 0.0
    %3309 = vmatpush1.msra.mxu0 0.0
    %3310 = vmatprep.subr.mxu0 0.0
    %3311 = vmatpush1.msra.mxu0 0.0
    %3312 = vmatprep.subr.mxu0 0.0
    %3313 = vmatpush1.msra.mxu0 0.0
    %3314 = vmatprep.subr.mxu0 0.0
    %3315 = vmatpush1.msra.mxu0 0.0
    %3316 = vmatprep.subr.mxu0 0.0
    %3317 = vmatpush1.msra.mxu0 0.0
    %3318 = vmatprep.subr.mxu0 0.0
    %3319 = vmatpush1.msra.mxu0 0.0
    %3320 = vmatprep.mubr.f32.mxu0 0.0
    %3321 = vmatmul.mubr.f32.gmra.mrb[0].mxu0 %v2814
    %v3322 = vpop.f32.mrb[0].mxu0
    %v3323 = vadd.f32 0.0, %v3322
    %v3324 = vpop.f32.mrb[0].mxu0
    %3325 = vmatprep.mubr.f32.mxu0 0.0
    %3326 = vmatmul.mubr.f32.gmra.mrb[0].mxu0 %v2815
    %v3327 = vpop.f32.mrb[0].mxu0
    %v3328 = vadd.f32 0.0, %v3327
    %v3329 = vpop.f32.mrb[0].mxu0
    %3330 = vmatprep.mubr.f32.mxu0 0.0
    %3331 = vmatmul.mubr.f32.gmra.mrb[0].mxu0 %v2816
    %v3332 = vpop.f32.mrb[0].mxu0
    %v3333 = vadd.f32 0.0, %v3332
    %v3334 = vpop.f32.mrb[0].mxu0
    %3335 = vmatprep.mubr.f32.mxu0 0.0
    %3336 = vmatmul.mubr.f32.gmra.mrb[0].mxu0 %v2817
    %v3337 = vpop.f32.mrb[0].mxu0
    %v3338 = vadd.f32 0.0, %v3337
    %v3339 = vpop.f32.mrb[0].mxu0
    %3340 = vmatprep.mubr.f32.mxu0 0.0
    %3341 = vmatmul.mubr.f32.gmra.mrb[0].mxu0 %v2818
    %v3342 = vpop.f32.mrb[0].mxu0
    %v3343 = vadd.f32 0.0, %v3342
    %v3344 = vpop.f32.mrb[0].mxu0
    %3345 = vdwg.mxu0
    %v3346 = vrcp.pop %v3323
    %v3347 = vrcp.pop %v3328
    %v3348 = vrcp.pop %v3333
    %v3349 = vrcp.pop %v3338
    %v3350 = vrcp.pop %v3343
    %3356 = vrot.lane.b32.xlu0 %v3346, 96
    %v3357 = vpop.permute.xlu0 %3356
    %3358 = vrot.lane.b32.xlu0 %v3347, 96
    %v3359 = vpop.permute.xlu0 %3358
    %3360 = vrot.lane.b32.xlu0 %v3348, 96
    %v3361 = vpop.permute.xlu0 %3360
    %3362 = vrot.lane.b32.xlu0 %v3349, 96
    %v3363 = vpop.permute.xlu0 %3362
    %3364 = vrot.lane.b32.xlu0 %v3350, 96
    %v3365 = vpop.permute.xlu0 %3364
    %v3371 = vmul.f32 %v3323, %v3357
    %v3372 = vmul.f32 %v3328, %v3359
    %v3373 = vmul.f32 %v3333, %v3361
    %v3374 = vmul.f32 %v3338, %v3363
    %v3375 = vmul.f32 %v3343, %v3365
    %v3376 = vld [vmem:[%s2075 + $0x78] sm:$0xff]
    %v3377 = vld [vmem:[%s2075 + $0x90] sm:$0xff]
    %v3378 = vld [vmem:[%s2075 + $0xa8] sm:$0xff]
    %v3379 = vld [vmem:[%s2075 + $0xc0] sm:$0xff]
    %v3381 = vsel %vm144, %v3371, 0
    %v3384 = vsel %vm144, %v3372, 0
    %v3387 = vsel %vm144, %v3373, 0
    %v3390 = vsel %vm144, %v3374, 0
    %v3393 = vsel %vm144, %v3375, 0
    %3395 = vmatprep.subr.mxu0 0.0
    %3396 = vmatpush1.msra.mxu0 %v3376
    %3397 = vmatprep.subr.mxu0 0.0
    %3398 = vmatpush1.msra.mxu0 %v3377
    %3399 = vmatprep.subr.mxu0 0.0
    %3400 = vmatpush1.msra.mxu0 %v3378
    %3401 = vmatprep.subr.mxu0 0.0
    %3402 = vmatpush1.msra.mxu0 %v3379
    %3403 = vmatprep.subr.mxu0 0.0
    %3404 = vmatpush1.msra.mxu0 0.0
    %3405 = vmatprep.subr.mxu0 0.0
    %3406 = vmatpush1.msra.mxu0 0.0
    %3407 = vmatprep.subr.mxu0 0.0
    %3408 = vmatpush1.msra.mxu0 0.0
    %3409 = vmatprep.subr.mxu0 0.0
    %3410 = vmatpush1.msra.mxu0 0.0
    %3411 = vmatprep.subr.mxu0 0.0
    %3412 = vmatpush1.msra.mxu0 0.0
    %3413 = vmatprep.subr.mxu0 0.0
    %3414 = vmatpush1.msra.mxu0 0.0
    %3415 = vmatprep.subr.mxu0 0.0
    %3416 = vmatpush1.msra.mxu0 0.0
    %3417 = vmatprep.subr.mxu0 0.0
    %3418 = vmatpush1.msra.mxu0 0.0
    %3419 = vmatprep.subr.mxu0 0.0
    %3420 = vmatpush1.msra.mxu0 0.0
    %3421 = vmatprep.subr.mxu0 0.0
    %3422 = vmatpush1.msra.mxu0 0.0
    %3423 = vmatprep.subr.mxu0 0.0
    %3424 = vmatpush1.msra.mxu0 0.0
    %3425 = vmatprep.subr.mxu0 0.0
    %3426 = vmatpush1.msra.mxu0 0.0
    %3427 = vmatprep.subr.mxu0 0.0
    %3428 = vmatpush1.msra.mxu0 0.0
    %3429 = vmatprep.subr.mxu0 0.0
    %3430 = vmatpush1.msra.mxu0 0.0
    %3431 = vmatprep.subr.mxu0 0.0
    %3432 = vmatpush1.msra.mxu0 0.0
    %3433 = vmatprep.subr.mxu0 0.0
    %3434 = vmatpush1.msra.mxu0 0.0
    %3435 = vmatprep.subr.mxu0 0.0
    %3436 = vmatpush1.msra.mxu0 0.0
    %3437 = vmatprep.subr.mxu0 0.0
    %3438 = vmatpush1.msra.mxu0 0.0
    %3439 = vmatprep.subr.mxu0 0.0
    %3440 = vmatpush1.msra.mxu0 0.0
    %3441 = vmatprep.subr.mxu0 0.0
    %3442 = vmatpush1.msra.mxu0 0.0
    %3443 = vmatprep.subr.mxu0 0.0
    %3444 = vmatpush1.msra.mxu0 0.0
    %3445 = vmatprep.subr.mxu0 0.0
    %3446 = vmatpush1.msra.mxu0 0.0
    %3447 = vmatprep.subr.mxu0 0.0
    %3448 = vmatpush1.msra.mxu0 0.0
    %3449 = vmatprep.subr.mxu0 0.0
    %3450 = vmatpush1.msra.mxu0 0.0
    %3451 = vmatprep.subr.mxu0 0.0
    %3452 = vmatpush1.msra.mxu0 0.0
    %3453 = vmatprep.subr.mxu0 0.0
    %3454 = vmatpush1.msra.mxu0 0.0
    %3455 = vmatprep.subr.mxu0 0.0
    %3456 = vmatpush1.msra.mxu0 0.0
    %3457 = vmatprep.subr.mxu0 0.0
    %3458 = vmatpush1.msra.mxu0 0.0
    %3459 = vmatprep.mubr.f32.mxu0 0.0
    %3460 = vmatmul.mubr.f32.gmra.mrb[0].mxu0 %v3381
    %v3461 = vpop.f32.mrb[0].mxu0
    %v3462 = vadd.f32 0.0, %v3461
    %v3463 = vpop.f32.mrb[0].mxu0
    %3464 = vmatprep.mubr.f32.mxu0 0.0
    %3465 = vmatmul.mubr.f32.gmra.mrb[0].mxu0 %v3384
    %v3466 = vpop.f32.mrb[0].mxu0
    %v3467 = vadd.f32 0.0, %v3466
    %v3468 = vpop.f32.mrb[0].mxu0
    %3469 = vmatprep.mubr.f32.mxu0 0.0
    %3470 = vmatmul.mubr.f32.gmra.mrb[0].mxu0 %v3387
    %v3471 = vpop.f32.mrb[0].mxu0
    %v3472 = vadd.f32 0.0, %v3471
    %v3473 = vpop.f32.mrb[0].mxu0
    %3474 = vmatprep.mubr.f32.mxu0 0.0
    %3475 = vmatmul.mubr.f32.gmra.mrb[0].mxu0 %v3390
    %v3476 = vpop.f32.mrb[0].mxu0
    %v3477 = vadd.f32 0.0, %v3476
    %v3478 = vpop.f32.mrb[0].mxu0
    %3479 = vmatprep.mubr.f32.mxu0 0.0
    %3480 = vmatmul.mubr.f32.gmra.mrb[0].mxu0 %v3393
    %v3481 = vpop.f32.mrb[0].mxu0
    %v3482 = vadd.f32 0.0, %v3481
    %v3483 = vpop.f32.mrb[0].mxu0
    %3484 = vdwg.mxu0
    %v3485 = vadd.f32 %v2070, %v3462
    %v3486 = vadd.f32 %v2071, %v3467
    %v3487 = vadd.f32 %v2072, %v3472
    %v3488 = vadd.f32 %v2073, %v3477
    %v3489 = vadd.f32 %v2074, %v3482
    %v3490 = vld [vmem:[%s2075 + $0x2b8] ss:$0 sm:$0xff]
    %v3491 = vadd.f32 %v3485, %v3490
    %v3492 = vadd.f32 %v3486, %v3490
    %v3493 = vadd.f32 %v3487, %v3490
    %v3494 = vadd.f32 %v3488, %v3490
    %v3495 = vadd.f32 %v3489, %v3490
    %v3496 = vld [vmem:[%s2075 + $0x2bd] ss:$0 sm:$0xff]
    %v3497 = vld [vmem:[%s2075 + $0x2be] ss:$0 sm:$0xff]
    %v3498 = vsel %vm144, %v3491, 0.0
    %3499 = vadd.xlane.f32.xlu0 %v3498
    %v3500 = vpop.xlane.xlu0 %3499
    %v3501 = vsel %vm144, %v3492, 0.0
    %3502 = vadd.xlane.f32.xlu0 %v3501
    %v3503 = vpop.xlane.xlu0 %3502
    %v3504 = vsel %vm144, %v3493, 0.0
    %3505 = vadd.xlane.f32.xlu0 %v3504
    %v3506 = vpop.xlane.xlu0 %3505
    %v3507 = vsel %vm144, %v3494, 0.0
    %3508 = vadd.xlane.f32.xlu0 %v3507
    %v3509 = vpop.xlane.xlu0 %3508
    %v3510 = vsel %vm157, %v3495, 0.0
    %3511 = vadd.xlane.f32.xlu0 %v3510
    %v3512 = vpop.xlane.xlu0 %3511
    %v3513 = vmul.f32 %v3500, %v161
    %v3514 = vmul.f32 %v3503, %v161
    %v3515 = vmul.f32 %v3506, %v161
    %v3516 = vmul.f32 %v3509, %v161
    %v3517 = vmul.f32 %v3512, %v161
    %v3518 = vsub.f32 %v3491, %v3513
    %v3519 = vsub.f32 %v3492, %v3514
    %v3520 = vsub.f32 %v3493, %v3515
    %v3521 = vsub.f32 %v3494, %v3516
    %v3522 = vsub.f32 %v3495, %v3517
    %v3523 = vmul.f32 %v3518, %v3518
    %v3524 = vmul.f32 %v3519, %v3519
    %v3525 = vmul.f32 %v3520, %v3520
    %v3526 = vmul.f32 %v3521, %v3521
    %v3527 = vmul.f32 %v3522, %v3522
    %v3528 = vsel %vm144, %v3523, 0.0
    %3529 = vadd.xlane.f32.xlu0 %v3528
    %v3530 = vpop.xlane.xlu0 %3529
    %v3531 = vsel %vm144, %v3524, 0.0
    %3532 = vadd.xlane.f32.xlu0 %v3531
    %v3533 = vpop.xlane.xlu0 %3532
    %v3534 = vsel %vm144, %v3525, 0.0
    %3535 = vadd.xlane.f32.xlu0 %v3534
    %v3536 = vpop.xlane.xlu0 %3535
    %v3537 = vsel %vm144, %v3526, 0.0
    %3538 = vadd.xlane.f32.xlu0 %v3537
    %v3539 = vpop.xlane.xlu0 %3538
    %v3540 = vsel %vm157, %v3527, 0.0
    %3541 = vadd.xlane.f32.xlu0 %v3540
    %v3542 = vpop.xlane.xlu0 %3541
    %v3543 = vmul.f32 %v3530, %v161
    %v3544 = vmul.f32 %v3533, %v161
    %v3545 = vmul.f32 %v3536, %v161
    %v3546 = vmul.f32 %v3539, %v161
    %v3547 = vmul.f32 %v3542, %v161
    %v3548 = vadd.f32 %v3543, 1e-06
    %v3549 = vadd.f32 %v3544, 1e-06
    %v3550 = vadd.f32 %v3545, 1e-06
    %v3551 = vadd.f32 %v3546, 1e-06
    %v3552 = vadd.f32 %v3547, 1e-06
    %v3553 = vrsqrt.pop %v3548
    %v3554 = vrsqrt.pop %v3549
    %v3555 = vrsqrt.pop %v3550
    %v3556 = vrsqrt.pop %v3551
    %v3557 = vrsqrt.pop %v3552
    %v3558 = vmul.f32 %v3518, %v3553
    %v3559 = vmul.f32 %v3519, %v3554
    %v3560 = vmul.f32 %v3520, %v3555
    %v3561 = vmul.f32 %v3521, %v3556
    %v3562 = vmul.f32 %v3522, %v3557
    %v3563 = vmul.f32 %v3558, %v3496
    %v3564 = vmul.f32 %v3559, %v3496
    %v3565 = vmul.f32 %v3560, %v3496
    %v3566 = vmul.f32 %v3561, %v3496
    %v3567 = vmul.f32 %v3562, %v3496
    %v3568 = vadd.f32 %v3563, %v3497
    %v3569 = vadd.f32 %v3564, %v3497
    %v3570 = vadd.f32 %v3565, %v3497
    %v3571 = vadd.f32 %v3566, %v3497
    %v3572 = vadd.f32 %v3567, %v3497
    %v3573 = vld [vmem:[%s2075 + $0xd8] sm:$0xff]
    %v3574 = vld [vmem:[%s2075 + $0xf0] sm:$0xff]
    %v3575 = vld [vmem:[%s2075 + $0x108] sm:$0xff]
    %v3576 = vld [vmem:[%s2075 + $0x120] sm:$0xff]
    %v3577 = vld [vmem:[%s2075 + $0x2b9] ss:$0 sm:$0xff]
    %v3579 = vsel %vm144, %v3568, 0
    %v3582 = vsel %vm144, %v3569, 0
    %v3585 = vsel %vm144, %v3570, 0
    %v3588 = vsel %vm144, %v3571, 0
    %v3591 = vsel %vm144, %v3572, 0
    %3593 = vmatprep.subr.mxu0 0.0
    %3594 = vmatpush1.msra.mxu0 %v3573
    %3595 = vmatprep.subr.mxu0 0.0
    %3596 = vmatpush1.msra.mxu0 %v3574
    %3597 = vmatprep.subr.mxu0 0.0
    %3598 = vmatpush1.msra.mxu0 %v3575
    %3599 = vmatprep.subr.mxu0 0.0
    %3600 = vmatpush1.msra.mxu0 %v3576
    %3601 = vmatprep.subr.mxu0 0.0
    %3602 = vmatpush1.msra.mxu0 0.0
    %3603 = vmatprep.subr.mxu0 0.0
    %3604 = vmatpush1.msra.mxu0 0.0
    %3605 = vmatprep.subr.mxu0 0.0
    %3606 = vmatpush1.msra.mxu0 0.0
    %3607 = vmatprep.subr.mxu0 0.0
    %3608 = vmatpush1.msra.mxu0 0.0
    %3609 = vmatprep.subr.mxu0 0.0
    %3610 = vmatpush1.msra.mxu0 0.0
    %3611 = vmatprep.subr.mxu0 0.0
    %3612 = vmatpush1.msra.mxu0 0.0
    %3613 = vmatprep.subr.mxu0 0.0
    %3614 = vmatpush1.msra.mxu0 0.0
    %3615 = vmatprep.subr.mxu0 0.0
    %3616 = vmatpush1.msra.mxu0 0.0
    %3617 = vmatprep.subr.mxu0 0.0
    %3618 = vmatpush1.msra.mxu0 0.0
    %3619 = vmatprep.subr.mxu0 0.0
    %3620 = vmatpush1.msra.mxu0 0.0
    %3621 = vmatprep.subr.mxu0 0.0
    %3622 = vmatpush1.msra.mxu0 0.0
    %3623 = vmatprep.subr.mxu0 0.0
    %3624 = vmatpush1.msra.mxu0 0.0
    %3625 = vmatprep.subr.mxu0 0.0
    %3626 = vmatpush1.msra.mxu0 0.0
    %3627 = vmatprep.subr.mxu0 0.0
    %3628 = vmatpush1.msra.mxu0 0.0
    %3629 = vmatprep.subr.mxu0 0.0
    %3630 = vmatpush1.msra.mxu0 0.0
    %3631 = vmatprep.subr.mxu0 0.0
    %3632 = vmatpush1.msra.mxu0 0.0
    %3633 = vmatprep.subr.mxu0 0.0
    %3634 = vmatpush1.msra.mxu0 0.0
    %3635 = vmatprep.subr.mxu0 0.0
    %3636 = vmatpush1.msra.mxu0 0.0
    %3637 = vmatprep.subr.mxu0 0.0
    %3638 = vmatpush1.msra.mxu0 0.0
    %3639 = vmatprep.subr.mxu0 0.0
    %3640 = vmatpush1.msra.mxu0 0.0
    %3641 = vmatprep.subr.mxu0 0.0
    %3642 = vmatpush1.msra.mxu0 0.0
    %3643 = vmatprep.subr.mxu0 0.0
    %3644 = vmatpush1.msra.mxu0 0.0
    %3645 = vmatprep.subr.mxu0 0.0
    %3646 = vmatpush1.msra.mxu0 0.0
    %3647 = vmatprep.subr.mxu0 0.0
    %3648 = vmatpush1.msra.mxu0 0.0
    %3649 = vmatprep.subr.mxu0 0.0
    %3650 = vmatpush1.msra.mxu0 0.0
    %3651 = vmatprep.subr.mxu0 0.0
    %3652 = vmatpush1.msra.mxu0 0.0
    %3653 = vmatprep.subr.mxu0 0.0
    %3654 = vmatpush1.msra.mxu0 0.0
    %3655 = vmatprep.subr.mxu0 0.0
    %3656 = vmatpush1.msra.mxu0 0.0
    %3657 = vmatprep.mubr.f32.mxu0 0.0
    %3658 = vmatmul.mubr.f32.gmra.mrb[0].mxu0 %v3579
    %v3659 = vpop.f32.mrb[0].mxu0
    %v3660 = vadd.f32 %v3577, %v3659
    %v3661 = vpop.f32.mrb[0].mxu0
    %3662 = vmatprep.mubr.f32.mxu0 0.0
    %3663 = vmatmul.mubr.f32.gmra.mrb[0].mxu0 %v3582
    %v3664 = vpop.f32.mrb[0].mxu0
    %v3665 = vadd.f32 %v3577, %v3664
    %v3666 = vpop.f32.mrb[0].mxu0
    %3667 = vmatprep.mubr.f32.mxu0 0.0
    %3668 = vmatmul.mubr.f32.gmra.mrb[0].mxu0 %v3585
    %v3669 = vpop.f32.mrb[0].mxu0
    %v3670 = vadd.f32 %v3577, %v3669
    %v3671 = vpop.f32.mrb[0].mxu0
    %3672 = vmatprep.mubr.f32.mxu0 0.0
    %3673 = vmatmul.mubr.f32.gmra.mrb[0].mxu0 %v3588
    %v3674 = vpop.f32.mrb[0].mxu0
    %v3675 = vadd.f32 %v3577, %v3674
    %v3676 = vpop.f32.mrb[0].mxu0
    %3677 = vmatprep.mubr.f32.mxu0 0.0
    %3678 = vmatmul.mubr.f32.gmra.mrb[0].mxu0 %v3591
    %v3679 = vpop.f32.mrb[0].mxu0
    %v3680 = vadd.f32 %v3577, %v3679
    %v3681 = vpop.f32.mrb[0].mxu0
    %3682 = vdwg.mxu0
    %v3683 = vmul.f32 %v3660, 0.5
    %v3684 = vmul.f32 %v3665, 0.5
    %v3685 = vmul.f32 %v3670, 0.5
    %v3686 = vmul.f32 %v3675, 0.5
    %v3687 = vmul.f32 %v3680, 0.5
    %v3688 = vmul.f32 %v3660, 0.70710677
    %v3689 = vmul.f32 %v3665, 0.70710677
    %v3690 = vmul.f32 %v3670, 0.70710677
    %v3691 = vmul.f32 %v3675, 0.70710677
    %v3692 = vmul.f32 %v3680, 0.70710677
    %vm3693 = vcmp.ge.f32.partialorder %v3688, 0.0
    %vm3694 = vcmp.ge.f32.partialorder %v3689, 0.0
    %vm3695 = vcmp.ge.f32.partialorder %v3690, 0.0
    %vm3696 = vcmp.ge.f32.partialorder %v3691, 0.0
    %vm3697 = vcmp.ge.f32.partialorder %v3692, 0.0
    %v3698 = vsel %vm3693, 1.0, -1.0
    %v3699 = vsel %vm3694, 1.0, -1.0
    %v3700 = vsel %vm3695, 1.0, -1.0
    %v3701 = vsel %vm3696, 1.0, -1.0
    %v3702 = vsel %vm3697, 1.0, -1.0
    %v3703 = vmul.f32 %v3688, %v3698
    %v3704 = vmul.f32 %v3689, %v3699
    %v3705 = vmul.f32 %v3690, %v3700
    %v3706 = vmul.f32 %v3691, %v3701
    %v3707 = vmul.f32 %v3692, %v3702
    %v3708 = vmul.f32 %v3703, 0.3275911
    %v3709 = vmul.f32 %v3704, 0.3275911
    %v3710 = vmul.f32 %v3705, 0.3275911
    %v3711 = vmul.f32 %v3706, 0.3275911
    %v3712 = vmul.f32 %v3707, 0.3275911
    %v3713 = vadd.f32 %v3708, 1.0
    %v3714 = vadd.f32 %v3709, 1.0
    %v3715 = vadd.f32 %v3710, 1.0
    %v3716 = vadd.f32 %v3711, 1.0
    %v3717 = vadd.f32 %v3712, 1.0
    %v3718 = vrcp.pop %v3713
    %v3719 = vmul.f32 1.0, %v3718
    %v3720 = vrcp.pop %v3714
    %v3721 = vmul.f32 1.0, %v3720
    %v3722 = vrcp.pop %v3715
    %v3723 = vmul.f32 1.0, %v3722
    %v3724 = vrcp.pop %v3716
    %v3725 = vmul.f32 1.0, %v3724
    %v3726 = vrcp.pop %v3717
    %v3727 = vmul.f32 1.0, %v3726
    %v3728 = vmul.f32 %v3719, 1.0614054
    %v3729 = vmul.f32 %v3721, 1.0614054
    %v3730 = vmul.f32 %v3723, 1.0614054
    %v3731 = vmul.f32 %v3725, 1.0614054
    %v3732 = vmul.f32 %v3727, 1.0614054
    %v3733 = vadd.f32 %v3728, -1.4531521
    %v3734 = vadd.f32 %v3729, -1.4531521
    %v3735 = vadd.f32 %v3730, -1.4531521
    %v3736 = vadd.f32 %v3731, -1.4531521
    %v3737 = vadd.f32 %v3732, -1.4531521
    %v3738 = vmul.f32 %v3733, %v3719
    %v3739 = vmul.f32 %v3734, %v3721
    %v3740 = vmul.f32 %v3735, %v3723
    %v3741 = vmul.f32 %v3736, %v3725
    %v3742 = vmul.f32 %v3737, %v3727
    %v3743 = vadd.f32 %v3738, 1.4214138
    %v3744 = vadd.f32 %v3739, 1.4214138
    %v3745 = vadd.f32 %v3740, 1.4214138
    %v3746 = vadd.f32 %v3741, 1.4214138
    %v3747 = vadd.f32 %v3742, 1.4214138
    %v3748 = vmul.f32 %v3743, %v3719
    %v3749 = vmul.f32 %v3744, %v3721
    %v3750 = vmul.f32 %v3745, %v3723
    %v3751 = vmul.f32 %v3746, %v3725
    %v3752 = vmul.f32 %v3747, %v3727
    %v3753 = vadd.f32 %v3748, -0.28449672
    %v3754 = vadd.f32 %v3749, -0.28449672
    %v3755 = vadd.f32 %v3750, -0.28449672
    %v3756 = vadd.f32 %v3751, -0.28449672
    %v3757 = vadd.f32 %v3752, -0.28449672
    %v3758 = vmul.f32 %v3753, %v3719
    %v3759 = vmul.f32 %v3754, %v3721
    %v3760 = vmul.f32 %v3755, %v3723
    %v3761 = vmul.f32 %v3756, %v3725
    %v3762 = vmul.f32 %v3757, %v3727
    %v3763 = vadd.f32 %v3758, 0.2548296
    %v3764 = vadd.f32 %v3759, 0.2548296
    %v3765 = vadd.f32 %v3760, 0.2548296
    %v3766 = vadd.f32 %v3761, 0.2548296
    %v3767 = vadd.f32 %v3762, 0.2548296
    %v3768 = vmul.f32 %v3763, %v3719
    %v3769 = vmul.f32 %v3764, %v3721
    %v3770 = vmul.f32 %v3765, %v3723
    %v3771 = vmul.f32 %v3766, %v3725
    %v3772 = vmul.f32 %v3767, %v3727
    %v3773 = vsub.f32 0.0, %v3703
    %v3774 = vsub.f32 0.0, %v3704
    %v3775 = vsub.f32 0.0, %v3705
    %v3776 = vsub.f32 0.0, %v3706
    %v3777 = vsub.f32 0.0, %v3707
    %v3778 = vmul.f32 %v3773, %v3703
    %v3779 = vmul.f32 %v3774, %v3704
    %v3780 = vmul.f32 %v3775, %v3705
    %v3781 = vmul.f32 %v3776, %v3706
    %v3782 = vmul.f32 %v3777, %v3707
    %v3783 = vmul.f32 %v3778, 1.442695
    %v3784 = vpow.pop %v3783
    %v3785 = vmul.f32 %v3779, 1.442695
    %v3786 = vpow.pop %v3785
    %v3787 = vmul.f32 %v3780, 1.442695
    %v3788 = vpow.pop %v3787
    %v3789 = vmul.f32 %v3781, 1.442695
    %v3790 = vpow.pop %v3789
    %v3791 = vmul.f32 %v3782, 1.442695
    %v3792 = vpow.pop %v3791
    %v3793 = vmul.f32 %v3768, %v3784
    %v3794 = vmul.f32 %v3769, %v3786
    %v3795 = vmul.f32 %v3770, %v3788
    %v3796 = vmul.f32 %v3771, %v3790
    %v3797 = vmul.f32 %v3772, %v3792
    %v3798 = vsub.f32 1.0, %v3793
    %v3799 = vsub.f32 1.0, %v3794
    %v3800 = vsub.f32 1.0, %v3795
    %v3801 = vsub.f32 1.0, %v3796
    %v3802 = vsub.f32 1.0, %v3797
    %v3803 = vmul.f32 %v3698, %v3798
    %v3804 = vmul.f32 %v3699, %v3799
    %v3805 = vmul.f32 %v3700, %v3800
    %v3806 = vmul.f32 %v3701, %v3801
    %v3807 = vmul.f32 %v3702, %v3802
    %v3808 = vadd.f32 %v3803, 1.0
    %v3809 = vadd.f32 %v3804, 1.0
    %v3810 = vadd.f32 %v3805, 1.0
    %v3811 = vadd.f32 %v3806, 1.0
    %v3812 = vadd.f32 %v3807, 1.0
    %v3813 = vmul.f32 %v3683, %v3808
    %v3814 = vmul.f32 %v3684, %v3809
    %v3815 = vmul.f32 %v3685, %v3810
    %v3816 = vmul.f32 %v3686, %v3811
    %v3817 = vmul.f32 %v3687, %v3812
    %v3818 = vld [vmem:[%s2075 + $0x138] sm:$0xff]
    %v3819 = vld [vmem:[%s2075 + $0x150] sm:$0xff]
    %v3820 = vld [vmem:[%s2075 + $0x168] sm:$0xff]
    %v3821 = vld [vmem:[%s2075 + $0x180] sm:$0xff]
    %v3822 = vld [vmem:[%s2075 + $0x198] sm:$0xff]
    %v3823 = vld [vmem:[%s2075 + $0x1b0] sm:$0xff]
    %v3824 = vld [vmem:[%s2075 + $0x1c8] sm:$0xff]
    %v3825 = vld [vmem:[%s2075 + $0x1e0] sm:$0xff]
    %v3826 = vld [vmem:[%s2075 + $0x1f8] sm:$0xff]
    %v3827 = vld [vmem:[%s2075 + $0x210] sm:$0xff]
    %v3828 = vld [vmem:[%s2075 + $0x228] sm:$0xff]
    %v3829 = vld [vmem:[%s2075 + $0x240] sm:$0xff]
    %v3830 = vld [vmem:[%s2075 + $0x258] sm:$0xff]
    %v3831 = vld [vmem:[%s2075 + $0x270] sm:$0xff]
    %v3832 = vld [vmem:[%s2075 + $0x288] sm:$0xff]
    %v3833 = vld [vmem:[%s2075 + $0x2a0] sm:$0xff]
    %3834 = vmatprep.subr.mxu0 0.0
    %3835 = vmatpush1.msra.mxu0 %v3818
    %3836 = vmatprep.subr.mxu0 0.0
    %3837 = vmatpush1.msra.mxu0 %v3819
    %3838 = vmatprep.subr.mxu0 0.0
    %3839 = vmatpush1.msra.mxu0 %v3820
    %3840 = vmatprep.subr.mxu0 0.0
    %3841 = vmatpush1.msra.mxu0 %v3821
    %3842 = vmatprep.subr.mxu0 0.0
    %3843 = vmatpush1.msra.mxu0 %v3822
    %3844 = vmatprep.subr.mxu0 0.0
    %3845 = vmatpush1.msra.mxu0 %v3823
    %3846 = vmatprep.subr.mxu0 0.0
    %3847 = vmatpush1.msra.mxu0 %v3824
    %3848 = vmatprep.subr.mxu0 0.0
    %3849 = vmatpush1.msra.mxu0 %v3825
    %3850 = vmatprep.subr.mxu0 0.0
    %3851 = vmatpush1.msra.mxu0 %v3826
    %3852 = vmatprep.subr.mxu0 0.0
    %3853 = vmatpush1.msra.mxu0 %v3827
    %3854 = vmatprep.subr.mxu0 0.0
    %3855 = vmatpush1.msra.mxu0 %v3828
    %3856 = vmatprep.subr.mxu0 0.0
    %3857 = vmatpush1.msra.mxu0 %v3829
    %3858 = vmatprep.subr.mxu0 0.0
    %3859 = vmatpush1.msra.mxu0 %v3830
    %3860 = vmatprep.subr.mxu0 0.0
    %3861 = vmatpush1.msra.mxu0 %v3831
    %3862 = vmatprep.subr.mxu0 0.0
    %3863 = vmatpush1.msra.mxu0 %v3832
    %3864 = vmatprep.subr.mxu0 0.0
    %3865 = vmatpush1.msra.mxu0 %v3833
    %3866 = vmatprep.subr.mxu0 0.0
    %3867 = vmatpush1.msra.mxu0 0.0
    %3868 = vmatprep.subr.mxu0 0.0
    %3869 = vmatpush1.msra.mxu0 0.0
    %3870 = vmatprep.subr.mxu0 0.0
    %3871 = vmatpush1.msra.mxu0 0.0
    %3872 = vmatprep.subr.mxu0 0.0
    %3873 = vmatpush1.msra.mxu0 0.0
    %3874 = vmatprep.subr.mxu0 0.0
    %3875 = vmatpush1.msra.mxu0 0.0
    %3876 = vmatprep.subr.mxu0 0.0
    %3877 = vmatpush1.msra.mxu0 0.0
    %3878 = vmatprep.subr.mxu0 0.0
    %3879 = vmatpush1.msra.mxu0 0.0
    %3880 = vmatprep.subr.mxu0 0.0
    %3881 = vmatpush1.msra.mxu0 0.0
    %3882 = vmatprep.subr.mxu0 0.0
    %3883 = vmatpush1.msra.mxu0 0.0
    %3884 = vmatprep.subr.mxu0 0.0
    %3885 = vmatpush1.msra.mxu0 0.0
    %3886 = vmatprep.subr.mxu0 0.0
    %3887 = vmatpush1.msra.mxu0 0.0
    %3888 = vmatprep.subr.mxu0 0.0
    %3889 = vmatpush1.msra.mxu0 0.0
    %3890 = vmatprep.subr.mxu0 0.0
    %3891 = vmatpush1.msra.mxu0 0.0
    %3892 = vmatprep.subr.mxu0 0.0
    %3893 = vmatpush1.msra.mxu0 0.0
    %3894 = vmatprep.subr.mxu0 0.0
    %3895 = vmatpush1.msra.mxu0 0.0
    %3896 = vmatprep.subr.mxu0 0.0
    %3897 = vmatpush1.msra.mxu0 0.0
    %3898 = vmatprep.mubr.f32.mxu0 0.0
    %3899 = vmatmul.mubr.f32.gmra.mrb[0].mxu0 %v3813
    %v3900 = vpop.f32.mrb[0].mxu0
    %v3901 = vadd.f32 0.0, %v3900
    %v3902 = vpop.f32.mrb[0].mxu0
    %3903 = vmatprep.mubr.f32.mxu0 0.0
    %3904 = vmatmul.mubr.f32.gmra.mrb[0].mxu0 %v3814
    %v3905 = vpop.f32.mrb[0].mxu0
    %v3906 = vadd.f32 0.0, %v3905
    %v3907 = vpop.f32.mrb[0].mxu0
    %3908 = vmatprep.mubr.f32.mxu0 0.0
    %3909 = vmatmul.mubr.f32.gmra.mrb[0].mxu0 %v3815
    %v3910 = vpop.f32.mrb[0].mxu0
    %v3911 = vadd.f32 0.0, %v3910
    %v3912 = vpop.f32.mrb[0].mxu0
    %3913 = vmatprep.mubr.f32.mxu0 0.0
    %3914 = vmatmul.mubr.f32.gmra.mrb[0].mxu0 %v3816
    %v3915 = vpop.f32.mrb[0].mxu0
    %v3916 = vadd.f32 0.0, %v3915
    %v3917 = vpop.f32.mrb[0].mxu0
    %3918 = vmatprep.mubr.f32.mxu0 0.0
    %3919 = vmatmul.mubr.f32.gmra.mrb[0].mxu0 %v3817
    %v3920 = vpop.f32.mrb[0].mxu0
    %v3921 = vadd.f32 0.0, %v3920
    %v3922 = vpop.f32.mrb[0].mxu0
    %3923 = vdwg.mxu0
    %v3924 = vadd.f32 %v3491, %v3901
    %v3925 = vadd.f32 %v3492, %v3906
    %v3926 = vadd.f32 %v3493, %v3911
    %v3927 = vadd.f32 %v3494, %v3916
    %v3928 = vadd.f32 %v3495, %v3921
    %v3929 = vld [vmem:[%s2075 + $0x2ba] ss:$0 sm:$0xff]
    %v3930 = vadd.f32 %v3924, %v3929
    %v3931 = vadd.f32 %v3925, %v3929
    %v3932 = vadd.f32 %v3926, %v3929
    %v3933 = vadd.f32 %v3927, %v3929
    %v3934 = vadd.f32 %v3928, %v3929
    %v3935 = vld [vmem:[%s2 + $0x188] sm:$0x3]
    %v3937 = vsel %vm964, %v3935, 0
    %v3940 = vsel %vm469, %v3934, 0
    %3942 = vmatprep.subr.mxu0 0.0
    %3943 = vmatpush1.msra.mxu0 %v3930
    %3944 = vmatprep.subr.mxu0 0.0
    %3945 = vmatpush1.msra.mxu0 %v3931
    %3946 = vmatprep.subr.mxu0 0.0
    %3947 = vmatpush1.msra.mxu0 %v3932
    %3948 = vmatprep.subr.mxu0 0.0
    %3949 = vmatpush1.msra.mxu0 %v3933
    %3950 = vmatprep.subr.mxu0 0.0
    %3951 = vmatpush1.msra.mxu0 %v3940
    %3952 = vmatprep.subr.mxu0 0.0
    %3953 = vmatpush1.msra.mxu0 0.0
    %3954 = vmatprep.subr.mxu0 0.0
    %3955 = vmatpush1.msra.mxu0 0.0
    %3956 = vmatprep.subr.mxu0 0.0
    %3957 = vmatpush1.msra.mxu0 0.0
    %3958 = vmatprep.subr.mxu0 0.0
    %3959 = vmatpush1.msra.mxu0 0.0
    %3960 = vmatprep.subr.mxu0 0.0
    %3961 = vmatpush1.msra.mxu0 0.0
    %3962 = vmatprep.subr.mxu0 0.0
    %3963 = vmatpush1.msra.mxu0 0.0
    %3964 = vmatprep.subr.mxu0 0.0
    %3965 = vmatpush1.msra.mxu0 0.0
    %3966 = vmatprep.subr.mxu0 0.0
    %3967 = vmatpush1.msra.mxu0 0.0
    %3968 = vmatprep.subr.mxu0 0.0
    %3969 = vmatpush1.msra.mxu0 0.0
    %3970 = vmatprep.subr.mxu0 0.0
    %3971 = vmatpush1.msra.mxu0 0.0
    %3972 = vmatprep.subr.mxu0 0.0
    %3973 = vmatpush1.msra.mxu0 0.0
    %3974 = vmatprep.subr.mxu0 0.0
    %3975 = vmatpush1.msra.mxu0 0.0
    %3976 = vmatprep.subr.mxu0 0.0
    %3977 = vmatpush1.msra.mxu0 0.0
    %3978 = vmatprep.subr.mxu0 0.0
    %3979 = vmatpush1.msra.mxu0 0.0
    %3980 = vmatprep.subr.mxu0 0.0
    %3981 = vmatpush1.msra.mxu0 0.0
    %3982 = vmatprep.subr.mxu0 0.0
    %3983 = vmatpush1.msra.mxu0 0.0
    %3984 = vmatprep.subr.mxu0 0.0
    %3985 = vmatpush1.msra.mxu0 0.0
    %3986 = vmatprep.subr.mxu0 0.0
    %3987 = vmatpush1.msra.mxu0 0.0
    %3988 = vmatprep.subr.mxu0 0.0
    %3989 = vmatpush1.msra.mxu0 0.0
    %3990 = vmatprep.subr.mxu0 0.0
    %3991 = vmatpush1.msra.mxu0 0.0
    %3992 = vmatprep.subr.mxu0 0.0
    %3993 = vmatpush1.msra.mxu0 0.0
    %3994 = vmatprep.subr.mxu0 0.0
    %3995 = vmatpush1.msra.mxu0 0.0
    %3996 = vmatprep.subr.mxu0 0.0
    %3997 = vmatpush1.msra.mxu0 0.0
    %3998 = vmatprep.subr.mxu0 0.0
    %3999 = vmatpush1.msra.mxu0 0.0
    %4000 = vmatprep.subr.mxu0 0.0
    %4001 = vmatpush1.msra.mxu0 0.0
    %4002 = vmatprep.subr.mxu0 0.0
    %4003 = vmatpush1.msra.mxu0 0.0
    %4004 = vmatprep.subr.mxu0 0.0
    %4005 = vmatpush1.msra.mxu0 0.0
    %4006 = vmatprep.mubr.f32.mxu0 0.0
    %4007 = vmatmul.mubr.f32.gmra.mrb[0].mxu0 %v3937
    %v4008 = vpop.f32.mrb[0].mxu0
    %v4009 = vadd.f32 0.0, %v4008
    %v4010 = vpop.f32.mrb[0].mxu0
    %4011 = vdwg.mxu0
    %v4012 = vld [vmem:[%s2 + $0x18a] sm:$0x1]
    %v4013 = vld [vmem:[%s2 + $0x18b] sm:$0x1]
    %v4014 = vsel %vm157, %v4009, 0.0
    %4015 = vadd.xlane.f32.xlu0 %v4014
    %v4016 = vpop.xlane.xlu0 %4015
    %v4017 = vmul.f32 %v4016, %v161
    %v4018 = vsub.f32 %v4009, %v4017
    %v4019 = vmul.f32 %v4018, %v4018
    %v4020 = vsel %vm157, %v4019, 0.0
    %4021 = vadd.xlane.f32.xlu0 %v4020
    %v4022 = vpop.xlane.xlu0 %4021
    %v4023 = vmul.f32 %v4022, %v161
    %v4024 = vadd.f32 %v4023, 1e-06
    %v4025 = vrsqrt.pop %v4024
    %v4026 = vmul.f32 %v4018, %v4025
    %v4027 = vlaneseq
    %v4028 = vshrl.u32 %v4027, 7
    %v4029 = vsub.s32 0, %v4028
    %v4030 = vrot.slane %v4012, %v4029
    %v4031 = vmul.f32 %v4026, %v4030
    %v4032 = vlaneseq
    %v4033 = vshrl.u32 %v4032, 7
    %v4034 = vsub.s32 0, %v4033
    %v4035 = vrot.slane %v4013, %v4034
    %v4036 = vadd.f32 %v4031, %v4035
    %v4037 = vld [vmem:[%s2 + $0x58] sm:$0xff]
    %v4038 = vld [vmem:[%s2 + $0x60] sm:$0xff]
    %v4039 = vld [vmem:[%s2 + $0x68] sm:$0xff]
    %v4040 = vld [vmem:[%s2 + $0x70] sm:$0xff]
    %v4041 = vld [vmem:[%s2 + $0x18c] sm:$0x1]
    %v4042 = vlaneseq
    %v4043 = vshrl.u32 %v4042, 7
    %v4044 = vsub.s32 0, %v4043
    %v4045 = vrot.slane %v4041, %v4044
    %v4047 = vsel %vm144, %v4036, 0
    %4049 = vmatprep.subr.mxu0 0.0
    %4050 = vmatpush1.msra.mxu0 %v4037
    %4051 = vmatprep.subr.mxu0 0.0
    %4052 = vmatpush1.msra.mxu0 %v4038
    %4053 = vmatprep.subr.mxu0 0.0
    %4054 = vmatpush1.msra.mxu0 %v4039
    %4055 = vmatprep.subr.mxu0 0.0
    %4056 = vmatpush1.msra.mxu0 %v4040
    %4057 = vmatprep.subr.mxu0 0.0
    %4058 = vmatpush1.msra.mxu0 0.0
    %4059 = vmatprep.subr.mxu0 0.0
    %4060 = vmatpush1.msra.mxu0 0.0
    %4061 = vmatprep.subr.mxu0 0.0
    %4062 = vmatpush1.msra.mxu0 0.0
    %4063 = vmatprep.subr.mxu0 0.0
    %4064 = vmatpush1.msra.mxu0 0.0
    %4065 = vmatprep.subr.mxu0 0.0
    %4066 = vmatpush1.msra.mxu0 0.0
    %4067 = vmatprep.subr.mxu0 0.0
    %4068 = vmatpush1.msra.mxu0 0.0
    %4069 = vmatprep.subr.mxu0 0.0
    %4070 = vmatpush1.msra.mxu0 0.0
    %4071 = vmatprep.subr.mxu0 0.0
    %4072 = vmatpush1.msra.mxu0 0.0
    %4073 = vmatprep.subr.mxu0 0.0
    %4074 = vmatpush1.msra.mxu0 0.0
    %4075 = vmatprep.subr.mxu0 0.0
    %4076 = vmatpush1.msra.mxu0 0.0
    %4077 = vmatprep.subr.mxu0 0.0
    %4078 = vmatpush1.msra.mxu0 0.0
    %4079 = vmatprep.subr.mxu0 0.0
    %4080 = vmatpush1.msra.mxu0 0.0
    %4081 = vmatprep.subr.mxu0 0.0
    %4082 = vmatpush1.msra.mxu0 0.0
    %4083 = vmatprep.subr.mxu0 0.0
    %4084 = vmatpush1.msra.mxu0 0.0
    %4085 = vmatprep.subr.mxu0 0.0
    %4086 = vmatpush1.msra.mxu0 0.0
    %4087 = vmatprep.subr.mxu0 0.0
    %4088 = vmatpush1.msra.mxu0 0.0
    %4089 = vmatprep.subr.mxu0 0.0
    %4090 = vmatpush1.msra.mxu0 0.0
    %4091 = vmatprep.subr.mxu0 0.0
    %4092 = vmatpush1.msra.mxu0 0.0
    %4093 = vmatprep.subr.mxu0 0.0
    %4094 = vmatpush1.msra.mxu0 0.0
    %4095 = vmatprep.subr.mxu0 0.0
    %4096 = vmatpush1.msra.mxu0 0.0
    %4097 = vmatprep.subr.mxu0 0.0
    %4098 = vmatpush1.msra.mxu0 0.0
    %4099 = vmatprep.subr.mxu0 0.0
    %4100 = vmatpush1.msra.mxu0 0.0
    %4101 = vmatprep.subr.mxu0 0.0
    %4102 = vmatpush1.msra.mxu0 0.0
    %4103 = vmatprep.subr.mxu0 0.0
    %4104 = vmatpush1.msra.mxu0 0.0
    %4105 = vmatprep.subr.mxu0 0.0
    %4106 = vmatpush1.msra.mxu0 0.0
    %4107 = vmatprep.subr.mxu0 0.0
    %4108 = vmatpush1.msra.mxu0 0.0
    %4109 = vmatprep.subr.mxu0 0.0
    %4110 = vmatpush1.msra.mxu0 0.0
    %4111 = vmatprep.subr.mxu0 0.0
    %4112 = vmatpush1.msra.mxu0 0.0
    %4113 = vmatprep.mubr.f32.mxu0 0.0
    %4114 = vmatmul.mubr.f32.gmra.mrb[0].mxu0 %v4047
    %v4115 = vpop.f32.mrb[0].mxu0
    %v4116 = vadd.f32 %v4045, %v4115
    %v4117 = vpop.f32.mrb[0].mxu0
    %4118 = vdwg.mxu0
    %4119 = vst [vmem:[#allocation2] sm:$0x3] %v4116
    // Predicated region
    $region14: #{forward.1} parent=1 // pred_check
      _
    $region15: #{forward.1} parent=1 // pred_check_branch
      %4121 = sbr.rel (0) target = $region17
    $region16: #{forward.1} parent=1 // pred_region
      %s4123 = ssub.s32 32, 32
      %4124 = vsyncadd [#allocation3], %s4123
      %s4126 = sshll.u32 [#allocation2], 4
      %s4127 = int_to_ptr.vmem [resolvable:$true] %s4126
      %4129 = dma.vmem_to_hbm [thread:$0]  %s4127, 32, %s3, [#allocation3]
    $region17: #{forward.1} parent=1 // pred_fallthru
      _
    // Predicated region
    $region18: #{forward.1} parent=1 // pred_check
      _
    $region19: #{forward.1} parent=1 // pred_check_branch
      %4131 = sbr.rel (0) target = $region21
    $region20: #{forward.1} parent=1 // pred_region
      %4132 = dma.done [#allocation3], 32
    $region21: #{forward.1} parent=1 // pred_fallthru
      _
    %4133 = vsyncpa [#allocation3], 1

</llo_original>
